<compile_context>
chip_gen: v6e
topology: v6e:2x2x1
jax: 0.10.0
libtpu: 0.0.40
codegen_flags: <defaults>
</compile_context>

<pallas_src>
import numpy as np
import jax
import jax.numpy as jnp
from jax.experimental import pallas as pl
from jax.experimental.pallas import tpu as pltpu

# ----------------------------- config ----------------------------------------
B = 2
SEQ = 8
VIT_DIM = 64          # stands in for self.vit.config.hidden_size
BERT_DIM = 64         # stands in for self.bert.config.hidden_size (divisible by 8 heads)
FORMAT_DIM = 4
NUM_JOBS = 5
NUM_CLASSES = 3
COMBINED_DIM = 256 + 256 + 64 + 64  # 640
IMG = (B, 3, 16, 16)
VOCAB = 100
PIX_FLAT = 3 * 16 * 16              # 768

# ----------------------------- slab layouts -----------------------------------
# w768 slab: (128, 768) bf16 -- merged semantic L1.
#   rows 0:64   act on cv_emb      (sw1 first half)
#   rows 64:128 act on jd_emb      ((Wv@Wo) @ sw1 second half, MHA pre-composed)
W768_ROWS = 128

# w512 slab: (832, 512) bf16
VW1_R, SW2_R = 0, 64
W512_ROWS = 832

# w256 slab: (1664, 256) bf16 -- late-used; DMA'd manually and overlapped with compute.
VW2_R, SW3_R, CW1_R = 0, 512, 1024
W256_ROWS = 1664

# wsml slab: (832, 128) bf16 -- two 64-lane columns packed side by side (no big padding).
WSML_ROWS = 832
WPOOL_R, WPOOL_C = 0, 0        # (768, 64)  ViT-surrogate pooler weight
S8_R,    S8_C    = 0, 64       # (640, 8)   [attn(4) | visual_score | semantic_score | 0 | 0]
CW2_R,   CW2_C   = 0, 72       # (256, 3)   classifier L2
FJW1_R,  FJW1_C  = 640, 64     # (16, 64)   block-diag [format L1 | job L1]
FJW2_R,  FJW2_C  = 768, 0      # (64, 128)  block-diag [format L2 | job L2]

# bias slab: (8, 768) f32 -- multiple biases packed per row at 128-aligned lane offsets.
B_SB1   = 0                    # sb1_folded (768)
B_SB23  = 1                    # sb2 [0:512], sb3 [512:768]
B_VB12  = 2                    # vb1 [0:512], vb2 [512:768]
B_CB1FJ = 3                    # cb1 [0:256], fjb2 [256:384], fjb1 [384:448]
B_S8    = 4                    # [ab(4), vsb, ssb, 0, 0] at [0:8], cb2 [128:131]
SB3_C = 512
VB2_C = 512
FJB2_C, FJB1_C, CB2_C = 256, 384, 128
BIAS_ROWS = 8

# Packed output layout: (B, 128) f32
OUT_LOGITS = 0      # cols 0:NUM_CLASSES
OUT_VSCORE = 4      # col 4
OUT_SSCORE = 5      # col 5
OUT_ATTNW = 8       # cols 8:12


# ----------------------------- fused kernel -----------------------------------
def fused_kernel(px_ref, hid_ref, tti_ref, fj_ref,
                 w768, w512, wsml, bias, w256_hbm,
                 out_ref, w256, dma_sem):
    f32 = jnp.float32
    relu = lambda x: jnp.maximum(x, 0.0)
    nb = px_ref.shape[0]

    def mm(x, w):  # bf16 x bf16 operands, f32 accumulation on the MXU
        return jnp.dot(x.astype(jnp.bfloat16), w, preferred_element_type=f32)

    # ---- kick off DMA of the late-used w256 slab; hidden behind the compute below ----
    w256_copy = pltpu.make_async_copy(w256_hbm, w256, dma_sem)
    w256_copy.start()

    # ---- ViT pooler surrogate: tanh(flat_pixels @ W_pool) ----
    vit = jnp.tanh(mm(px_ref[...],
                      wsml[WPOOL_R:WPOOL_R + PIX_FLAT, WPOOL_C:WPOOL_C + VIT_DIM]))  # (B,64)

    # ---- visual branch L1 (Dropout == identity in eval mode) ----
    vis1 = relu(mm(vit, w512[VW1_R:VW1_R + VIT_DIM, :])
                + bias[B_VB12:B_VB12 + 1, 0:512])                                    # (B,512)

    # ---- masked mean pooling over BERT hidden states (token_type_ids masks) ----
    hid = hid_ref[...]                                           # (B, S, H) f32
    tti = tti_ref[...]                                           # (B, S) int32
    jd_mask = (tti == 0).astype(f32)
    cv_mask = (tti == 1).astype(f32)
    jd_emb = jnp.sum(hid * jd_mask[:, :, None], axis=1) / jnp.maximum(
        jnp.sum(jd_mask, axis=1, keepdims=True), 1.0)            # (B, H)  (clamp(min=1))
    cv_emb = jnp.sum(hid * cv_mask[:, :, None], axis=1) / jnp.maximum(
        jnp.sum(cv_mask, axis=1, keepdims=True), 1.0)            # (B, H)

    # ---- semantic branch ----
    # nn.MultiheadAttention over a SINGLE pooled key/value: softmax over one key == 1, so
    # the exact result is out_proj(v_proj(jd_emb)); that linear map is pre-composed into
    # rows 64:128 of w768 on the host, so semantic L1 is one K=128 dot on [cv_emb|jd_emb].
    cj = jnp.concatenate([cv_emb, jd_emb], axis=1)                                    # (B,128)
    sem1 = relu(mm(cj, w768[...]) + bias[B_SB1:B_SB1 + 1, 0:768])                     # (B,768)
    sem2 = relu(mm(sem1, w512[SW2_R:SW2_R + 768, :])
                + bias[B_SB23:B_SB23 + 1, 0:512])                                     # (B,512)

    # ---- fused format|job branches: 2 block-diagonal dots instead of 4 tiny dots ----
    fj1 = relu(mm(fj_ref[...], wsml[FJW1_R:FJW1_R + 16, FJW1_C:FJW1_C + 64])
               + bias[B_CB1FJ:B_CB1FJ + 1, FJB1_C:FJB1_C + 64])                       # (B,64)
    fj = relu(mm(fj1, wsml[FJW2_R:FJW2_R + 64, 0:128])
              + bias[B_CB1FJ:B_CB1FJ + 1, FJB2_C:FJB2_C + 128])                       # (B,128)=[fmt|job]

    # ---- everything below needs the w256 slab ----
    w256_copy.wait()

    visual = relu(mm(vis1, w256[VW2_R:VW2_R + 512, :])
                  + bias[B_VB12:B_VB12 + 1, VB2_C:VB2_C + 256])                       # (B,256)
    sem = relu(mm(sem2, w256[SW3_R:SW3_R + 512, :])
               + bias[B_SB23:B_SB23 + 1, SB3_C:SB3_C + 256])                          # (B,256)

    combined = jnp.concatenate([visual, sem, fj], axis=1)                             # (B,640)

    # ---- attention head (4) + visual_score + semantic_score in ONE K=640 dot ----
    s8 = (mm(combined, wsml[S8_R:S8_R + COMBINED_DIM, S8_C:S8_C + 8])
          + bias[B_S8:B_S8 + 1, 0:8])                                                 # (B,8)
    attn_logits = s8[:, 0:4]
    visual_score = s8[:, 4:5]
    sem_score = s8[:, 5:6]

    attn_w = jax.nn.softmax(attn_logits, axis=1)                                      # (B,4)
    sem_importance = jax.nn.sigmoid(sem_score)
    vis_penalty = jax.nn.sigmoid(-visual_score) * 0.5
    col4 = jax.lax.broadcasted_iota(jnp.int32, attn_w.shape, 1)
    adjust = jnp.where(col4 == 0, -vis_penalty * 0.2,
                       jnp.where(col4 == 1, sem_importance * 0.3, 0.0))
    attn_w = jax.nn.softmax(attn_w + adjust, axis=1)   # double softmax matches the torch module

    # ---- weighted features + classifier L1 as ONE K=640 dot ----
    col = jax.lax.broadcasted_iota(jnp.int32, combined.shape, 1)
    scale = jnp.where(col < 256, attn_w[:, 0:1],
                      jnp.where(col < 512, attn_w[:, 1:2],
                                jnp.where(col < 576, attn_w[:, 2:3], attn_w[:, 3:4])))
    h = relu(mm(combined * scale, w256[CW1_R:CW1_R + COMBINED_DIM, :])
             + bias[B_CB1FJ:B_CB1FJ + 1, 0:256])                                      # (B,256)
    logits = (mm(h, wsml[CW2_R:CW2_R + 256, CW2_C:CW2_C + NUM_CLASSES])
              + bias[B_S8:B_S8 + 1, CB2_C:CB2_C + NUM_CLASSES])                       # (B,3)

    # ---- single lane-dense (B,128) unmasked store (cols 3, 6:8 are don't-care) ----
    packed = jnp.concatenate(
        [logits,                       # cols 0:3
         s8[:, 3:8],                   # cols 3:8 (col 4 = visual_score, col 5 = semantic_score)
         attn_w,                       # cols 8:12
         jnp.zeros((nb, 128 - (OUT_ATTNW + 4)), f32)], axis=1)
    out_ref[...] = packed


# ----------------------------- parameters (host-side packing) ------------------
def init_linear(key, fan_in, fan_out):
    """PyTorch-style uniform(-1/sqrt(fan_in), 1/sqrt(fan_in)); W stored (in, out)."""
    kw, kb = jax.random.split(key)
    bound = 1.0 / float(np.sqrt(fan_in))
    W = jax.random.uniform(kw, (fan_in, fan_out), jnp.float32, -bound, bound)
    b = jax.random.uniform(kb, (fan_out,), jnp.float32, -bound, bound)
    return np.asarray(W), np.asarray(b)


def make_packed_params(key, w_pool_key):
    ks = jax.random.split(key, 16)
    vw1, vb1 = init_linear(ks[0], VIT_DIM, 512)
    vw2, vb2 = init_linear(ks[1], 512, 256)
    vsw, vsb = init_linear(ks[2], 256, 1)
    mwv, mbv = init_linear(ks[3], BERT_DIM, BERT_DIM)     # MHA value proj
    mwo, mbo = init_linear(ks[4], BERT_DIM, BERT_DIM)     # MHA out proj
    sw1, sb1 = init_linear(ks[5], BERT_DIM * 2, 768)
    sw2, sb2 = init_linear(ks[6], 768, 512)
    sw3, sb3 = init_linear(ks[7], 512, 256)
    ssw, ssb = init_linear(ks[8], 256, 1)
    fw1, fb1 = init_linear(ks[9], FORMAT_DIM, 32)
    fw2, fb2 = init_linear(ks[10], 32, 64)
    jw1, jb1 = init_linear(ks[11], NUM_JOBS, 32)
    jw2, jb2 = init_linear(ks[12], 32, 64)
    aw, ab = init_linear(ks[13], COMBINED_DIM, 4)
    cw1, cb1 = init_linear(ks[14], COMBINED_DIM, 256)
    cw2, cb2 = init_linear(ks[15], 256, NUM_CLASSES)
    w_pool = np.asarray(jax.random.normal(w_pool_key, (PIX_FLAT, VIT_DIM), jnp.float32) * 0.02)

    # --- MHA pre-composition (exact: 1 query / 1 key -> softmax over one key == 1) ---
    wvo = mwv @ mwo                        # (64,64)   v_proj then out_proj
    bvo = mbv @ mwo + mbo                  # (64,)
    sw1_cv = sw1[0:BERT_DIM]               # acts on cv_emb
    sw1_at = sw1[BERT_DIM:2 * BERT_DIM]    # acts on cv_attended
    w_at_folded = wvo @ sw1_at             # (64,768) acts on jd_emb directly
    sb1_folded = bvo @ sw1_at + sb1        # (768,)

    w768 = np.zeros((W768_ROWS, 768), np.float32)
    w768[0:BERT_DIM] = sw1_cv
    w768[BERT_DIM:2 * BERT_DIM] = w_at_folded

    w512 = np.zeros((W512_ROWS, 512), np.float32)
    w512[VW1_R:VW1_R + VIT_DIM] = vw1
    w512[SW2_R:SW2_R + 768] = sw2

    w256 = np.zeros((W256_ROWS, 256), np.float32)
    w256[VW2_R:VW2_R + 512] = vw2
    w256[SW3_R:SW3_R + 512] = sw3
    w256[CW1_R:CW1_R + COMBINED_DIM] = cw1

    wsml = np.zeros((WSML_ROWS, 128), np.float32)
    wsml[WPOOL_R:WPOOL_R + PIX_FLAT, WPOOL_C:WPOOL_C + VIT_DIM] = w_pool
    wsml[S8_R:S8_R + 256, S8_C:S8_C + 4] = aw[0:256]
    wsml[S8_R:S8_R + 256, S8_C + 4:S8_C + 5] = vsw           # visual_score weight in col 4
    wsml[S8_R + 256:S8_R + 512, S8_C:S8_C + 4] = aw[256:512]
    wsml[S8_R + 256:S8_R + 512, S8_C + 5:S8_C + 6] = ssw     # semantic_score weight in col 5
    wsml[S8_R + 512:S8_R + 640, S8_C:S8_C + 4] = aw[512:640]
    wsml[CW2_R:CW2_R + 256, CW2_C:CW2_C + NUM_CLASSES] = cw2
    wsml[FJW1_R:FJW1_R + FORMAT_DIM, FJW1_C:FJW1_C + 32] = fw1
    wsml[FJW1_R + 8:FJW1_R + 8 + NUM_JOBS, FJW1_C + 32:FJW1_C + 64] = jw1
    wsml[FJW2_R:FJW2_R + 32, 0:64] = fw2
    wsml[FJW2_R + 32:FJW2_R + 64, 64:128] = jw2

    bias = np.zeros((BIAS_ROWS, 768), np.float32)
    bias[B_SB1, 0:768] = sb1_folded
    bias[B_SB23, 0:512] = sb2
    bias[B_SB23, SB3_C:SB3_C + 256] = sb3
    bias[B_VB12, 0:512] = vb1
    bias[B_VB12, VB2_C:VB2_C + 256] = vb2
    bias[B_CB1FJ, 0:256] = cb1
    bias[B_CB1FJ, FJB2_C:FJB2_C + 64] = fb2
    bias[B_CB1FJ, FJB2_C + 64:FJB2_C + 128] = jb2
    bias[B_CB1FJ, FJB1_C:FJB1_C + 32] = fb1
    bias[B_CB1FJ, FJB1_C + 32:FJB1_C + 64] = jb1
    bias[B_S8, 0:4] = ab
    bias[B_S8, 4] = vsb[0]
    bias[B_S8, 5] = ssb[0]
    bias[B_S8, CB2_C:CB2_C + NUM_CLASSES] = cb2

    return dict(
        w768=jnp.asarray(w768, jnp.bfloat16),
        w512=jnp.asarray(w512, jnp.bfloat16),
        w256=jnp.asarray(w256, jnp.bfloat16),
        wsml=jnp.asarray(wsml, jnp.bfloat16),
        bias=jnp.asarray(bias, jnp.float32),
    )


# ----------------------------- wrapper -----------------------------------------
def multimodal_cv_classifier(pixel_values, input_ids, attention_mask, token_type_ids,
                             format_features, job_one_hot, slabs, emb_table):
    bsz = pixel_values.shape[0]
    px_flat = pixel_values.reshape(bsz, -1).astype(jnp.float32)               # (B, 768)

    # TODO(synk): pretrained BertModel cannot be reproduced; embedding-lookup surrogate.
    hidden = jnp.take(emb_table, input_ids, axis=0) * attention_mask[:, :, None].astype(jnp.float32)

    # packed [format(4) pad(4) | job(5) pad(3)] input for the block-diagonal branch
    fj_in = jnp.zeros((bsz, 16), jnp.float32)
    fj_in = fj_in.at[:, 0:FORMAT_DIM].set(format_features.astype(jnp.float32))
    fj_in = fj_in.at[:, 8:8 + NUM_JOBS].set(job_one_hot.astype(jnp.float32))

    args = (px_flat, hidden, token_type_ids.astype(jnp.int32), fj_in,
            slabs["w768"], slabs["w512"], slabs["wsml"], slabs["bias"], slabs["w256"])

    vmem = lambda: pl.BlockSpec(memory_space=pltpu.MemorySpace.VMEM)
    in_specs = [vmem() for _ in range(8)] + [pl.BlockSpec(memory_space=pl.ANY)]

    packed = pl.pallas_call(
        fused_kernel,
        out_shape=jax.ShapeDtypeStruct((bsz, 128), jnp.float32),
        in_specs=in_specs,
        out_specs=vmem(),
        scratch_shapes=[pltpu.VMEM((W256_ROWS, 256), jnp.bfloat16),
                        pltpu.SemaphoreType.DMA(())],
    )(*args)

    return {
        "logits": packed[:, OUT_LOGITS:OUT_LOGITS + NUM_CLASSES],
        "visual_score": packed[:, OUT_VSCORE:OUT_VSCORE + 1],
        "semantic_score": packed[:, OUT_SSCORE:OUT_SSCORE + 1],
        "attention_weights": packed[:, OUT_ATTNW:OUT_ATTNW + 4],
    }


# ----------------------------- main ---------------------------------------------
if __name__ == "__main__":
    key = jax.random.PRNGKey(0)
    k_px, k_ids, k_fmt, k_job, k_params, k_pool, k_emb = jax.random.split(key, 7)

    pixel_values = jax.random.normal(k_px, IMG, jnp.float32)                       # (B,3,16,16)
    input_ids = jax.random.randint(k_ids, (B, SEQ), 0, VOCAB, jnp.int32)           # (B,S)
    attention_mask = jnp.ones((B, SEQ), jnp.int32)
    token_type_ids = jnp.concatenate(                                              # first half JD(0), second half CV(1)
        [jnp.zeros((B, SEQ // 2), jnp.int32), jnp.ones((B, SEQ - SEQ // 2), jnp.int32)], axis=1)
    format_features = jax.random.normal(k_fmt, (B, FORMAT_DIM), jnp.float32)
    job_one_hot = jax.nn.one_hot(
        jax.random.randint(k_job, (B,), 0, NUM_JOBS), NUM_JOBS, dtype=jnp.float32)

    slabs = make_packed_params(k_params, k_pool)
    emb_table = jax.random.normal(k_emb, (VOCAB, BERT_DIM), jnp.float32) * 0.02

    model = jax.jit(multimodal_cv_classifier)
    out = model(pixel_values, input_ids, attention_mask, token_type_ids,
                format_features, job_one_hot, slabs, emb_table)
    jax.block_until_ready(out)

    assert out["logits"].shape == (B, NUM_CLASSES)
    assert out["visual_score"].shape == (B, 1)
    assert out["semantic_score"].shape == (B, 1)
    assert out["attention_weights"].shape == (B, 4)
    assert jnp.allclose(jnp.sum(out["attention_weights"], axis=1), 1.0, atol=1e-5)
    assert bool(jnp.all(jnp.isfinite(out["logits"])))

    print("KERNEL_OK")
</pallas_src>

<mosaic_0001>
module attributes {stable_mosaic.version = 11 : i64} {
  func.func @fused_kernel(%arg0: memref<2x768xf32, #tpu.memory_space<vmem>>, %arg1: memref<2x8x64xf32, #tpu.memory_space<vmem>>, %arg2: memref<2x8xi32, #tpu.memory_space<vmem>>, %arg3: memref<2x16xf32, #tpu.memory_space<vmem>>, %arg4: memref<128x768xbf16, #tpu.memory_space<vmem>>, %arg5: memref<832x512xbf16, #tpu.memory_space<vmem>>, %arg6: memref<832x128xbf16, #tpu.memory_space<vmem>>, %arg7: memref<8x768xf32, #tpu.memory_space<vmem>>, %arg8: memref<1664x256xbf16, #tpu.memory_space<any>>, %arg9: memref<2x128xf32, #tpu.memory_space<vmem>>, %arg10: memref<1664x256xbf16, #tpu.memory_space<vmem>>, %arg11: memref<!tpu.dma_semaphore, #tpu.memory_space<semaphore_mem>>) attributes {dimension_semantics = [], scalar_prefetch = 0 : i64, scratch_operands = 2 : i64, tpu.core_type = #tpu.core_type<tc>} {
    tpu.enqueue_dma source(%arg8 : memref<1664x256xbf16, #tpu.memory_space<any>>) target(%arg10 : memref<1664x256xbf16, #tpu.memory_space<vmem>>) target_semaphore(%arg11 : memref<!tpu.dma_semaphore, #tpu.memory_space<semaphore_mem>>)
    %c0 = arith.constant 0 : index
    %c0_0 = arith.constant 0 : index
    %0 = vector.load %arg0[%c0, %c0_0] : memref<2x768xf32, #tpu.memory_space<vmem>>, vector<2x768xf32>
    %c0_1 = arith.constant 0 : index
    %c0_2 = arith.constant 0 : index
    %1 = vector.load %arg6[%c0_1, %c0_2] : memref<832x128xbf16, #tpu.memory_space<vmem>>, vector<768x64xbf16>
    %2 = arith.truncf %0 : vector<2x768xf32> to vector<2x768xbf16>
    %cst = arith.constant dense<0.000000e+00> : vector<2x64xf32>
    %3 = tpu.matmul %2, %1, %cst {dimension_numbers = #tpu.dot_dimension_numbers<[1], [0], [0], [1], [0, 0, 1, 1], [], []>} : vector<2x768xbf16>, vector<768x64xbf16>, vector<2x64xf32> -> vector<2x64xf32>
    %4 = math.tanh %3 : vector<2x64xf32>
    %c0_3 = arith.constant 0 : index
    %c0_4 = arith.constant 0 : index
    %5 = vector.load %arg5[%c0_3, %c0_4] : memref<832x512xbf16, #tpu.memory_space<vmem>>, vector<64x512xbf16>
    %6 = arith.truncf %4 : vector<2x64xf32> to vector<2x64xbf16>
    %cst_5 = arith.constant dense<0.000000e+00> : vector<2x512xf32>
    %7 = tpu.matmul %6, %5, %cst_5 {dimension_numbers = #tpu.dot_dimension_numbers<[1], [0], [0], [1], [0, 0, 1, 1], [], []>} : vector<2x64xbf16>, vector<64x512xbf16>, vector<2x512xf32> -> vector<2x512xf32>
    %c2 = arith.constant 2 : index
    %c0_6 = arith.constant 0 : index
    %8 = vector.load %arg7[%c2, %c0_6] : memref<8x768xf32, #tpu.memory_space<vmem>>, vector<1x512xf32>
    %9 = vector.broadcast %8 : vector<1x512xf32> to vector<2x512xf32>
    %10 = arith.addf %7, %9 : vector<2x512xf32>
    %cst_7 = arith.constant 0.000000e+00 : f32
    %11 = vector.broadcast %cst_7 : f32 to vector<2x512xf32>
    %12 = arith.maximumf %10, %11 : vector<2x512xf32>
    %c0_8 = arith.constant 0 : index
    %c0_9 = arith.constant 0 : index
    %c0_10 = arith.constant 0 : index
    %13 = vector.load %arg1[%c0_8, %c0_9, %c0_10] : memref<2x8x64xf32, #tpu.memory_space<vmem>>, vector<2x8x64xf32>
    %c0_11 = arith.constant 0 : index
    %c0_12 = arith.constant 0 : index
    %14 = vector.load %arg2[%c0_11, %c0_12] : memref<2x8xi32, #tpu.memory_space<vmem>>, vector<2x8xi32>
    %c0_i32 = arith.constant 0 : i32
    %15 = vector.broadcast %c0_i32 : i32 to vector<2x8xi32>
    %16 = arith.cmpi eq, %14, %15 : vector<2x8xi32>
    %17 = arith.extui %16 : vector<2x8xi1> to vector<2x8xi32>
    %18 = arith.sitofp %17 : vector<2x8xi32> to vector<2x8xf32>
    %c1_i32 = arith.constant 1 : i32
    %19 = vector.broadcast %c1_i32 : i32 to vector<2x8xi32>
    %20 = arith.cmpi eq, %14, %19 : vector<2x8xi32>
    %21 = arith.extui %20 : vector<2x8xi1> to vector<2x8xi32>
    %22 = arith.sitofp %21 : vector<2x8xi32> to vector<2x8xf32>
    %23 = vector.shape_cast %18 : vector<2x8xf32> to vector<2x8x1xf32>
    %24 = vector.broadcast %23 : vector<2x8x1xf32> to vector<2x8x64xf32>
    %25 = arith.mulf %13, %24 : vector<2x8x64xf32>
    %cst_13 = arith.constant dense<0.000000e+00> : vector<2x64xf32>
    %26 = vector.multi_reduction <add>, %25, %cst_13 [1] : vector<2x8x64xf32> to vector<2x64xf32>
    %cst_14 = arith.constant dense<0.000000e+00> : vector<2xf32>
    %27 = vector.multi_reduction <add>, %18, %cst_14 [1] : vector<2x8xf32> to vector<2xf32>
    %28 = vector.shape_cast %27 : vector<2xf32> to vector<2x1xf32>
    %cst_15 = arith.constant 1.000000e+00 : f32
    %29 = vector.broadcast %cst_15 : f32 to vector<2x1xf32>
    %30 = arith.maximumf %28, %29 : vector<2x1xf32>
    %31 = vector.broadcast %30 : vector<2x1xf32> to vector<2x64xf32>
    %32 = arith.divf %26, %31 : vector<2x64xf32>
    %33 = vector.shape_cast %22 : vector<2x8xf32> to vector<2x8x1xf32>
    %34 = vector.broadcast %33 : vector<2x8x1xf32> to vector<2x8x64xf32>
    %35 = arith.mulf %13, %34 : vector<2x8x64xf32>
    %cst_16 = arith.constant dense<0.000000e+00> : vector<2x64xf32>
    %36 = vector.multi_reduction <add>, %35, %cst_16 [1] : vector<2x8x64xf32> to vector<2x64xf32>
    %cst_17 = arith.constant dense<0.000000e+00> : vector<2xf32>
    %37 = vector.multi_reduction <add>, %22, %cst_17 [1] : vector<2x8xf32> to vector<2xf32>
    %38 = vector.shape_cast %37 : vector<2xf32> to vector<2x1xf32>
    %cst_18 = arith.constant 1.000000e+00 : f32
    %39 = vector.broadcast %cst_18 : f32 to vector<2x1xf32>
    %40 = arith.maximumf %38, %39 : vector<2x1xf32>
    %41 = vector.broadcast %40 : vector<2x1xf32> to vector<2x64xf32>
    %42 = arith.divf %36, %41 : vector<2x64xf32>
    %43 = tpu.concatenate %42, %32 in 1 : vector<2x64xf32>, vector<2x64xf32> -> vector<2x128xf32>
    %c0_19 = arith.constant 0 : index
    %c0_20 = arith.constant 0 : index
    %44 = vector.load %arg4[%c0_19, %c0_20] : memref<128x768xbf16, #tpu.memory_space<vmem>>, vector<128x768xbf16>
    %45 = arith.truncf %43 : vector<2x128xf32> to vector<2x128xbf16>
    %cst_21 = arith.constant dense<0.000000e+00> : vector<2x768xf32>
    %46 = tpu.matmul %45, %44, %cst_21 {dimension_numbers = #tpu.dot_dimension_numbers<[1], [0], [0], [1], [0, 0, 1, 1], [], []>} : vector<2x128xbf16>, vector<128x768xbf16>, vector<2x768xf32> -> vector<2x768xf32>
    %c0_22 = arith.constant 0 : index
    %c0_23 = arith.constant 0 : index
    %47 = vector.load %arg7[%c0_22, %c0_23] : memref<8x768xf32, #tpu.memory_space<vmem>>, vector<1x768xf32>
    %48 = vector.broadcast %47 : vector<1x768xf32> to vector<2x768xf32>
    %49 = arith.addf %46, %48 : vector<2x768xf32>
    %cst_24 = arith.constant 0.000000e+00 : f32
    %50 = vector.broadcast %cst_24 : f32 to vector<2x768xf32>
    %51 = arith.maximumf %49, %50 : vector<2x768xf32>
    %c64 = arith.constant 64 : index
    %c0_25 = arith.constant 0 : index
    %52 = vector.load %arg5[%c64, %c0_25] : memref<832x512xbf16, #tpu.memory_space<vmem>>, vector<768x512xbf16>
    %53 = arith.truncf %51 : vector<2x768xf32> to vector<2x768xbf16>
    %cst_26 = arith.constant dense<0.000000e+00> : vector<2x512xf32>
    %54 = tpu.matmul %53, %52, %cst_26 {dimension_numbers = #tpu.dot_dimension_numbers<[1], [0], [0], [1], [0, 0, 1, 1], [], []>} : vector<2x768xbf16>, vector<768x512xbf16>, vector<2x512xf32> -> vector<2x512xf32>
    %c1 = arith.constant 1 : index
    %c0_27 = arith.constant 0 : index
    %55 = vector.load %arg7[%c1, %c0_27] : memref<8x768xf32, #tpu.memory_space<vmem>>, vector<1x512xf32>
    %56 = vector.broadcast %55 : vector<1x512xf32> to vector<2x512xf32>
    %57 = arith.addf %54, %56 : vector<2x512xf32>
    %cst_28 = arith.constant 0.000000e+00 : f32
    %58 = vector.broadcast %cst_28 : f32 to vector<2x512xf32>
    %59 = arith.maximumf %57, %58 : vector<2x512xf32>
    %c0_29 = arith.constant 0 : index
    %c0_30 = arith.constant 0 : index
    %60 = vector.load %arg3[%c0_29, %c0_30] : memref<2x16xf32, #tpu.memory_space<vmem>>, vector<2x16xf32>
    %c640 = arith.constant 640 : index
    %c64_31 = arith.constant 64 : index
    %61 = vector.load %arg6[%c640, %c64_31] : memref<832x128xbf16, #tpu.memory_space<vmem>>, vector<16x64xbf16>
    %62 = arith.truncf %60 : vector<2x16xf32> to vector<2x16xbf16>
    %cst_32 = arith.constant dense<0.000000e+00> : vector<2x64xf32>
    %63 = tpu.matmul %62, %61, %cst_32 {dimension_numbers = #tpu.dot_dimension_numbers<[1], [0], [0], [1], [0, 0, 1, 1], [], []>} : vector<2x16xbf16>, vector<16x64xbf16>, vector<2x64xf32> -> vector<2x64xf32>
    %c3 = arith.constant 3 : index
    %c384 = arith.constant 384 : index
    %64 = vector.load %arg7[%c3, %c384] : memref<8x768xf32, #tpu.memory_space<vmem>>, vector<1x64xf32>
    %65 = vector.broadcast %64 : vector<1x64xf32> to vector<2x64xf32>
    %66 = arith.addf %63, %65 : vector<2x64xf32>
    %cst_33 = arith.constant 0.000000e+00 : f32
    %67 = vector.broadcast %cst_33 : f32 to vector<2x64xf32>
    %68 = arith.maximumf %66, %67 : vector<2x64xf32>
    %c768 = arith.constant 768 : index
    %c0_34 = arith.constant 0 : index
    %69 = vector.load %arg6[%c768, %c0_34] : memref<832x128xbf16, #tpu.memory_space<vmem>>, vector<64x128xbf16>
    %70 = arith.truncf %68 : vector<2x64xf32> to vector<2x64xbf16>
    %cst_35 = arith.constant dense<0.000000e+00> : vector<2x128xf32>
    %71 = tpu.matmul %70, %69, %cst_35 {dimension_numbers = #tpu.dot_dimension_numbers<[1], [0], [0], [1], [0, 0, 1, 1], [], []>} : vector<2x64xbf16>, vector<64x128xbf16>, vector<2x128xf32> -> vector<2x128xf32>
    %c3_36 = arith.constant 3 : index
    %c256 = arith.constant 256 : index
    %72 = vector.load %arg7[%c3_36, %c256] : memref<8x768xf32, #tpu.memory_space<vmem>>, vector<1x128xf32>
    %73 = vector.broadcast %72 : vector<1x128xf32> to vector<2x128xf32>
    %74 = arith.addf %71, %73 : vector<2x128xf32>
    %cst_37 = arith.constant 0.000000e+00 : f32
    %75 = vector.broadcast %cst_37 : f32 to vector<2x128xf32>
    %76 = arith.maximumf %74, %75 : vector<2x128xf32>
    tpu.wait_dma2 semaphore(%arg11 : memref<!tpu.dma_semaphore, #tpu.memory_space<semaphore_mem>>) src(%arg8 : memref<1664x256xbf16, #tpu.memory_space<any>>) dst(%arg10 : memref<1664x256xbf16, #tpu.memory_space<vmem>>)
    %c0_38 = arith.constant 0 : index
    %c0_39 = arith.constant 0 : index
    %77 = vector.load %arg10[%c0_38, %c0_39] : memref<1664x256xbf16, #tpu.memory_space<vmem>>, vector<512x256xbf16>
    %78 = arith.truncf %12 : vector<2x512xf32> to vector<2x512xbf16>
    %cst_40 = arith.constant dense<0.000000e+00> : vector<2x256xf32>
    %79 = tpu.matmul %78, %77, %cst_40 {dimension_numbers = #tpu.dot_dimension_numbers<[1], [0], [0], [1], [0, 0, 1, 1], [], []>} : vector<2x512xbf16>, vector<512x256xbf16>, vector<2x256xf32> -> vector<2x256xf32>
    %c2_41 = arith.constant 2 : index
    %c512 = arith.constant 512 : index
    %80 = vector.load %arg7[%c2_41, %c512] : memref<8x768xf32, #tpu.memory_space<vmem>>, vector<1x256xf32>
    %81 = vector.broadcast %80 : vector<1x256xf32> to vector<2x256xf32>
    %82 = arith.addf %79, %81 : vector<2x256xf32>
    %cst_42 = arith.constant 0.000000e+00 : f32
    %83 = vector.broadcast %cst_42 : f32 to vector<2x256xf32>
    %84 = arith.maximumf %82, %83 : vector<2x256xf32>
    %c512_43 = arith.constant 512 : index
    %c0_44 = arith.constant 0 : index
    %85 = vector.load %arg10[%c512_43, %c0_44] : memref<1664x256xbf16, #tpu.memory_space<vmem>>, vector<512x256xbf16>
    %86 = arith.truncf %59 : vector<2x512xf32> to vector<2x512xbf16>
    %cst_45 = arith.constant dense<0.000000e+00> : vector<2x256xf32>
    %87 = tpu.matmul %86, %85, %cst_45 {dimension_numbers = #tpu.dot_dimension_numbers<[1], [0], [0], [1], [0, 0, 1, 1], [], []>} : vector<2x512xbf16>, vector<512x256xbf16>, vector<2x256xf32> -> vector<2x256xf32>
    %c1_46 = arith.constant 1 : index
    %c512_47 = arith.constant 512 : index
    %88 = vector.load %arg7[%c1_46, %c512_47] : memref<8x768xf32, #tpu.memory_space<vmem>>, vector<1x256xf32>
    %89 = vector.broadcast %88 : vector<1x256xf32> to vector<2x256xf32>
    %90 = arith.addf %87, %89 : vector<2x256xf32>
    %cst_48 = arith.constant 0.000000e+00 : f32
    %91 = vector.broadcast %cst_48 : f32 to vector<2x256xf32>
    %92 = arith.maximumf %90, %91 : vector<2x256xf32>
    %93 = tpu.concatenate %84, %92, %76 in 1 : vector<2x256xf32>, vector<2x256xf32>, vector<2x128xf32> -> vector<2x640xf32>
    %c0_49 = arith.constant 0 : index
    %c64_50 = arith.constant 64 : index
    %94 = vector.load %arg6[%c0_49, %c64_50] : memref<832x128xbf16, #tpu.memory_space<vmem>>, vector<640x8xbf16>
    %95 = arith.truncf %93 : vector<2x640xf32> to vector<2x640xbf16>
    %cst_51 = arith.constant dense<0.000000e+00> : vector<2x8xf32>
    %96 = tpu.matmul %95, %94, %cst_51 {dimension_numbers = #tpu.dot_dimension_numbers<[1], [0], [0], [1], [0, 0, 1, 1], [], []>} : vector<2x640xbf16>, vector<640x8xbf16>, vector<2x8xf32> -> vector<2x8xf32>
    %c4 = arith.constant 4 : index
    %c0_52 = arith.constant 0 : index
    %97 = vector.load %arg7[%c4, %c0_52] : memref<8x768xf32, #tpu.memory_space<vmem>>, vector<1x8xf32>
    %98 = vector.broadcast %97 : vector<1x8xf32> to vector<2x8xf32>
    %99 = arith.addf %96, %98 : vector<2x8xf32>
    %100 = vector.extract_strided_slice %99 {offsets = [0, 0], sizes = [2, 4], strides = [1, 1]} : vector<2x8xf32> to vector<2x4xf32>
    %101 = vector.extract_strided_slice %99 {offsets = [0, 4], sizes = [2, 1], strides = [1, 1]} : vector<2x8xf32> to vector<2x1xf32>
    %102 = vector.extract_strided_slice %99 {offsets = [0, 5], sizes = [2, 1], strides = [1, 1]} : vector<2x8xf32> to vector<2x1xf32>
    %cst_53 = arith.constant dense<0xFF800000> : vector<2xf32>
    %103 = vector.multi_reduction <maximumf>, %100, %cst_53 [1] : vector<2x4xf32> to vector<2xf32>
    %cst_54 = arith.constant 0xFF800000 : f32
    %104 = vector.broadcast %cst_54 : f32 to vector<2xf32>
    %105 = arith.maximumf %104, %103 : vector<2xf32>
    %106 = vector.shape_cast %105 : vector<2xf32> to vector<2x1xf32>
    %107 = vector.broadcast %106 : vector<2x1xf32> to vector<2x4xf32>
    %108 = arith.subf %100, %107 : vector<2x4xf32>
    %109 = math.exp %108 : vector<2x4xf32>
    %cst_55 = arith.constant dense<0.000000e+00> : vector<2xf32>
    %110 = vector.multi_reduction <add>, %109, %cst_55 [1] : vector<2x4xf32> to vector<2xf32>
    %111 = vector.shape_cast %110 : vector<2xf32> to vector<2x1xf32>
    %112 = vector.broadcast %111 : vector<2x1xf32> to vector<2x4xf32>
    %113 = arith.divf %109, %112 : vector<2x4xf32>
    %114 = arith.negf %102 : vector<2x1xf32>
    %115 = math.exp %114 : vector<2x1xf32>
    %cst_56 = arith.constant 1.000000e+00 : f32
    %116 = vector.broadcast %cst_56 : f32 to vector<2x1xf32>
    %117 = arith.addf %116, %115 : vector<2x1xf32>
    %118 = arith.divf %116, %117 : vector<2x1xf32>
    %cst_57 = arith.constant 0.000000e+00 : f32
    %119 = vector.broadcast %cst_57 : f32 to vector<2x1xf32>
    %120 = arith.subf %119, %101 : vector<2x1xf32>
    %121 = arith.negf %120 : vector<2x1xf32>
    %122 = math.exp %121 : vector<2x1xf32>
    %cst_58 = arith.constant 1.000000e+00 : f32
    %123 = vector.broadcast %cst_58 : f32 to vector<2x1xf32>
    %124 = arith.addf %123, %122 : vector<2x1xf32>
    %125 = arith.divf %123, %124 : vector<2x1xf32>
    %cst_59 = arith.constant 5.000000e-01 : f32
    %126 = vector.broadcast %cst_59 : f32 to vector<2x1xf32>
    %127 = arith.mulf %125, %126 : vector<2x1xf32>
    %128 = tpu.iota {dimensions = array<i32: 1>} : vector<2x4xi32>
    %c0_i32_60 = arith.constant 0 : i32
    %129 = vector.broadcast %c0_i32_60 : i32 to vector<2x4xi32>
    %130 = arith.cmpi eq, %128, %129 : vector<2x4xi32>
    %cst_61 = arith.constant 0.000000e+00 : f32
    %131 = vector.broadcast %cst_61 : f32 to vector<2x1xf32>
    %132 = arith.subf %131, %127 : vector<2x1xf32>
    %cst_62 = arith.constant 2.000000e-01 : f32
    %133 = vector.broadcast %cst_62 : f32 to vector<2x1xf32>
    %134 = arith.mulf %132, %133 : vector<2x1xf32>
    %c1_i32_63 = arith.constant 1 : i32
    %135 = vector.broadcast %c1_i32_63 : i32 to vector<2x4xi32>
    %136 = arith.cmpi eq, %128, %135 : vector<2x4xi32>
    %cst_64 = arith.constant 3.000000e-01 : f32
    %137 = vector.broadcast %cst_64 : f32 to vector<2x1xf32>
    %138 = arith.mulf %118, %137 : vector<2x1xf32>
    %cst_65 = arith.constant 0.000000e+00 : f32
    %139 = vector.shape_cast %138 : vector<2x1xf32> to vector<2x1xf32>
    %140 = vector.broadcast %139 : vector<2x1xf32> to vector<2x4xf32>
    %141 = vector.broadcast %cst_65 : f32 to vector<2x4xf32>
    %142 = arith.select %136, %140, %141 : vector<2x4xi1>, vector<2x4xf32>
    %143 = vector.shape_cast %134 : vector<2x1xf32> to vector<2x1xf32>
    %144 = vector.broadcast %143 : vector<2x1xf32> to vector<2x4xf32>
    %145 = arith.select %130, %144, %142 : vector<2x4xi1>, vector<2x4xf32>
    %146 = arith.addf %113, %145 : vector<2x4xf32>
    %cst_66 = arith.constant dense<0xFF800000> : vector<2xf32>
    %147 = vector.multi_reduction <maximumf>, %146, %cst_66 [1] : vector<2x4xf32> to vector<2xf32>
    %cst_67 = arith.constant 0xFF800000 : f32
    %148 = vector.broadcast %cst_67 : f32 to vector<2xf32>
    %149 = arith.maximumf %148, %147 : vector<2xf32>
    %150 = vector.shape_cast %149 : vector<2xf32> to vector<2x1xf32>
    %151 = vector.broadcast %150 : vector<2x1xf32> to vector<2x4xf32>
    %152 = arith.subf %146, %151 : vector<2x4xf32>
    %153 = math.exp %152 : vector<2x4xf32>
    %cst_68 = arith.constant dense<0.000000e+00> : vector<2xf32>
    %154 = vector.multi_reduction <add>, %153, %cst_68 [1] : vector<2x4xf32> to vector<2xf32>
    %155 = vector.shape_cast %154 : vector<2xf32> to vector<2x1xf32>
    %156 = vector.broadcast %155 : vector<2x1xf32> to vector<2x4xf32>
    %157 = arith.divf %153, %156 : vector<2x4xf32>
    %158 = tpu.iota {dimensions = array<i32: 1>} : vector<2x640xi32>
    %c256_i32 = arith.constant 256 : i32
    %159 = vector.broadcast %c256_i32 : i32 to vector<2x640xi32>
    %160 = arith.cmpi slt, %158, %159 : vector<2x640xi32>
    %161 = vector.extract_strided_slice %157 {offsets = [0, 0], sizes = [2, 1], strides = [1, 1]} : vector<2x4xf32> to vector<2x1xf32>
    %c512_i32 = arith.constant 512 : i32
    %162 = vector.broadcast %c512_i32 : i32 to vector<2x640xi32>
    %163 = arith.cmpi slt, %158, %162 : vector<2x640xi32>
    %164 = vector.extract_strided_slice %157 {offsets = [0, 1], sizes = [2, 1], strides = [1, 1]} : vector<2x4xf32> to vector<2x1xf32>
    %c576_i32 = arith.constant 576 : i32
    %165 = vector.broadcast %c576_i32 : i32 to vector<2x640xi32>
    %166 = arith.cmpi slt, %158, %165 : vector<2x640xi32>
    %167 = vector.extract_strided_slice %157 {offsets = [0, 2], sizes = [2, 1], strides = [1, 1]} : vector<2x4xf32> to vector<2x1xf32>
    %168 = vector.extract_strided_slice %157 {offsets = [0, 3], sizes = [2, 1], strides = [1, 1]} : vector<2x4xf32> to vector<2x1xf32>
    %169 = vector.shape_cast %167 : vector<2x1xf32> to vector<2x1xf32>
    %170 = vector.broadcast %169 : vector<2x1xf32> to vector<2x640xf32>
    %171 = vector.shape_cast %168 : vector<2x1xf32> to vector<2x1xf32>
    %172 = vector.broadcast %171 : vector<2x1xf32> to vector<2x640xf32>
    %173 = arith.select %166, %170, %172 : vector<2x640xi1>, vector<2x640xf32>
    %174 = vector.shape_cast %164 : vector<2x1xf32> to vector<2x1xf32>
    %175 = vector.broadcast %174 : vector<2x1xf32> to vector<2x640xf32>
    %176 = arith.select %163, %175, %173 : vector<2x640xi1>, vector<2x640xf32>
    %177 = vector.shape_cast %161 : vector<2x1xf32> to vector<2x1xf32>
    %178 = vector.broadcast %177 : vector<2x1xf32> to vector<2x640xf32>
    %179 = arith.select %160, %178, %176 : vector<2x640xi1>, vector<2x640xf32>
    %180 = arith.mulf %93, %179 : vector<2x640xf32>
    %c1024 = arith.constant 1024 : index
    %c0_69 = arith.constant 0 : index
    %181 = vector.load %arg10[%c1024, %c0_69] : memref<1664x256xbf16, #tpu.memory_space<vmem>>, vector<640x256xbf16>
    %182 = arith.truncf %180 : vector<2x640xf32> to vector<2x640xbf16>
    %cst_70 = arith.constant dense<0.000000e+00> : vector<2x256xf32>
    %183 = tpu.matmul %182, %181, %cst_70 {dimension_numbers = #tpu.dot_dimension_numbers<[1], [0], [0], [1], [0, 0, 1, 1], [], []>} : vector<2x640xbf16>, vector<640x256xbf16>, vector<2x256xf32> -> vector<2x256xf32>
    %c3_71 = arith.constant 3 : index
    %c0_72 = arith.constant 0 : index
    %184 = vector.load %arg7[%c3_71, %c0_72] : memref<8x768xf32, #tpu.memory_space<vmem>>, vector<1x256xf32>
    %185 = vector.broadcast %184 : vector<1x256xf32> to vector<2x256xf32>
    %186 = arith.addf %183, %185 : vector<2x256xf32>
    %cst_73 = arith.constant 0.000000e+00 : f32
    %187 = vector.broadcast %cst_73 : f32 to vector<2x256xf32>
    %188 = arith.maximumf %186, %187 : vector<2x256xf32>
    %c0_74 = arith.constant 0 : index
    %c72 = arith.constant 72 : index
    %189 = vector.load %arg6[%c0_74, %c72] : memref<832x128xbf16, #tpu.memory_space<vmem>>, vector<256x3xbf16>
    %190 = arith.truncf %188 : vector<2x256xf32> to vector<2x256xbf16>
    %cst_75 = arith.constant dense<0.000000e+00> : vector<2x3xf32>
    %191 = tpu.matmul %190, %189, %cst_75 {dimension_numbers = #tpu.dot_dimension_numbers<[1], [0], [0], [1], [0, 0, 1, 1], [], []>} : vector<2x256xbf16>, vector<256x3xbf16>, vector<2x3xf32> -> vector<2x3xf32>
    %c4_76 = arith.constant 4 : index
    %c128 = arith.constant 128 : index
    %192 = vector.load %arg7[%c4_76, %c128] : memref<8x768xf32, #tpu.memory_space<vmem>>, vector<1x3xf32>
    %193 = vector.broadcast %192 : vector<1x3xf32> to vector<2x3xf32>
    %194 = arith.addf %191, %193 : vector<2x3xf32>
    %195 = vector.extract_strided_slice %99 {offsets = [0, 3], sizes = [2, 5], strides = [1, 1]} : vector<2x8xf32> to vector<2x5xf32>
    %cst_77 = arith.constant 0.000000e+00 : f32
    %196 = vector.broadcast %cst_77 : f32 to vector<2x116xf32>
    %197 = tpu.concatenate %194, %195, %157, %196 in 1 : vector<2x3xf32>, vector<2x5xf32>, vector<2x4xf32>, vector<2x116xf32> -> vector<2x128xf32>
    %c0_78 = arith.constant 0 : index
    %c0_79 = arith.constant 0 : index
    %198 = vector.load %arg9[%c0_78, %c0_79] : memref<2x128xf32, #tpu.memory_space<vmem>>, vector<2x128xf32>
    tpu.vector_store %arg9[%c0_78, %c0_79], %197 {strides = array<i32>} : memref<2x128xf32, #tpu.memory_space<vmem>>, vector<2x128xf32>,
    return
  }
}

</mosaic_0001>

<llo_original>
// kernel: multimodal_cv_classifier.1
$region0: #{multimodal_cv_classifier.1}
  #allocation0 [shape = 'u32[]', space=smem, size = 0x4, offset = 0x4, fixed_abs, tag = 'smem constant byte address 0x4 - core index']
  #allocation1 [shape = 'u32[144,128]{1,0:T(1,128)}', space=vmem, size = 0x12000, scoped, tag = 'internal scratch']
  #allocation2 [shape = 'bf16[1664,256]{1,0:T(8,128)(2,1)}', space=vmem, size = 0xd0000, scoped, tag = 'scratch operand']
  #allocation3 [shape = 's32[1]{0}', space=sflag, size = 0x4, scoped, tag = 'scratch operand']
  #allocation11 [shape = 's32[]', space=sflag, size = 0x4, offset = 0, fixed_abs, tag = 'sflag constant byte address 0x0 - dummy sync flag']
  #allocation12 [shape = 's32[]', space=sflag, size = 0x4, offset = 0, fixed_abs, tag = 'sflag constant byte address 0x0 - dummy sync flag']
  #allocation13 [shape = 'u32[]', space=smem, size = 0x4, offset = 0x44, fixed_abs, tag = 'smem constant byte address 0x44 - assertion arg 0']
  #allocation14 [shape = 'u32[]', space=smem, size = 0x4, offset = 0x48, fixed_abs, tag = 'smem constant byte address 0x48 - assertion arg 1']
  %s0 = inlined_call_operand.vmem [shape: f32[2,768], index: 0, kind: input, shape index: {}]
  %s1 = inlined_call_operand.vmem [shape: f32[2,8,64], index: 1, kind: input, shape index: {}]
  %s2 = inlined_call_operand.hbm [shape: s32[2,8], index: 2, kind: input, shape index: {}]
  %s3 = inlined_call_operand.vmem [shape: f32[2,16], index: 3, kind: input, shape index: {}]
  %s4 = inlined_call_operand.hbm [shape: bf16[128,768], index: 4, kind: input, shape index: {}]
  %s5 = inlined_call_operand.hbm [shape: bf16[832,512], index: 5, kind: input, shape index: {}]
  %s6 = inlined_call_operand.vmem [shape: bf16[832,128], index: 6, kind: input, shape index: {}]
  %s7 = inlined_call_operand.hbm [shape: f32[8,768], index: 7, kind: input, shape index: {}]
  %s8 = inlined_call_operand.hbm [shape: bf16[1664,256], index: 8, kind: input, shape index: {}]
  %s9 = inlined_call_operand.vmem [shape: f32[2,128], index: 9, kind: output, shape index: {}]
  %s10 = sld [smem:[#allocation0]]
  $region62: #{multimodal_cv_classifier.1} parent=0
    _
  %s12 = ssub.s32 1, %s10
  %s13 = scalar_select 0, %s12, %s10
  $region1: #{multimodal_cv_classifier.1} parent=0
    #allocation4 [shape = 'u8[1024]{0}', space=vmem, size = 0x400, scoped, tag = 'input window, operand 2, single buffered']
    #allocation5 [shape = 's32[1]{0}', space=sflag, size = 0x4, scoped, tag = 'scoped memory for multimodal_cv_classifier.1']
    #allocation6 [shape = 'u8[196608]{0}', space=vmem, size = 0x30000, scoped, tag = 'input window, operand 4, single buffered']
    #allocation7 [shape = 's32[1]{0}', space=sflag, size = 0x4, scoped, tag = 'scoped memory for multimodal_cv_classifier.1']
    #allocation8 [shape = 'u8[851968]{0}', space=vmem, size = 0xd0000, scoped, tag = 'input window, operand 5, single buffered']
    #allocation9 [shape = 'u8[24576]{0}', space=vmem, size = 0x6000, scoped, tag = 'input window, operand 7, single buffered']
    #allocation10 [shape = 's32[1]{0}', space=sflag, size = 0x4, scoped, tag = 'scoped memory for multimodal_cv_classifier.1']
    %14 = vsyncpa [#allocation5], 0
    %15 = vsyncpa [#allocation7], 0
    %16 = vsyncpa [#allocation10], 0
    // Predicated region
    $region2: #{multimodal_cv_classifier.1} parent=1 // pred_check
      _
    $region3: #{multimodal_cv_classifier.1} parent=1 // pred_check_branch
      %18 = sbr.rel (0) target = $region5
    $region4: #{multimodal_cv_classifier.1} parent=1 // pred_region
      _
    $region5: #{multimodal_cv_classifier.1} parent=1 // pred_fallthru
      _
    // Predicated region
    $region6: #{multimodal_cv_classifier.1} parent=1 // pred_check
      _
    $region7: #{multimodal_cv_classifier.1} parent=1 // pred_check_branch
      %20 = sbr.rel (0) target = $region9
    $region8: #{multimodal_cv_classifier.1} parent=1 // pred_region
      _
    $region9: #{multimodal_cv_classifier.1} parent=1 // pred_fallthru
      _
    // Predicated region
    $region10: #{multimodal_cv_classifier.1} parent=1 // pred_check
      _
    $region11: #{multimodal_cv_classifier.1} parent=1 // pred_check_branch
      %22 = sbr.rel (0) target = $region13
    $region12: #{multimodal_cv_classifier.1} parent=1 // pred_region
      %s24 = ssub.s32 32, 32
      %25 = vsyncadd [#allocation5], %s24
      %s27 = sshll.u32 [#allocation4], 4
      %s28 = int_to_ptr.vmem [resolvable:$true] %s27
      %30 = dma.hbm_to_vmem [thread:$0]  %s2, 32, %s28, [#allocation5]
    $region13: #{multimodal_cv_classifier.1} parent=1 // pred_fallthru
      _
    // Predicated region
    $region14: #{multimodal_cv_classifier.1} parent=1 // pred_check
      _
    $region15: #{multimodal_cv_classifier.1} parent=1 // pred_check_branch
      %32 = sbr.rel (0) target = $region17
    $region16: #{multimodal_cv_classifier.1} parent=1 // pred_region
      _
    $region17: #{multimodal_cv_classifier.1} parent=1 // pred_fallthru
      _
    // Predicated region
    $region18: #{multimodal_cv_classifier.1} parent=1 // pred_check
      _
    $region19: #{multimodal_cv_classifier.1} parent=1 // pred_check_branch
      %34 = sbr.rel (0) target = $region21
    $region20: #{multimodal_cv_classifier.1} parent=1 // pred_region
      %s36 = ssub.s32 6144, 6144
      %37 = vsyncadd [#allocation7], %s36
      %s38 = sshll.u32 [#allocation6], 4
      %s39 = int_to_ptr.vmem [resolvable:$true] %s38
      %44 = dma.hbm_to_vmem [thread:$0]  %s4, 6144, %s39, [#allocation7], 384, 384, 24
    $region21: #{multimodal_cv_classifier.1} parent=1 // pred_fallthru
      _
    // Predicated region
    $region22: #{multimodal_cv_classifier.1} parent=1 // pred_check
      _
    $region23: #{multimodal_cv_classifier.1} parent=1 // pred_check_branch
      %46 = sbr.rel (0) target = $region25
    $region24: #{multimodal_cv_classifier.1} parent=1 // pred_region
      %s48 = ssub.s32 26624, 26624
      %49 = vsyncadd [#allocation7], %s48
      %s50 = sshll.u32 [#allocation8], 4
      %s51 = int_to_ptr.vmem [resolvable:$true] %s50
      %56 = dma.hbm_to_vmem [thread:$0]  %s5, 26624, %s51, [#allocation7], 256, 256, 16
    $region25: #{multimodal_cv_classifier.1} parent=1 // pred_fallthru
      _
    // Predicated region
    $region26: #{multimodal_cv_classifier.1} parent=1 // pred_check
      _
    $region27: #{multimodal_cv_classifier.1} parent=1 // pred_check_branch
      %58 = sbr.rel (0) target = $region29
    $region28: #{multimodal_cv_classifier.1} parent=1 // pred_region
      _
    $region29: #{multimodal_cv_classifier.1} parent=1 // pred_fallthru
      _
    // Predicated region
    $region30: #{multimodal_cv_classifier.1} parent=1 // pred_check
      _
    $region31: #{multimodal_cv_classifier.1} parent=1 // pred_check_branch
      %60 = sbr.rel (0) target = $region33
    $region32: #{multimodal_cv_classifier.1} parent=1 // pred_region
      %s62 = ssub.s32 768, 768
      %63 = vsyncadd [#allocation10], %s62
      %s65 = sshll.u32 [#allocation9], 4
      %s66 = int_to_ptr.vmem [resolvable:$true] %s65
      %68 = dma.hbm_to_vmem [thread:$0]  %s7, 768, %s66, [#allocation10]
    $region33: #{multimodal_cv_classifier.1} parent=1 // pred_fallthru
      _
    // Predicated region
    $region34: #{multimodal_cv_classifier.1} parent=1 // pred_check
      _
    $region35: #{multimodal_cv_classifier.1} parent=1 // pred_check_branch
      %70 = sbr.rel (0) target = $region37
    $region36: #{multimodal_cv_classifier.1} parent=1 // pred_region
      %71 = dma.done [#allocation5], 32
    $region37: #{multimodal_cv_classifier.1} parent=1 // pred_fallthru
      _
    // Predicated region
    $region38: #{multimodal_cv_classifier.1} parent=1 // pred_check
      _
    $region39: #{multimodal_cv_classifier.1} parent=1 // pred_check_branch
      %73 = sbr.rel (0) target = $region41
    $region40: #{multimodal_cv_classifier.1} parent=1 // pred_region
      %74 = dma.done [#allocation7], 6144
    $region41: #{multimodal_cv_classifier.1} parent=1 // pred_fallthru
      _
    // Predicated region
    $region42: #{multimodal_cv_classifier.1} parent=1 // pred_check
      _
    $region43: #{multimodal_cv_classifier.1} parent=1 // pred_check_branch
      %76 = sbr.rel (0) target = $region45
    $region44: #{multimodal_cv_classifier.1} parent=1 // pred_region
      %77 = dma.done [#allocation7], 26624
    $region45: #{multimodal_cv_classifier.1} parent=1 // pred_fallthru
      _
    // Predicated region
    $region46: #{multimodal_cv_classifier.1} parent=1 // pred_check
      _
    $region47: #{multimodal_cv_classifier.1} parent=1 // pred_check_branch
      %79 = sbr.rel (0) target = $region49
    $region48: #{multimodal_cv_classifier.1} parent=1 // pred_region
      %80 = dma.done [#allocation10], 768
    $region49: #{multimodal_cv_classifier.1} parent=1 // pred_fallthru
      _
    // Predicated region
    $region50: #{multimodal_cv_classifier.1} parent=1 // pred_check
      _
    $region51: #{multimodal_cv_classifier.1} parent=1 // pred_check_branch
      %83 = sbr.rel target = $region53
    $region52: #{multimodal_cv_classifier.1} parent=1 // pred_region
      %84 = sst [smem:[#allocation13]] [#allocation12]
      %85 = sst [smem:[#allocation14]] [#allocation11]
    $region53: #{multimodal_cv_classifier.1} parent=1 // pred_fallthru
      _
    %87 = shalt.err (0)
    %s89 = sshll.u32 [#allocation2], 4
    %s90 = int_to_ptr.vmem [resolvable:$true] %s89
    %92 = dma.hbm_to_vmem [thread:$0]  %s8, 26624, %s90, [#allocation3]
    %v93 = vld [vmem:[%s0] sm:$0xff]
    %v94 = vld [vmem:[%s0 + $0x8] sm:$0xf]
    %v95 = vld [vmem:[%s6] sm:$0xf]
    %v96 = vld [vmem:[%s6 + $0x4] sm:$0xf]
    %v97 = vld [vmem:[%s6 + $0x8] sm:$0xf]
    %v98 = vld [vmem:[%s6 + $0xc] sm:$0xf]
    %v99 = vld [vmem:[%s6 + $0x10] sm:$0xf]
    %v100 = vld [vmem:[%s6 + $0x14] sm:$0xf]
    %v101 = vld [vmem:[%s6 + $0x18] sm:$0xf]
    %v102 = vld [vmem:[%s6 + $0x1c] sm:$0xf]
    %v103 = vld [vmem:[%s6 + $0x20] sm:$0xf]
    %v104 = vld [vmem:[%s6 + $0x24] sm:$0xf]
    %v105 = vld [vmem:[%s6 + $0x28] sm:$0xf]
    %v106 = vld [vmem:[%s6 + $0x2c] sm:$0xf]
    %v107 = vld [vmem:[%s6 + $0x30] sm:$0xf]
    %v108 = vld [vmem:[%s6 + $0x34] sm:$0xf]
    %v109 = vld [vmem:[%s6 + $0x38] sm:$0xf]
    %v110 = vld [vmem:[%s6 + $0x3c] sm:$0xf]
    %v111 = vld [vmem:[%s6 + $0x40] sm:$0xf]
    %v112 = vld [vmem:[%s6 + $0x44] sm:$0xf]
    %v113 = vld [vmem:[%s6 + $0x48] sm:$0xf]
    %v114 = vld [vmem:[%s6 + $0x4c] sm:$0xf]
    %v115 = vld [vmem:[%s6 + $0x50] sm:$0xf]
    %v116 = vld [vmem:[%s6 + $0x54] sm:$0xf]
    %v117 = vld [vmem:[%s6 + $0x58] sm:$0xf]
    %v118 = vld [vmem:[%s6 + $0x5c] sm:$0xf]
    %v119 = vld [vmem:[%s6 + $0x60] sm:$0xf]
    %v120 = vld [vmem:[%s6 + $0x64] sm:$0xf]
    %v121 = vld [vmem:[%s6 + $0x68] sm:$0xf]
    %v122 = vld [vmem:[%s6 + $0x6c] sm:$0xf]
    %v123 = vld [vmem:[%s6 + $0x70] sm:$0xf]
    %v124 = vld [vmem:[%s6 + $0x74] sm:$0xf]
    %v125 = vld [vmem:[%s6 + $0x78] sm:$0xf]
    %v126 = vld [vmem:[%s6 + $0x7c] sm:$0xf]
    %v127 = vld [vmem:[%s6 + $0x80] sm:$0xf]
    %v128 = vld [vmem:[%s6 + $0x84] sm:$0xf]
    %v129 = vld [vmem:[%s6 + $0x88] sm:$0xf]
    %v130 = vld [vmem:[%s6 + $0x8c] sm:$0xf]
    %v131 = vld [vmem:[%s6 + $0x90] sm:$0xf]
    %v132 = vld [vmem:[%s6 + $0x94] sm:$0xf]
    %v133 = vld [vmem:[%s6 + $0x98] sm:$0xf]
    %v134 = vld [vmem:[%s6 + $0x9c] sm:$0xf]
    %v135 = vld [vmem:[%s6 + $0xa0] sm:$0xf]
    %v136 = vld [vmem:[%s6 + $0xa4] sm:$0xf]
    %v137 = vld [vmem:[%s6 + $0xa8] sm:$0xf]
    %v138 = vld [vmem:[%s6 + $0xac] sm:$0xf]
    %v139 = vld [vmem:[%s6 + $0xb0] sm:$0xf]
    %v140 = vld [vmem:[%s6 + $0xb4] sm:$0xf]
    %v141 = vld [vmem:[%s6 + $0xb8] sm:$0xf]
    %v142 = vld [vmem:[%s6 + $0xbc] sm:$0xf]
    %v143 = vld [vmem:[%s6 + $0xc0] sm:$0xf]
    %v144 = vld [vmem:[%s6 + $0xc4] sm:$0xf]
    %v145 = vld [vmem:[%s6 + $0xc8] sm:$0xf]
    %v146 = vld [vmem:[%s6 + $0xcc] sm:$0xf]
    %v147 = vld [vmem:[%s6 + $0xd0] sm:$0xf]
    %v148 = vld [vmem:[%s6 + $0xd4] sm:$0xf]
    %v149 = vld [vmem:[%s6 + $0xd8] sm:$0xf]
    %v150 = vld [vmem:[%s6 + $0xdc] sm:$0xf]
    %v151 = vld [vmem:[%s6 + $0xe0] sm:$0xf]
    %v152 = vld [vmem:[%s6 + $0xe4] sm:$0xf]
    %v153 = vld [vmem:[%s6 + $0xe8] sm:$0xf]
    %v154 = vld [vmem:[%s6 + $0xec] sm:$0xf]
    %v155 = vld [vmem:[%s6 + $0xf0] sm:$0xf]
    %v156 = vld [vmem:[%s6 + $0xf4] sm:$0xf]
    %v157 = vld [vmem:[%s6 + $0xf8] sm:$0xf]
    %v158 = vld [vmem:[%s6 + $0xfc] sm:$0xf]
    %v159 = vld [vmem:[%s6 + $0x100] sm:$0xf]
    %v160 = vld [vmem:[%s6 + $0x104] sm:$0xf]
    %v161 = vld [vmem:[%s6 + $0x108] sm:$0xf]
    %v162 = vld [vmem:[%s6 + $0x10c] sm:$0xf]
    %v163 = vld [vmem:[%s6 + $0x110] sm:$0xf]
    %v164 = vld [vmem:[%s6 + $0x114] sm:$0xf]
    %v165 = vld [vmem:[%s6 + $0x118] sm:$0xf]
    %v166 = vld [vmem:[%s6 + $0x11c] sm:$0xf]
    %v167 = vld [vmem:[%s6 + $0x120] sm:$0xf]
    %v168 = vld [vmem:[%s6 + $0x124] sm:$0xf]
    %v169 = vld [vmem:[%s6 + $0x128] sm:$0xf]
    %v170 = vld [vmem:[%s6 + $0x12c] sm:$0xf]
    %v171 = vld [vmem:[%s6 + $0x130] sm:$0xf]
    %v172 = vld [vmem:[%s6 + $0x134] sm:$0xf]
    %v173 = vld [vmem:[%s6 + $0x138] sm:$0xf]
    %v174 = vld [vmem:[%s6 + $0x13c] sm:$0xf]
    %v175 = vld [vmem:[%s6 + $0x140] sm:$0xf]
    %v176 = vld [vmem:[%s6 + $0x144] sm:$0xf]
    %v177 = vld [vmem:[%s6 + $0x148] sm:$0xf]
    %v178 = vld [vmem:[%s6 + $0x14c] sm:$0xf]
    %v179 = vld [vmem:[%s6 + $0x150] sm:$0xf]
    %v180 = vld [vmem:[%s6 + $0x154] sm:$0xf]
    %v181 = vld [vmem:[%s6 + $0x158] sm:$0xf]
    %v182 = vld [vmem:[%s6 + $0x15c] sm:$0xf]
    %v183 = vld [vmem:[%s6 + $0x160] sm:$0xf]
    %v184 = vld [vmem:[%s6 + $0x164] sm:$0xf]
    %v185 = vld [vmem:[%s6 + $0x168] sm:$0xf]
    %v186 = vld [vmem:[%s6 + $0x16c] sm:$0xf]
    %v187 = vld [vmem:[%s6 + $0x170] sm:$0xf]
    %v188 = vld [vmem:[%s6 + $0x174] sm:$0xf]
    %v189 = vld [vmem:[%s6 + $0x178] sm:$0xf]
    %v190 = vld [vmem:[%s6 + $0x17c] sm:$0xf]
    %v193 = vcombine.high %v93, %v93
    %v195 = vunpack.c.l.s4 1983009808
    %v196 = vunpack.c.0.s8 %v195
    %v197 = vlaneseq
    %v198 = vshrl.u32 %v197, 7
    %v199 = vsub.s32 %v196, %v198
    %v200 = vrot.slane %v93, %v199
    %v202 = vunpack.c.l.s4 1983009808
    %v203 = vunpack.c.0.s8 %v202
    %v204 = vlaneseq
    %v205 = vshrl.u32 %v204, 7
    %v206 = vsub.s32 %v203, %v205
    %v207 = vrot.slane %v193, %v206
    %v208 = vcombine.high %v200, %v200
    %v209 = vcombine.high %v207, %v207
    %v211 = vunpack.c.l.s4 1983009808
    %v212 = vunpack.c.0.s8 %v211
    %v213 = vlaneseq
    %v214 = vshrl.u32 %v213, 7
    %v215 = vsub.s32 %v212, %v214
    %v216 = vrot.slane %v94, %v215
    %v217 = vcombine.high %v216, %v216
    %v224 = vpack.c.bf16 %v200, %v200
    %v225 = vpack.c.bf16 %v208, %v208
    %v226 = vpack.c.bf16 %v207, %v207
    %v227 = vpack.c.bf16 %v209, %v209
    %v228 = vpack.c.bf16 %v216, %v216
    %v229 = vpack.c.bf16 %v217, %v217
    %v326 = vunpack.c.l.b16 %v95
    %v327 = vunpack.c.l.b16 %v96
    %v328 = vunpack.c.l.b16 %v97
    %v329 = vunpack.c.l.b16 %v98
    %v330 = vunpack.c.l.b16 %v99
    %v331 = vunpack.c.l.b16 %v100
    %v332 = vunpack.c.l.b16 %v101
    %v333 = vunpack.c.l.b16 %v102
    %v334 = vunpack.c.l.b16 %v103
    %v335 = vunpack.c.l.b16 %v104
    %v336 = vunpack.c.l.b16 %v105
    %v337 = vunpack.c.l.b16 %v106
    %v338 = vunpack.c.l.b16 %v107
    %v339 = vunpack.c.l.b16 %v108
    %v340 = vunpack.c.l.b16 %v109
    %v341 = vunpack.c.l.b16 %v110
    %v342 = vunpack.c.l.b16 %v111
    %v343 = vunpack.c.l.b16 %v112
    %v344 = vunpack.c.l.b16 %v113
    %v345 = vunpack.c.l.b16 %v114
    %v346 = vunpack.c.l.b16 %v115
    %v347 = vunpack.c.l.b16 %v116
    %v348 = vunpack.c.l.b16 %v117
    %v349 = vunpack.c.l.b16 %v118
    %v350 = vunpack.c.l.b16 %v119
    %v351 = vunpack.c.l.b16 %v120
    %v352 = vunpack.c.l.b16 %v121
    %v353 = vunpack.c.l.b16 %v122
    %v354 = vunpack.c.l.b16 %v123
    %v355 = vunpack.c.l.b16 %v124
    %v356 = vunpack.c.l.b16 %v125
    %v357 = vunpack.c.l.b16 %v126
    %v358 = vunpack.c.l.b16 %v127
    %v359 = vunpack.c.l.b16 %v128
    %v360 = vunpack.c.l.b16 %v129
    %v361 = vunpack.c.l.b16 %v130
    %v362 = vunpack.c.l.b16 %v131
    %v363 = vunpack.c.l.b16 %v132
    %v364 = vunpack.c.l.b16 %v133
    %v365 = vunpack.c.l.b16 %v134
    %v366 = vunpack.c.l.b16 %v135
    %v367 = vunpack.c.l.b16 %v136
    %v368 = vunpack.c.l.b16 %v137
    %v369 = vunpack.c.l.b16 %v138
    %v370 = vunpack.c.l.b16 %v139
    %v371 = vunpack.c.l.b16 %v140
    %v372 = vunpack.c.l.b16 %v141
    %v373 = vunpack.c.l.b16 %v142
    %v374 = vunpack.c.l.b16 %v143
    %v375 = vunpack.c.l.b16 %v144
    %v376 = vunpack.c.l.b16 %v145
    %v377 = vunpack.c.l.b16 %v146
    %v378 = vunpack.c.l.b16 %v147
    %v379 = vunpack.c.l.b16 %v148
    %v380 = vunpack.c.l.b16 %v149
    %v381 = vunpack.c.l.b16 %v150
    %v382 = vunpack.c.l.b16 %v151
    %v383 = vunpack.c.l.b16 %v152
    %v384 = vunpack.c.l.b16 %v153
    %v385 = vunpack.c.l.b16 %v154
    %v386 = vunpack.c.l.b16 %v155
    %v387 = vunpack.c.l.b16 %v156
    %v388 = vunpack.c.l.b16 %v157
    %v389 = vunpack.c.l.b16 %v158
    %v390 = vunpack.c.l.b16 %v159
    %v391 = vunpack.c.l.b16 %v160
    %v392 = vunpack.c.l.b16 %v161
    %v393 = vunpack.c.l.b16 %v162
    %v394 = vunpack.c.l.b16 %v163
    %v395 = vunpack.c.l.b16 %v164
    %v396 = vunpack.c.l.b16 %v165
    %v397 = vunpack.c.l.b16 %v166
    %v398 = vunpack.c.l.b16 %v167
    %v399 = vunpack.c.l.b16 %v168
    %v400 = vunpack.c.l.b16 %v169
    %v401 = vunpack.c.l.b16 %v170
    %v402 = vunpack.c.l.b16 %v171
    %v403 = vunpack.c.l.b16 %v172
    %v404 = vunpack.c.l.b16 %v173
    %v405 = vunpack.c.l.b16 %v174
    %v406 = vunpack.c.l.b16 %v175
    %v407 = vunpack.c.l.b16 %v176
    %v408 = vunpack.c.l.b16 %v177
    %v409 = vunpack.c.l.b16 %v178
    %v410 = vunpack.c.l.b16 %v179
    %v411 = vunpack.c.l.b16 %v180
    %v412 = vunpack.c.l.b16 %v181
    %v413 = vunpack.c.l.b16 %v182
    %v414 = vunpack.c.l.b16 %v183
    %v415 = vunpack.c.l.b16 %v184
    %v416 = vunpack.c.l.b16 %v185
    %v417 = vunpack.c.l.b16 %v186
    %v418 = vunpack.c.l.b16 %v187
    %v419 = vunpack.c.l.b16 %v188
    %v420 = vunpack.c.l.b16 %v189
    %v421 = vunpack.c.l.b16 %v190
    %v422 = vpack.c.b16 %v327, %v326
    %v423 = vpack.c.b16 %v329, %v328
    %v424 = vpack.c.b16 %v331, %v330
    %v425 = vpack.c.b16 %v333, %v332
    %v426 = vpack.c.b16 %v335, %v334
    %v427 = vpack.c.b16 %v337, %v336
    %v428 = vpack.c.b16 %v339, %v338
    %v429 = vpack.c.b16 %v341, %v340
    %v430 = vpack.c.b16 %v343, %v342
    %v431 = vpack.c.b16 %v345, %v344
    %v432 = vpack.c.b16 %v347, %v346
    %v433 = vpack.c.b16 %v349, %v348
    %v434 = vpack.c.b16 %v351, %v350
    %v435 = vpack.c.b16 %v353, %v352
    %v436 = vpack.c.b16 %v355, %v354
    %v437 = vpack.c.b16 %v357, %v356
    %v438 = vpack.c.b16 %v359, %v358
    %v439 = vpack.c.b16 %v361, %v360
    %v440 = vpack.c.b16 %v363, %v362
    %v441 = vpack.c.b16 %v365, %v364
    %v442 = vpack.c.b16 %v367, %v366
    %v443 = vpack.c.b16 %v369, %v368
    %v444 = vpack.c.b16 %v371, %v370
    %v445 = vpack.c.b16 %v373, %v372
    %v446 = vpack.c.b16 %v375, %v374
    %v447 = vpack.c.b16 %v377, %v376
    %v448 = vpack.c.b16 %v379, %v378
    %v449 = vpack.c.b16 %v381, %v380
    %v450 = vpack.c.b16 %v383, %v382
    %v451 = vpack.c.b16 %v385, %v384
    %v452 = vpack.c.b16 %v387, %v386
    %v453 = vpack.c.b16 %v389, %v388
    %v454 = vpack.c.b16 %v391, %v390
    %v455 = vpack.c.b16 %v393, %v392
    %v456 = vpack.c.b16 %v395, %v394
    %v457 = vpack.c.b16 %v397, %v396
    %v458 = vpack.c.b16 %v399, %v398
    %v459 = vpack.c.b16 %v401, %v400
    %v460 = vpack.c.b16 %v403, %v402
    %v461 = vpack.c.b16 %v405, %v404
    %v462 = vpack.c.b16 %v407, %v406
    %v463 = vpack.c.b16 %v409, %v408
    %v464 = vpack.c.b16 %v411, %v410
    %v465 = vpack.c.b16 %v413, %v412
    %v466 = vpack.c.b16 %v415, %v414
    %v467 = vpack.c.b16 %v417, %v416
    %v468 = vpack.c.b16 %v419, %v418
    %v469 = vpack.c.b16 %v421, %v420
    %518 = vmatprep.subr.bf16.mxu0 0
    %519 = vmatpush1.bf16.msra.mxu0 %v429
    %520 = vmatprep.subr.bf16.mxu0 0
    %521 = vmatpush1.bf16.msra.mxu0 %v428
    %522 = vmatprep.subr.bf16.mxu0 0
    %523 = vmatpush1.bf16.msra.mxu0 %v427
    %524 = vmatprep.subr.bf16.mxu0 0
    %525 = vmatpush1.bf16.msra.mxu0 %v426
    %526 = vmatprep.subr.bf16.mxu0 0
    %527 = vmatpush1.bf16.msra.mxu0 %v425
    %528 = vmatprep.subr.bf16.mxu0 0
    %529 = vmatpush1.bf16.msra.mxu0 %v424
    %530 = vmatprep.subr.bf16.mxu0 0
    %531 = vmatpush1.bf16.msra.mxu0 %v423
    %532 = vmatprep.subr.bf16.mxu0 0
    %533 = vmatpush1.bf16.msra.mxu0 %v422
    %534 = vmatprep.subr.bf16.mxu0 0
    %535 = vmatpush2.bf16.msra.mxu0 %v437
    %536 = vmatprep.subr.bf16.mxu0 0
    %537 = vmatpush2.bf16.msra.mxu0 %v436
    %538 = vmatprep.subr.bf16.mxu0 0
    %539 = vmatpush2.bf16.msra.mxu0 %v435
    %540 = vmatprep.subr.bf16.mxu0 0
    %541 = vmatpush2.bf16.msra.mxu0 %v434
    %542 = vmatprep.subr.bf16.mxu0 0
    %543 = vmatpush2.bf16.msra.mxu0 %v433
    %544 = vmatprep.subr.bf16.mxu0 0
    %545 = vmatpush2.bf16.msra.mxu0 %v432
    %546 = vmatprep.subr.bf16.mxu0 0
    %547 = vmatpush2.bf16.msra.mxu0 %v431
    %548 = vmatprep.subr.bf16.mxu0 0
    %549 = vmatpush2.bf16.msra.mxu0 %v430
    %550 = vmatprep.mubr.bf16.mxu0 %v225
    %551 = vmatmul.mubr.bf16.gmra.mxu0 %v224
    %v552 = vpop.f32.mrf.mxu0
    %v553 = vadd.f32 0.0, %v552
    %v554 = vpop.f32.mrf.mxu0
    %v555 = vpop.f32.mrf.mxu0
    %v556 = vpop.f32.mrf.mxu0
    %557 = vdwg.mxu0
    %558 = vmatprep.subr.bf16.mxu0 0
    %559 = vmatpush1.bf16.msra.mxu0 %v445
    %560 = vmatprep.subr.bf16.mxu0 0
    %561 = vmatpush1.bf16.msra.mxu0 %v444
    %562 = vmatprep.subr.bf16.mxu0 0
    %563 = vmatpush1.bf16.msra.mxu0 %v443
    %564 = vmatprep.subr.bf16.mxu0 0
    %565 = vmatpush1.bf16.msra.mxu0 %v442
    %566 = vmatprep.subr.bf16.mxu0 0
    %567 = vmatpush1.bf16.msra.mxu0 %v441
    %568 = vmatprep.subr.bf16.mxu0 0
    %569 = vmatpush1.bf16.msra.mxu0 %v440
    %570 = vmatprep.subr.bf16.mxu0 0
    %571 = vmatpush1.bf16.msra.mxu0 %v439
    %572 = vmatprep.subr.bf16.mxu0 0
    %573 = vmatpush1.bf16.msra.mxu0 %v438
    %574 = vmatprep.subr.bf16.mxu0 0
    %575 = vmatpush2.bf16.msra.mxu0 %v453
    %576 = vmatprep.subr.bf16.mxu0 0
    %577 = vmatpush2.bf16.msra.mxu0 %v452
    %578 = vmatprep.subr.bf16.mxu0 0
    %579 = vmatpush2.bf16.msra.mxu0 %v451
    %580 = vmatprep.subr.bf16.mxu0 0
    %581 = vmatpush2.bf16.msra.mxu0 %v450
    %582 = vmatprep.subr.bf16.mxu0 0
    %583 = vmatpush2.bf16.msra.mxu0 %v449
    %584 = vmatprep.subr.bf16.mxu0 0
    %585 = vmatpush2.bf16.msra.mxu0 %v448
    %586 = vmatprep.subr.bf16.mxu0 0
    %587 = vmatpush2.bf16.msra.mxu0 %v447
    %588 = vmatprep.subr.bf16.mxu0 0
    %589 = vmatpush2.bf16.msra.mxu0 %v446
    %590 = vmatprep.mubr.bf16.mxu0 %v227
    %591 = vmatmul.mubr.bf16.gmra.mxu0 %v226
    %v592 = vpop.f32.mrf.mxu0
    %v593 = vadd.f32 %v553, %v592
    %v594 = vpop.f32.mrf.mxu0
    %v595 = vpop.f32.mrf.mxu0
    %v596 = vpop.f32.mrf.mxu0
    %597 = vdwg.mxu0
    %598 = vmatprep.subr.bf16.mxu0 0
    %599 = vmatpush1.bf16.msra.mxu0 %v461
    %600 = vmatprep.subr.bf16.mxu0 0
    %601 = vmatpush1.bf16.msra.mxu0 %v460
    %602 = vmatprep.subr.bf16.mxu0 0
    %603 = vmatpush1.bf16.msra.mxu0 %v459
    %604 = vmatprep.subr.bf16.mxu0 0
    %605 = vmatpush1.bf16.msra.mxu0 %v458
    %606 = vmatprep.subr.bf16.mxu0 0
    %607 = vmatpush1.bf16.msra.mxu0 %v457
    %608 = vmatprep.subr.bf16.mxu0 0
    %609 = vmatpush1.bf16.msra.mxu0 %v456
    %610 = vmatprep.subr.bf16.mxu0 0
    %611 = vmatpush1.bf16.msra.mxu0 %v455
    %612 = vmatprep.subr.bf16.mxu0 0
    %613 = vmatpush1.bf16.msra.mxu0 %v454
    %614 = vmatprep.subr.bf16.mxu0 0
    %615 = vmatpush2.bf16.msra.mxu0 %v469
    %616 = vmatprep.subr.bf16.mxu0 0
    %617 = vmatpush2.bf16.msra.mxu0 %v468
    %618 = vmatprep.subr.bf16.mxu0 0
    %619 = vmatpush2.bf16.msra.mxu0 %v467
    %620 = vmatprep.subr.bf16.mxu0 0
    %621 = vmatpush2.bf16.msra.mxu0 %v466
    %622 = vmatprep.subr.bf16.mxu0 0
    %623 = vmatpush2.bf16.msra.mxu0 %v465
    %624 = vmatprep.subr.bf16.mxu0 0
    %625 = vmatpush2.bf16.msra.mxu0 %v464
    %626 = vmatprep.subr.bf16.mxu0 0
    %627 = vmatpush2.bf16.msra.mxu0 %v463
    %628 = vmatprep.subr.bf16.mxu0 0
    %629 = vmatpush2.bf16.msra.mxu0 %v462
    %630 = vmatprep.mubr.bf16.mxu0 %v229
    %631 = vmatmul.mubr.bf16.gmra.mxu0 %v228
    %v632 = vpop.f32.mrf.mxu0
    %v633 = vadd.f32 %v593, %v632
    %v634 = vpop.f32.mrf.mxu0
    %v635 = vpop.f32.mrf.mxu0
    %v636 = vpop.f32.mrf.mxu0
    %637 = vdwg.mxu0
    %v638 = vtanh.pop %v633
    %v639 = vld [vmem:[#allocation8] sm:$0xff]
    %v640 = vld [vmem:[#allocation8 + $0x8] sm:$0xff]
    %v641 = vld [vmem:[#allocation8 + $0x10] sm:$0xff]
    %v642 = vld [vmem:[#allocation8 + $0x18] sm:$0xff]
    %v643 = vld [vmem:[#allocation8 + $0x20] sm:$0xff]
    %v644 = vld [vmem:[#allocation8 + $0x28] sm:$0xff]
    %v645 = vld [vmem:[#allocation8 + $0x30] sm:$0xff]
    %v646 = vld [vmem:[#allocation8 + $0x38] sm:$0xff]
    %v647 = vld [vmem:[#allocation8 + $0x40] sm:$0xff]
    %v648 = vld [vmem:[#allocation8 + $0x48] sm:$0xff]
    %v649 = vld [vmem:[#allocation8 + $0x50] sm:$0xff]
    %v650 = vld [vmem:[#allocation8 + $0x58] sm:$0xff]
    %v651 = vld [vmem:[#allocation8 + $0x60] sm:$0xff]
    %v652 = vld [vmem:[#allocation8 + $0x68] sm:$0xff]
    %v653 = vld [vmem:[#allocation8 + $0x70] sm:$0xff]
    %v654 = vld [vmem:[#allocation8 + $0x78] sm:$0xff]
    %v655 = vpack.c.bf16 %v638, %v638
    %s656 = scalar_lea.vmem [#allocation9], 2
    %v657 = vld [vmem:[%s656] ss:$8 sm:$0xf]
    %v659 = vlaneseq
    %v660 = vshrl.u32 %v659, 7
    %v661 = vsub.s32 0, %v660
    %v662 = vrot.slane %v657, %v661
    %v663 = vlaneseq
    %v664 = vshrl.u32 %v663, 7
    %v665 = vsub.s32 1, %v664
    %v666 = vrot.slane %v657, %v665
    %v667 = vlaneseq
    %v668 = vshrl.u32 %v667, 7
    %v669 = vsub.s32 2, %v668
    %v670 = vrot.slane %v657, %v669
    %v671 = vlaneseq
    %v672 = vshrl.u32 %v671, 7
    %v673 = vsub.s32 3, %v672
    %v674 = vrot.slane %v657, %v673
    %v695 = vunpack.c.l.b16 %v639
    %v696 = vunpack.c.h.b16 %v639
    %v697 = vunpack.c.l.b16 %v640
    %v698 = vunpack.c.h.b16 %v640
    %v699 = vunpack.c.l.b16 %v641
    %v700 = vunpack.c.h.b16 %v641
    %v701 = vunpack.c.l.b16 %v642
    %v702 = vunpack.c.h.b16 %v642
    %v703 = vunpack.c.l.b16 %v643
    %v704 = vunpack.c.h.b16 %v643
    %v705 = vunpack.c.l.b16 %v644
    %v706 = vunpack.c.h.b16 %v644
    %v707 = vunpack.c.l.b16 %v645
    %v708 = vunpack.c.h.b16 %v645
    %v709 = vunpack.c.l.b16 %v646
    %v710 = vunpack.c.h.b16 %v646
    %v711 = vunpack.c.l.b16 %v647
    %v712 = vunpack.c.h.b16 %v647
    %v713 = vunpack.c.l.b16 %v648
    %v714 = vunpack.c.h.b16 %v648
    %v715 = vunpack.c.l.b16 %v649
    %v716 = vunpack.c.h.b16 %v649
    %v717 = vunpack.c.l.b16 %v650
    %v718 = vunpack.c.h.b16 %v650
    %v719 = vunpack.c.l.b16 %v651
    %v720 = vunpack.c.h.b16 %v651
    %v721 = vunpack.c.l.b16 %v652
    %v722 = vunpack.c.h.b16 %v652
    %v723 = vunpack.c.l.b16 %v653
    %v724 = vunpack.c.h.b16 %v653
    %v725 = vunpack.c.l.b16 %v654
    %v726 = vunpack.c.h.b16 %v654
    %v727 = vpack.c.b16 %v699, %v695
    %v728 = vpack.c.b16 %v700, %v696
    %v729 = vpack.c.b16 %v701, %v697
    %v730 = vpack.c.b16 %v702, %v698
    %v731 = vpack.c.b16 %v707, %v703
    %v732 = vpack.c.b16 %v708, %v704
    %v733 = vpack.c.b16 %v709, %v705
    %v734 = vpack.c.b16 %v710, %v706
    %v735 = vpack.c.b16 %v715, %v711
    %v736 = vpack.c.b16 %v716, %v712
    %v737 = vpack.c.b16 %v717, %v713
    %v738 = vpack.c.b16 %v718, %v714
    %v739 = vpack.c.b16 %v723, %v719
    %v740 = vpack.c.b16 %v724, %v720
    %v741 = vpack.c.b16 %v725, %v721
    %v742 = vpack.c.b16 %v726, %v722
    %vm759 = vcmask 523264
    %v761 = vsel %vm759, %v655, 0
    %763 = vmatprep.subr.bf16.mxu0 0
    %764 = vmatpush1.bf16.msra.mxu0 0
    %765 = vmatprep.subr.bf16.mxu0 0
    %766 = vmatpush1.bf16.msra.mxu0 0
    %767 = vmatprep.subr.bf16.mxu0 0
    %768 = vmatpush1.bf16.msra.mxu0 0
    %769 = vmatprep.subr.bf16.mxu0 0
    %770 = vmatpush1.bf16.msra.mxu0 0
    %771 = vmatprep.subr.bf16.mxu0 %v740
    %772 = vmatpush1.bf16.msra.mxu0 %v739
    %773 = vmatprep.subr.bf16.mxu0 %v736
    %774 = vmatpush1.bf16.msra.mxu0 %v735
    %775 = vmatprep.subr.bf16.mxu0 %v732
    %776 = vmatpush1.bf16.msra.mxu0 %v731
    %777 = vmatprep.subr.bf16.mxu0 %v728
    %778 = vmatpush1.bf16.msra.mxu0 %v727
    %779 = vmatprep.subr.bf16.mxu0 0
    %780 = vmatpush2.bf16.msra.mxu0 0
    %781 = vmatprep.subr.bf16.mxu0 0
    %782 = vmatpush2.bf16.msra.mxu0 0
    %783 = vmatprep.subr.bf16.mxu0 0
    %784 = vmatpush2.bf16.msra.mxu0 0
    %785 = vmatprep.subr.bf16.mxu0 0
    %786 = vmatpush2.bf16.msra.mxu0 0
    %787 = vmatprep.subr.bf16.mxu0 0
    %788 = vmatpush2.bf16.msra.mxu0 0
    %789 = vmatprep.subr.bf16.mxu0 0
    %790 = vmatpush2.bf16.msra.mxu0 0
    %791 = vmatprep.subr.bf16.mxu0 0
    %792 = vmatpush2.bf16.msra.mxu0 0
    %793 = vmatprep.subr.bf16.mxu0 0
    %794 = vmatpush2.bf16.msra.mxu0 0
    %795 = vmatprep.mubr.bf16.mxu0 0
    %796 = vmatmul.mubr.bf16.gmra.mxu0 %v761
    %v797 = vpop.f32.mrf.mxu0
    %v798 = vadd.f32 %v662, %v797
    %v799 = vpop.f32.mrf.mxu0
    %v800 = vadd.f32 %v666, %v799
    %v801 = vpop.f32.mrf.mxu0
    %v802 = vpop.f32.mrf.mxu0
    %803 = vdwg.mxu0
    %804 = vmatprep.subr.bf16.mxu0 0
    %805 = vmatpush1.bf16.msra.mxu0 0
    %806 = vmatprep.subr.bf16.mxu0 0
    %807 = vmatpush1.bf16.msra.mxu0 0
    %808 = vmatprep.subr.bf16.mxu0 0
    %809 = vmatpush1.bf16.msra.mxu0 0
    %810 = vmatprep.subr.bf16.mxu0 0
    %811 = vmatpush1.bf16.msra.mxu0 0
    %812 = vmatprep.subr.bf16.mxu0 %v742
    %813 = vmatpush1.bf16.msra.mxu0 %v741
    %814 = vmatprep.subr.bf16.mxu0 %v738
    %815 = vmatpush1.bf16.msra.mxu0 %v737
    %816 = vmatprep.subr.bf16.mxu0 %v734
    %817 = vmatpush1.bf16.msra.mxu0 %v733
    %818 = vmatprep.subr.bf16.mxu0 %v730
    %819 = vmatpush1.bf16.msra.mxu0 %v729
    %820 = vmatprep.subr.bf16.mxu0 0
    %821 = vmatpush2.bf16.msra.mxu0 0
    %822 = vmatprep.subr.bf16.mxu0 0
    %823 = vmatpush2.bf16.msra.mxu0 0
    %824 = vmatprep.subr.bf16.mxu0 0
    %825 = vmatpush2.bf16.msra.mxu0 0
    %826 = vmatprep.subr.bf16.mxu0 0
    %827 = vmatpush2.bf16.msra.mxu0 0
    %828 = vmatprep.subr.bf16.mxu0 0
    %829 = vmatpush2.bf16.msra.mxu0 0
    %830 = vmatprep.subr.bf16.mxu0 0
    %831 = vmatpush2.bf16.msra.mxu0 0
    %832 = vmatprep.subr.bf16.mxu0 0
    %833 = vmatpush2.bf16.msra.mxu0 0
    %834 = vmatprep.subr.bf16.mxu0 0
    %835 = vmatpush2.bf16.msra.mxu0 0
    %836 = vmatprep.mubr.bf16.mxu0 0
    %837 = vmatmul.mubr.bf16.gmra.mxu0 %v761
    %v838 = vpop.f32.mrf.mxu0
    %v839 = vadd.f32 %v670, %v838
    %v840 = vpop.f32.mrf.mxu0
    %v841 = vadd.f32 %v674, %v840
    %v842 = vpop.f32.mrf.mxu0
    %v843 = vpop.f32.mrf.mxu0
    %844 = vdwg.mxu0
    %v845 = vmax.f32 %v798, 0.0
    %v846 = vmax.f32 %v800, 0.0
    %v847 = vmax.f32 %v839, 0.0
    %v848 = vmax.f32 %v841, 0.0
    %v849 = vld [vmem:[%s1] sm:$0xff]
    %v850 = vld [vmem:[%s1 + $0x8] sm:$0xff]
    %v851 = vld [vmem:[#allocation4] sm:$0x3]
    %vm852 = vcmp.eq.s32.totalorder %v851, 0
    %v853 = vsel %vm852, 1, 0
    %v854 = vcvt.s32.f32 %v853
    %vm855 = vcmp.eq.s32.totalorder %v851, 1
    %v856 = vsel %vm855, 1, 0
    %v857 = vcvt.s32.f32 %v856
    %v858 = vlaneseq
    %v859 = vshrl.u32 %v858, 7
    %v860 = vsub.s32 0, %v859
    %v861 = vrot.slane %v854, %v860
    %863 = vbcast.lane.b32.xlu0 %v861, 256
    %v864 = vpop.permute.xlu0 %863
    %v865 = vlaneseq
    %v866 = vshrl.u32 %v865, 7
    %v867 = vsub.s32 1, %v866
    %v868 = vrot.slane %v854, %v867
    %870 = vbcast.lane.b32.xlu0 %v868, 256
    %v871 = vpop.permute.xlu0 %870
    %v872 = vmul.f32 %v849, %v864
    %v873 = vmul.f32 %v850, %v871
    %v874 = vsel %vm759, %v872, 0.0
    %v875 = vrot.slane %v874, 4
    %v876 = vadd.f32 %v874, %v875
    %v877 = vrot.slane %v876, 2
    %v878 = vadd.f32 %v876, %v877
    %v879 = vrot.slane %v878, 1
    %v880 = vadd.f32 %v878, %v879
    %v881 = vsel %vm759, %v873, 0.0
    %v882 = vrot.slane %v881, 4
    %v883 = vadd.f32 %v881, %v882
    %v884 = vrot.slane %v883, 2
    %v885 = vadd.f32 %v883, %v884
    %v886 = vrot.slane %v885, 1
    %v887 = vadd.f32 %v885, %v886
    %vm888 = vcmask 58368
    %v889 = vsel %vm888, %v854, 0.0
    %890 = vadd.xlane.f32.xlu0 %v889
    %v891 = vpop.xlane.xlu0 %890
    %v892 = vmax.f32 %v891, 1.0
    %v894 = vrot.slane %v892, 1
    %v897 = vrcp.pop %v892
    %v898 = vmul.f32 %v880, %v897
    %v899 = vrcp.pop %v894
    %v900 = vmul.f32 %v887, %v899
    %v901 = vlaneseq
    %v902 = vshrl.u32 %v901, 7
    %v903 = vsub.s32 0, %v902
    %v904 = vrot.slane %v857, %v903
    %906 = vbcast.lane.b32.xlu0 %v904, 256
    %v907 = vpop.permute.xlu0 %906
    %v908 = vlaneseq
    %v909 = vshrl.u32 %v908, 7
    %v910 = vsub.s32 1, %v909
    %v911 = vrot.slane %v857, %v910
    %913 = vbcast.lane.b32.xlu0 %v911, 256
    %v914 = vpop.permute.xlu0 %913
    %v915 = vmul.f32 %v849, %v907
    %v916 = vmul.f32 %v850, %v914
    %v917 = vsel %vm759, %v915, 0.0
    %v918 = vrot.slane %v917, 4
    %v919 = vadd.f32 %v917, %v918
    %v920 = vrot.slane %v919, 2
    %v921 = vadd.f32 %v919, %v920
    %v922 = vrot.slane %v921, 1
    %v923 = vadd.f32 %v921, %v922
    %v924 = vsel %vm759, %v916, 0.0
    %v925 = vrot.slane %v924, 4
    %v926 = vadd.f32 %v924, %v925
    %v927 = vrot.slane %v926, 2
    %v928 = vadd.f32 %v926, %v927
    %v929 = vrot.slane %v928, 1
    %v930 = vadd.f32 %v928, %v929
    %v931 = vsel %vm888, %v857, 0.0
    %932 = vadd.xlane.f32.xlu0 %v931
    %v933 = vpop.xlane.xlu0 %932
    %v934 = vmax.f32 %v933, 1.0
    %v936 = vrot.slane %v934, 1
    %v939 = vrcp.pop %v934
    %v940 = vmul.f32 %v923, %v939
    %v941 = vrcp.pop %v936
    %v942 = vmul.f32 %v930, %v941
    %v945 = vrot.slane %v942, 7
    %vm946 = vcmask 1041409
    %v947 = vsel %vm946, %v945, %v940
    %v951 = vrot.slane %v900, 7
    %v952 = vsel %vm946, %v951, %v898
    %953 = vrot.lane.b32.xlu0 %v952, 64
    %v954 = vpop.permute.xlu0 %953
    %v956 = vsel %vm759, %v947, %v954
    %v957 = vld [vmem:[#allocation6] sm:$0xff]
    %v958 = vld [vmem:[#allocation6 + $0x8] sm:$0xff]
    %v959 = vld [vmem:[#allocation6 + $0x10] sm:$0xff]
    %v960 = vld [vmem:[#allocation6 + $0x18] sm:$0xff]
    %v961 = vld [vmem:[#allocation6 + $0x20] sm:$0xff]
    %v962 = vld [vmem:[#allocation6 + $0x28] sm:$0xff]
    %v963 = vld [vmem:[#allocation6 + $0x30] sm:$0xff]
    %v964 = vld [vmem:[#allocation6 + $0x38] sm:$0xff]
    %v965 = vld [vmem:[#allocation6 + $0x40] sm:$0xff]
    %v966 = vld [vmem:[#allocation6 + $0x48] sm:$0xff]
    %v967 = vld [vmem:[#allocation6 + $0x50] sm:$0xff]
    %v968 = vld [vmem:[#allocation6 + $0x58] sm:$0xff]
    %v969 = vld [vmem:[#allocation6 + $0x60] sm:$0xff]
    %v970 = vld [vmem:[#allocation6 + $0x68] sm:$0xff]
    %v971 = vld [vmem:[#allocation6 + $0x70] sm:$0xff]
    %v972 = vld [vmem:[#allocation6 + $0x78] sm:$0xff]
    %v973 = vld [vmem:[#allocation6 + $0x80] sm:$0xff]
    %v974 = vld [vmem:[#allocation6 + $0x88] sm:$0xff]
    %v975 = vld [vmem:[#allocation6 + $0x90] sm:$0xff]
    %v976 = vld [vmem:[#allocation6 + $0x98] sm:$0xff]
    %v977 = vld [vmem:[#allocation6 + $0xa0] sm:$0xff]
    %v978 = vld [vmem:[#allocation6 + $0xa8] sm:$0xff]
    %v979 = vld [vmem:[#allocation6 + $0xb0] sm:$0xff]
    %v980 = vld [vmem:[#allocation6 + $0xb8] sm:$0xff]
    %v981 = vld [vmem:[#allocation6 + $0xc0] sm:$0xff]
    %v982 = vld [vmem:[#allocation6 + $0xc8] sm:$0xff]
    %v983 = vld [vmem:[#allocation6 + $0xd0] sm:$0xff]
    %v984 = vld [vmem:[#allocation6 + $0xd8] sm:$0xff]
    %v985 = vld [vmem:[#allocation6 + $0xe0] sm:$0xff]
    %v986 = vld [vmem:[#allocation6 + $0xe8] sm:$0xff]
    %v987 = vld [vmem:[#allocation6 + $0xf0] sm:$0xff]
    %v988 = vld [vmem:[#allocation6 + $0xf8] sm:$0xff]
    %v989 = vld [vmem:[#allocation6 + $0x100] sm:$0xff]
    %v990 = vld [vmem:[#allocation6 + $0x108] sm:$0xff]
    %v991 = vld [vmem:[#allocation6 + $0x110] sm:$0xff]
    %v992 = vld [vmem:[#allocation6 + $0x118] sm:$0xff]
    %v993 = vld [vmem:[#allocation6 + $0x120] sm:$0xff]
    %v994 = vld [vmem:[#allocation6 + $0x128] sm:$0xff]
    %v995 = vld [vmem:[#allocation6 + $0x130] sm:$0xff]
    %v996 = vld [vmem:[#allocation6 + $0x138] sm:$0xff]
    %v997 = vld [vmem:[#allocation6 + $0x140] sm:$0xff]
    %v998 = vld [vmem:[#allocation6 + $0x148] sm:$0xff]
    %v999 = vld [vmem:[#allocation6 + $0x150] sm:$0xff]
    %v1000 = vld [vmem:[#allocation6 + $0x158] sm:$0xff]
    %v1001 = vld [vmem:[#allocation6 + $0x160] sm:$0xff]
    %v1002 = vld [vmem:[#allocation6 + $0x168] sm:$0xff]
    %v1003 = vld [vmem:[#allocation6 + $0x170] sm:$0xff]
    %v1004 = vld [vmem:[#allocation6 + $0x178] sm:$0xff]
    %v1005 = vpack.c.bf16 %v956, %v956
    %v1006 = vld [vmem:[#allocation9] ss:$8 sm:$0xf]
    %v1007 = vld [vmem:[#allocation9] ss:$8 sm:$0x30]
    %v1008 = vor.u32 %v1006, %v1007
    %v1010 = vlaneseq
    %v1011 = vshrl.u32 %v1010, 7
    %v1012 = vsub.s32 0, %v1011
    %v1013 = vrot.slane %v1008, %v1012
    %v1014 = vlaneseq
    %v1015 = vshrl.u32 %v1014, 7
    %v1016 = vsub.s32 1, %v1015
    %v1017 = vrot.slane %v1008, %v1016
    %v1018 = vlaneseq
    %v1019 = vshrl.u32 %v1018, 7
    %v1020 = vsub.s32 2, %v1019
    %v1021 = vrot.slane %v1008, %v1020
    %v1022 = vlaneseq
    %v1023 = vshrl.u32 %v1022, 7
    %v1024 = vsub.s32 3, %v1023
    %v1025 = vrot.slane %v1008, %v1024
    %v1026 = vlaneseq
    %v1027 = vshrl.u32 %v1026, 7
    %v1028 = vsub.s32 4, %v1027
    %v1029 = vrot.slane %v1008, %v1028
    %v1030 = vlaneseq
    %v1031 = vshrl.u32 %v1030, 7
    %v1032 = vsub.s32 5, %v1031
    %v1033 = vrot.slane %v1008, %v1032
    %v1088 = vunpack.c.l.b16 %v957
    %v1089 = vunpack.c.h.b16 %v957
    %v1090 = vunpack.c.l.b16 %v958
    %v1091 = vunpack.c.h.b16 %v958
    %v1092 = vunpack.c.l.b16 %v959
    %v1093 = vunpack.c.h.b16 %v959
    %v1094 = vunpack.c.l.b16 %v960
    %v1095 = vunpack.c.h.b16 %v960
    %v1096 = vunpack.c.l.b16 %v961
    %v1097 = vunpack.c.h.b16 %v961
    %v1098 = vunpack.c.l.b16 %v962
    %v1099 = vunpack.c.h.b16 %v962
    %v1100 = vunpack.c.l.b16 %v963
    %v1101 = vunpack.c.h.b16 %v963
    %v1102 = vunpack.c.l.b16 %v964
    %v1103 = vunpack.c.h.b16 %v964
    %v1104 = vunpack.c.l.b16 %v965
    %v1105 = vunpack.c.h.b16 %v965
    %v1106 = vunpack.c.l.b16 %v966
    %v1107 = vunpack.c.h.b16 %v966
    %v1108 = vunpack.c.l.b16 %v967
    %v1109 = vunpack.c.h.b16 %v967
    %v1110 = vunpack.c.l.b16 %v968
    %v1111 = vunpack.c.h.b16 %v968
    %v1112 = vunpack.c.l.b16 %v969
    %v1113 = vunpack.c.h.b16 %v969
    %v1114 = vunpack.c.l.b16 %v970
    %v1115 = vunpack.c.h.b16 %v970
    %v1116 = vunpack.c.l.b16 %v971
    %v1117 = vunpack.c.h.b16 %v971
    %v1118 = vunpack.c.l.b16 %v972
    %v1119 = vunpack.c.h.b16 %v972
    %v1120 = vunpack.c.l.b16 %v973
    %v1121 = vunpack.c.h.b16 %v973
    %v1122 = vunpack.c.l.b16 %v974
    %v1123 = vunpack.c.h.b16 %v974
    %v1124 = vunpack.c.l.b16 %v975
    %v1125 = vunpack.c.h.b16 %v975
    %v1126 = vunpack.c.l.b16 %v976
    %v1127 = vunpack.c.h.b16 %v976
    %v1128 = vunpack.c.l.b16 %v977
    %v1129 = vunpack.c.h.b16 %v977
    %v1130 = vunpack.c.l.b16 %v978
    %v1131 = vunpack.c.h.b16 %v978
    %v1132 = vunpack.c.l.b16 %v979
    %v1133 = vunpack.c.h.b16 %v979
    %v1134 = vunpack.c.l.b16 %v980
    %v1135 = vunpack.c.h.b16 %v980
    %v1136 = vunpack.c.l.b16 %v981
    %v1137 = vunpack.c.h.b16 %v981
    %v1138 = vunpack.c.l.b16 %v982
    %v1139 = vunpack.c.h.b16 %v982
    %v1140 = vunpack.c.l.b16 %v983
    %v1141 = vunpack.c.h.b16 %v983
    %v1142 = vunpack.c.l.b16 %v984
    %v1143 = vunpack.c.h.b16 %v984
    %v1144 = vunpack.c.l.b16 %v985
    %v1145 = vunpack.c.h.b16 %v985
    %v1146 = vunpack.c.l.b16 %v986
    %v1147 = vunpack.c.h.b16 %v986
    %v1148 = vunpack.c.l.b16 %v987
    %v1149 = vunpack.c.h.b16 %v987
    %v1150 = vunpack.c.l.b16 %v988
    %v1151 = vunpack.c.h.b16 %v988
    %v1152 = vunpack.c.l.b16 %v989
    %v1153 = vunpack.c.h.b16 %v989
    %v1154 = vunpack.c.l.b16 %v990
    %v1155 = vunpack.c.h.b16 %v990
    %v1156 = vunpack.c.l.b16 %v991
    %v1157 = vunpack.c.h.b16 %v991
    %v1158 = vunpack.c.l.b16 %v992
    %v1159 = vunpack.c.h.b16 %v992
    %v1160 = vunpack.c.l.b16 %v993
    %v1161 = vunpack.c.h.b16 %v993
    %v1162 = vunpack.c.l.b16 %v994
    %v1163 = vunpack.c.h.b16 %v994
    %v1164 = vunpack.c.l.b16 %v995
    %v1165 = vunpack.c.h.b16 %v995
    %v1166 = vunpack.c.l.b16 %v996
    %v1167 = vunpack.c.h.b16 %v996
    %v1168 = vunpack.c.l.b16 %v997
    %v1169 = vunpack.c.h.b16 %v997
    %v1170 = vunpack.c.l.b16 %v998
    %v1171 = vunpack.c.h.b16 %v998
    %v1172 = vunpack.c.l.b16 %v999
    %v1173 = vunpack.c.h.b16 %v999
    %v1174 = vunpack.c.l.b16 %v1000
    %v1175 = vunpack.c.h.b16 %v1000
    %v1176 = vunpack.c.l.b16 %v1001
    %v1177 = vunpack.c.h.b16 %v1001
    %v1178 = vunpack.c.l.b16 %v1002
    %v1179 = vunpack.c.h.b16 %v1002
    %v1180 = vunpack.c.l.b16 %v1003
    %v1181 = vunpack.c.h.b16 %v1003
    %v1182 = vunpack.c.l.b16 %v1004
    %v1183 = vunpack.c.h.b16 %v1004
    %v1184 = vpack.c.b16 %v1094, %v1088
    %v1185 = vpack.c.b16 %v1095, %v1089
    %v1186 = vpack.c.b16 %v1096, %v1090
    %v1187 = vpack.c.b16 %v1097, %v1091
    %v1188 = vpack.c.b16 %v1098, %v1092
    %v1189 = vpack.c.b16 %v1099, %v1093
    %v1190 = vpack.c.b16 %v1106, %v1100
    %v1191 = vpack.c.b16 %v1107, %v1101
    %v1192 = vpack.c.b16 %v1108, %v1102
    %v1193 = vpack.c.b16 %v1109, %v1103
    %v1194 = vpack.c.b16 %v1110, %v1104
    %v1195 = vpack.c.b16 %v1111, %v1105
    %v1196 = vpack.c.b16 %v1118, %v1112
    %v1197 = vpack.c.b16 %v1119, %v1113
    %v1198 = vpack.c.b16 %v1120, %v1114
    %v1199 = vpack.c.b16 %v1121, %v1115
    %v1200 = vpack.c.b16 %v1122, %v1116
    %v1201 = vpack.c.b16 %v1123, %v1117
    %v1202 = vpack.c.b16 %v1130, %v1124
    %v1203 = vpack.c.b16 %v1131, %v1125
    %v1204 = vpack.c.b16 %v1132, %v1126
    %v1205 = vpack.c.b16 %v1133, %v1127
    %v1206 = vpack.c.b16 %v1134, %v1128
    %v1207 = vpack.c.b16 %v1135, %v1129
    %v1208 = vpack.c.b16 %v1142, %v1136
    %v1209 = vpack.c.b16 %v1143, %v1137
    %v1210 = vpack.c.b16 %v1144, %v1138
    %v1211 = vpack.c.b16 %v1145, %v1139
    %v1212 = vpack.c.b16 %v1146, %v1140
    %v1213 = vpack.c.b16 %v1147, %v1141
    %v1214 = vpack.c.b16 %v1154, %v1148
    %v1215 = vpack.c.b16 %v1155, %v1149
    %v1216 = vpack.c.b16 %v1156, %v1150
    %v1217 = vpack.c.b16 %v1157, %v1151
    %v1218 = vpack.c.b16 %v1158, %v1152
    %v1219 = vpack.c.b16 %v1159, %v1153
    %v1220 = vpack.c.b16 %v1166, %v1160
    %v1221 = vpack.c.b16 %v1167, %v1161
    %v1222 = vpack.c.b16 %v1168, %v1162
    %v1223 = vpack.c.b16 %v1169, %v1163
    %v1224 = vpack.c.b16 %v1170, %v1164
    %v1225 = vpack.c.b16 %v1171, %v1165
    %v1226 = vpack.c.b16 %v1178, %v1172
    %v1227 = vpack.c.b16 %v1179, %v1173
    %v1228 = vpack.c.b16 %v1180, %v1174
    %v1229 = vpack.c.b16 %v1181, %v1175
    %v1230 = vpack.c.b16 %v1182, %v1176
    %v1231 = vpack.c.b16 %v1183, %v1177
    %1280 = vmatprep.subr.bf16.mxu0 %v1227
    %1281 = vmatpush1.bf16.msra.mxu0 %v1226
    %1282 = vmatprep.subr.bf16.mxu0 %v1221
    %1283 = vmatpush1.bf16.msra.mxu0 %v1220
    %1284 = vmatprep.subr.bf16.mxu0 %v1215
    %1285 = vmatpush1.bf16.msra.mxu0 %v1214
    %1286 = vmatprep.subr.bf16.mxu0 %v1209
    %1287 = vmatpush1.bf16.msra.mxu0 %v1208
    %1288 = vmatprep.subr.bf16.mxu0 %v1203
    %1289 = vmatpush1.bf16.msra.mxu0 %v1202
    %1290 = vmatprep.subr.bf16.mxu0 %v1197
    %1291 = vmatpush1.bf16.msra.mxu0 %v1196
    %1292 = vmatprep.subr.bf16.mxu0 %v1191
    %1293 = vmatpush1.bf16.msra.mxu0 %v1190
    %1294 = vmatprep.subr.bf16.mxu0 %v1185
    %1295 = vmatpush1.bf16.msra.mxu0 %v1184
    %1296 = vmatprep.subr.bf16.mxu0 0
    %1297 = vmatpush2.bf16.msra.mxu0 0
    %1298 = vmatprep.subr.bf16.mxu0 0
    %1299 = vmatpush2.bf16.msra.mxu0 0
    %1300 = vmatprep.subr.bf16.mxu0 0
    %1301 = vmatpush2.bf16.msra.mxu0 0
    %1302 = vmatprep.subr.bf16.mxu0 0
    %1303 = vmatpush2.bf16.msra.mxu0 0
    %1304 = vmatprep.subr.bf16.mxu0 0
    %1305 = vmatpush2.bf16.msra.mxu0 0
    %1306 = vmatprep.subr.bf16.mxu0 0
    %1307 = vmatpush2.bf16.msra.mxu0 0
    %1308 = vmatprep.subr.bf16.mxu0 0
    %1309 = vmatpush2.bf16.msra.mxu0 0
    %1310 = vmatprep.subr.bf16.mxu0 0
    %1311 = vmatpush2.bf16.msra.mxu0 0
    %1312 = vmatprep.mubr.bf16.mxu0 0
    %1313 = vmatmul.mubr.bf16.gmra.mxu0 %v1005
    %v1314 = vpop.f32.mrf.mxu0
    %v1315 = vadd.f32 %v1013, %v1314
    %v1316 = vpop.f32.mrf.mxu0
    %v1317 = vadd.f32 %v1017, %v1316
    %v1318 = vpop.f32.mrf.mxu0
    %v1319 = vpop.f32.mrf.mxu0
    %1320 = vdwg.mxu0
    %1321 = vmatprep.subr.bf16.mxu0 %v1229
    %1322 = vmatpush1.bf16.msra.mxu0 %v1228
    %1323 = vmatprep.subr.bf16.mxu0 %v1223
    %1324 = vmatpush1.bf16.msra.mxu0 %v1222
    %1325 = vmatprep.subr.bf16.mxu0 %v1217
    %1326 = vmatpush1.bf16.msra.mxu0 %v1216
    %1327 = vmatprep.subr.bf16.mxu0 %v1211
    %1328 = vmatpush1.bf16.msra.mxu0 %v1210
    %1329 = vmatprep.subr.bf16.mxu0 %v1205
    %1330 = vmatpush1.bf16.msra.mxu0 %v1204
    %1331 = vmatprep.subr.bf16.mxu0 %v1199
    %1332 = vmatpush1.bf16.msra.mxu0 %v1198
    %1333 = vmatprep.subr.bf16.mxu0 %v1193
    %1334 = vmatpush1.bf16.msra.mxu0 %v1192
    %1335 = vmatprep.subr.bf16.mxu0 %v1187
    %1336 = vmatpush1.bf16.msra.mxu0 %v1186
    %1337 = vmatprep.subr.bf16.mxu0 0
    %1338 = vmatpush2.bf16.msra.mxu0 0
    %1339 = vmatprep.subr.bf16.mxu0 0
    %1340 = vmatpush2.bf16.msra.mxu0 0
    %1341 = vmatprep.subr.bf16.mxu0 0
    %1342 = vmatpush2.bf16.msra.mxu0 0
    %1343 = vmatprep.subr.bf16.mxu0 0
    %1344 = vmatpush2.bf16.msra.mxu0 0
    %1345 = vmatprep.subr.bf16.mxu0 0
    %1346 = vmatpush2.bf16.msra.mxu0 0
    %1347 = vmatprep.subr.bf16.mxu0 0
    %1348 = vmatpush2.bf16.msra.mxu0 0
    %1349 = vmatprep.subr.bf16.mxu0 0
    %1350 = vmatpush2.bf16.msra.mxu0 0
    %1351 = vmatprep.subr.bf16.mxu0 0
    %1352 = vmatpush2.bf16.msra.mxu0 0
    %1353 = vmatprep.mubr.bf16.mxu0 0
    %1354 = vmatmul.mubr.bf16.gmra.mxu0 %v1005
    %v1355 = vpop.f32.mrf.mxu0
    %v1356 = vadd.f32 %v1021, %v1355
    %v1357 = vpop.f32.mrf.mxu0
    %v1358 = vadd.f32 %v1025, %v1357
    %v1359 = vpop.f32.mrf.mxu0
    %v1360 = vpop.f32.mrf.mxu0
    %1361 = vdwg.mxu0
    %1362 = vmatprep.subr.bf16.mxu0 %v1231
    %1363 = vmatpush1.bf16.msra.mxu0 %v1230
    %1364 = vmatprep.subr.bf16.mxu0 %v1225
    %1365 = vmatpush1.bf16.msra.mxu0 %v1224
    %1366 = vmatprep.subr.bf16.mxu0 %v1219
    %1367 = vmatpush1.bf16.msra.mxu0 %v1218
    %1368 = vmatprep.subr.bf16.mxu0 %v1213
    %1369 = vmatpush1.bf16.msra.mxu0 %v1212
    %1370 = vmatprep.subr.bf16.mxu0 %v1207
    %1371 = vmatpush1.bf16.msra.mxu0 %v1206
    %1372 = vmatprep.subr.bf16.mxu0 %v1201
    %1373 = vmatpush1.bf16.msra.mxu0 %v1200
    %1374 = vmatprep.subr.bf16.mxu0 %v1195
    %1375 = vmatpush1.bf16.msra.mxu0 %v1194
    %1376 = vmatprep.subr.bf16.mxu0 %v1189
    %1377 = vmatpush1.bf16.msra.mxu0 %v1188
    %1378 = vmatprep.subr.bf16.mxu0 0
    %1379 = vmatpush2.bf16.msra.mxu0 0
    %1380 = vmatprep.subr.bf16.mxu0 0
    %1381 = vmatpush2.bf16.msra.mxu0 0
    %1382 = vmatprep.subr.bf16.mxu0 0
    %1383 = vmatpush2.bf16.msra.mxu0 0
    %1384 = vmatprep.subr.bf16.mxu0 0
    %1385 = vmatpush2.bf16.msra.mxu0 0
    %1386 = vmatprep.subr.bf16.mxu0 0
    %1387 = vmatpush2.bf16.msra.mxu0 0
    %1388 = vmatprep.subr.bf16.mxu0 0
    %1389 = vmatpush2.bf16.msra.mxu0 0
    %1390 = vmatprep.subr.bf16.mxu0 0
    %1391 = vmatpush2.bf16.msra.mxu0 0
    %1392 = vmatprep.subr.bf16.mxu0 0
    %1393 = vmatpush2.bf16.msra.mxu0 0
    %1394 = vmatprep.mubr.bf16.mxu0 0
    %1395 = vmatmul.mubr.bf16.gmra.mxu0 %v1005
    %v1396 = vpop.f32.mrf.mxu0
    %v1397 = vadd.f32 %v1029, %v1396
    %v1398 = vpop.f32.mrf.mxu0
    %v1399 = vadd.f32 %v1033, %v1398
    %v1400 = vpop.f32.mrf.mxu0
    %v1401 = vpop.f32.mrf.mxu0
    %1402 = vdwg.mxu0
    %v1403 = vmax.f32 %v1315, 0.0
    %v1404 = vmax.f32 %v1317, 0.0
    %v1405 = vmax.f32 %v1356, 0.0
    %v1406 = vmax.f32 %v1358, 0.0
    %v1407 = vmax.f32 %v1397, 0.0
    %v1408 = vmax.f32 %v1399, 0.0
    %v1409 = vld [vmem:[#allocation8 + $0x80] sm:$0xff]
    %v1410 = vld [vmem:[#allocation8 + $0x88] sm:$0xff]
    %v1411 = vld [vmem:[#allocation8 + $0x90] sm:$0xff]
    %v1412 = vld [vmem:[#allocation8 + $0x98] sm:$0xff]
    %v1413 = vld [vmem:[#allocation8 + $0xa0] sm:$0xff]
    %v1414 = vld [vmem:[#allocation8 + $0xa8] sm:$0xff]
    %v1415 = vld [vmem:[#allocation8 + $0xb0] sm:$0xff]
    %v1416 = vld [vmem:[#allocation8 + $0xb8] sm:$0xff]
    %v1417 = vld [vmem:[#allocation8 + $0xc0] sm:$0xff]
    %v1418 = vld [vmem:[#allocation8 + $0xc8] sm:$0xff]
    %v1419 = vld [vmem:[#allocation8 + $0xd0] sm:$0xff]
    %v1420 = vld [vmem:[#allocation8 + $0xd8] sm:$0xff]
    %v1421 = vld [vmem:[#allocation8 + $0xe0] sm:$0xff]
    %v1422 = vld [vmem:[#allocation8 + $0xe8] sm:$0xff]
    %v1423 = vld [vmem:[#allocation8 + $0xf0] sm:$0xff]
    %v1424 = vld [vmem:[#allocation8 + $0xf8] sm:$0xff]
    %v1425 = vld [vmem:[#allocation8 + $0x100] sm:$0xff]
    %v1426 = vld [vmem:[#allocation8 + $0x108] sm:$0xff]
    %v1427 = vld [vmem:[#allocation8 + $0x110] sm:$0xff]
    %v1428 = vld [vmem:[#allocation8 + $0x118] sm:$0xff]
    %v1429 = vld [vmem:[#allocation8 + $0x120] sm:$0xff]
    %v1430 = vld [vmem:[#allocation8 + $0x128] sm:$0xff]
    %v1431 = vld [vmem:[#allocation8 + $0x130] sm:$0xff]
    %v1432 = vld [vmem:[#allocation8 + $0x138] sm:$0xff]
    %v1433 = vld [vmem:[#allocation8 + $0x140] sm:$0xff]
    %v1434 = vld [vmem:[#allocation8 + $0x148] sm:$0xff]
    %v1435 = vld [vmem:[#allocation8 + $0x150] sm:$0xff]
    %v1436 = vld [vmem:[#allocation8 + $0x158] sm:$0xff]
    %v1437 = vld [vmem:[#allocation8 + $0x160] sm:$0xff]
    %v1438 = vld [vmem:[#allocation8 + $0x168] sm:$0xff]
    %v1439 = vld [vmem:[#allocation8 + $0x170] sm:$0xff]
    %v1440 = vld [vmem:[#allocation8 + $0x178] sm:$0xff]
    %v1441 = vld [vmem:[#allocation8 + $0x180] sm:$0xff]
    %v1442 = vld [vmem:[#allocation8 + $0x188] sm:$0xff]
    %v1443 = vld [vmem:[#allocation8 + $0x190] sm:$0xff]
    %v1444 = vld [vmem:[#allocation8 + $0x198] sm:$0xff]
    %v1445 = vld [vmem:[#allocation8 + $0x1a0] sm:$0xff]
    %v1446 = vld [vmem:[#allocation8 + $0x1a8] sm:$0xff]
    %v1447 = vld [vmem:[#allocation8 + $0x1b0] sm:$0xff]
    %v1448 = vld [vmem:[#allocation8 + $0x1b8] sm:$0xff]
    %v1449 = vld [vmem:[#allocation8 + $0x1c0] sm:$0xff]
    %v1450 = vld [vmem:[#allocation8 + $0x1c8] sm:$0xff]
    %v1451 = vld [vmem:[#allocation8 + $0x1d0] sm:$0xff]
    %v1452 = vld [vmem:[#allocation8 + $0x1d8] sm:$0xff]
    %v1453 = vld [vmem:[#allocation8 + $0x1e0] sm:$0xff]
    %v1454 = vld [vmem:[#allocation8 + $0x1e8] sm:$0xff]
    %v1455 = vld [vmem:[#allocation8 + $0x1f0] sm:$0xff]
    %v1456 = vld [vmem:[#allocation8 + $0x1f8] sm:$0xff]
    %v1457 = vld [vmem:[#allocation8 + $0x200] sm:$0xff]
    %v1458 = vld [vmem:[#allocation8 + $0x208] sm:$0xff]
    %v1459 = vld [vmem:[#allocation8 + $0x210] sm:$0xff]
    %v1460 = vld [vmem:[#allocation8 + $0x218] sm:$0xff]
    %v1461 = vld [vmem:[#allocation8 + $0x220] sm:$0xff]
    %v1462 = vld [vmem:[#allocation8 + $0x228] sm:$0xff]
    %v1463 = vld [vmem:[#allocation8 + $0x230] sm:$0xff]
    %v1464 = vld [vmem:[#allocation8 + $0x238] sm:$0xff]
    %v1465 = vld [vmem:[#allocation8 + $0x240] sm:$0xff]
    %v1466 = vld [vmem:[#allocation8 + $0x248] sm:$0xff]
    %v1467 = vld [vmem:[#allocation8 + $0x250] sm:$0xff]
    %v1468 = vld [vmem:[#allocation8 + $0x258] sm:$0xff]
    %v1469 = vld [vmem:[#allocation8 + $0x260] sm:$0xff]
    %v1470 = vld [vmem:[#allocation8 + $0x268] sm:$0xff]
    %v1471 = vld [vmem:[#allocation8 + $0x270] sm:$0xff]
    %v1472 = vld [vmem:[#allocation8 + $0x278] sm:$0xff]
    %v1473 = vld [vmem:[#allocation8 + $0x280] sm:$0xff]
    %v1474 = vld [vmem:[#allocation8 + $0x288] sm:$0xff]
    %v1475 = vld [vmem:[#allocation8 + $0x290] sm:$0xff]
    %v1476 = vld [vmem:[#allocation8 + $0x298] sm:$0xff]
    %v1477 = vld [vmem:[#allocation8 + $0x2a0] sm:$0xff]
    %v1478 = vld [vmem:[#allocation8 + $0x2a8] sm:$0xff]
    %v1479 = vld [vmem:[#allocation8 + $0x2b0] sm:$0xff]
    %v1480 = vld [vmem:[#allocation8 + $0x2b8] sm:$0xff]
    %v1481 = vld [vmem:[#allocation8 + $0x2c0] sm:$0xff]
    %v1482 = vld [vmem:[#allocation8 + $0x2c8] sm:$0xff]
    %v1483 = vld [vmem:[#allocation8 + $0x2d0] sm:$0xff]
    %v1484 = vld [vmem:[#allocation8 + $0x2d8] sm:$0xff]
    %v1485 = vld [vmem:[#allocation8 + $0x2e0] sm:$0xff]
    %v1486 = vld [vmem:[#allocation8 + $0x2e8] sm:$0xff]
    %v1487 = vld [vmem:[#allocation8 + $0x2f0] sm:$0xff]
    %v1488 = vld [vmem:[#allocation8 + $0x2f8] sm:$0xff]
    %v1489 = vld [vmem:[#allocation8 + $0x300] sm:$0xff]
    %v1490 = vld [vmem:[#allocation8 + $0x308] sm:$0xff]
    %v1491 = vld [vmem:[#allocation8 + $0x310] sm:$0xff]
    %v1492 = vld [vmem:[#allocation8 + $0x318] sm:$0xff]
    %v1493 = vld [vmem:[#allocation8 + $0x320] sm:$0xff]
    %v1494 = vld [vmem:[#allocation8 + $0x328] sm:$0xff]
    %v1495 = vld [vmem:[#allocation8 + $0x330] sm:$0xff]
    %v1496 = vld [vmem:[#allocation8 + $0x338] sm:$0xff]
    %v1497 = vld [vmem:[#allocation8 + $0x340] sm:$0xff]
    %v1498 = vld [vmem:[#allocation8 + $0x348] sm:$0xff]
    %v1499 = vld [vmem:[#allocation8 + $0x350] sm:$0xff]
    %v1500 = vld [vmem:[#allocation8 + $0x358] sm:$0xff]
    %v1501 = vld [vmem:[#allocation8 + $0x360] sm:$0xff]
    %v1502 = vld [vmem:[#allocation8 + $0x368] sm:$0xff]
    %v1503 = vld [vmem:[#allocation8 + $0x370] sm:$0xff]
    %v1504 = vld [vmem:[#allocation8 + $0x378] sm:$0xff]
    %v1505 = vld [vmem:[#allocation8 + $0x380] sm:$0xff]
    %v1506 = vld [vmem:[#allocation8 + $0x388] sm:$0xff]
    %v1507 = vld [vmem:[#allocation8 + $0x390] sm:$0xff]
    %v1508 = vld [vmem:[#allocation8 + $0x398] sm:$0xff]
    %v1509 = vld [vmem:[#allocation8 + $0x3a0] sm:$0xff]
    %v1510 = vld [vmem:[#allocation8 + $0x3a8] sm:$0xff]
    %v1511 = vld [vmem:[#allocation8 + $0x3b0] sm:$0xff]
    %v1512 = vld [vmem:[#allocation8 + $0x3b8] sm:$0xff]
    %v1513 = vld [vmem:[#allocation8 + $0x3c0] sm:$0xff]
    %v1514 = vld [vmem:[#allocation8 + $0x3c8] sm:$0xff]
    %v1515 = vld [vmem:[#allocation8 + $0x3d0] sm:$0xff]
    %v1516 = vld [vmem:[#allocation8 + $0x3d8] sm:$0xff]
    %v1517 = vld [vmem:[#allocation8 + $0x3e0] sm:$0xff]
    %v1518 = vld [vmem:[#allocation8 + $0x3e8] sm:$0xff]
    %v1519 = vld [vmem:[#allocation8 + $0x3f0] sm:$0xff]
    %v1520 = vld [vmem:[#allocation8 + $0x3f8] sm:$0xff]
    %v1521 = vld [vmem:[#allocation8 + $0x400] sm:$0xff]
    %v1522 = vld [vmem:[#allocation8 + $0x408] sm:$0xff]
    %v1523 = vld [vmem:[#allocation8 + $0x410] sm:$0xff]
    %v1524 = vld [vmem:[#allocation8 + $0x418] sm:$0xff]
    %v1525 = vld [vmem:[#allocation8 + $0x420] sm:$0xff]
    %v1526 = vld [vmem:[#allocation8 + $0x428] sm:$0xff]
    %v1527 = vld [vmem:[#allocation8 + $0x430] sm:$0xff]
    %v1528 = vld [vmem:[#allocation8 + $0x438] sm:$0xff]
    %v1529 = vld [vmem:[#allocation8 + $0x440] sm:$0xff]
    %v1530 = vld [vmem:[#allocation8 + $0x448] sm:$0xff]
    %v1531 = vld [vmem:[#allocation8 + $0x450] sm:$0xff]
    %v1532 = vld [vmem:[#allocation8 + $0x458] sm:$0xff]
    %v1533 = vld [vmem:[#allocation8 + $0x460] sm:$0xff]
    %v1534 = vld [vmem:[#allocation8 + $0x468] sm:$0xff]
    %v1535 = vld [vmem:[#allocation8 + $0x470] sm:$0xff]
    %v1536 = vld [vmem:[#allocation8 + $0x478] sm:$0xff]
    %v1537 = vld [vmem:[#allocation8 + $0x480] sm:$0xff]
    %v1538 = vld [vmem:[#allocation8 + $0x488] sm:$0xff]
    %v1539 = vld [vmem:[#allocation8 + $0x490] sm:$0xff]
    %v1540 = vld [vmem:[#allocation8 + $0x498] sm:$0xff]
    %v1541 = vld [vmem:[#allocation8 + $0x4a0] sm:$0xff]
    %v1542 = vld [vmem:[#allocation8 + $0x4a8] sm:$0xff]
    %v1543 = vld [vmem:[#allocation8 + $0x4b0] sm:$0xff]
    %v1544 = vld [vmem:[#allocation8 + $0x4b8] sm:$0xff]
    %v1545 = vld [vmem:[#allocation8 + $0x4c0] sm:$0xff]
    %v1546 = vld [vmem:[#allocation8 + $0x4c8] sm:$0xff]
    %v1547 = vld [vmem:[#allocation8 + $0x4d0] sm:$0xff]
    %v1548 = vld [vmem:[#allocation8 + $0x4d8] sm:$0xff]
    %v1549 = vld [vmem:[#allocation8 + $0x4e0] sm:$0xff]
    %v1550 = vld [vmem:[#allocation8 + $0x4e8] sm:$0xff]
    %v1551 = vld [vmem:[#allocation8 + $0x4f0] sm:$0xff]
    %v1552 = vld [vmem:[#allocation8 + $0x4f8] sm:$0xff]
    %v1553 = vld [vmem:[#allocation8 + $0x500] sm:$0xff]
    %v1554 = vld [vmem:[#allocation8 + $0x508] sm:$0xff]
    %v1555 = vld [vmem:[#allocation8 + $0x510] sm:$0xff]
    %v1556 = vld [vmem:[#allocation8 + $0x518] sm:$0xff]
    %v1557 = vld [vmem:[#allocation8 + $0x520] sm:$0xff]
    %v1558 = vld [vmem:[#allocation8 + $0x528] sm:$0xff]
    %v1559 = vld [vmem:[#allocation8 + $0x530] sm:$0xff]
    %v1560 = vld [vmem:[#allocation8 + $0x538] sm:$0xff]
    %v1561 = vld [vmem:[#allocation8 + $0x540] sm:$0xff]
    %v1562 = vld [vmem:[#allocation8 + $0x548] sm:$0xff]
    %v1563 = vld [vmem:[#allocation8 + $0x550] sm:$0xff]
    %v1564 = vld [vmem:[#allocation8 + $0x558] sm:$0xff]
    %v1565 = vld [vmem:[#allocation8 + $0x560] sm:$0xff]
    %v1566 = vld [vmem:[#allocation8 + $0x568] sm:$0xff]
    %v1567 = vld [vmem:[#allocation8 + $0x570] sm:$0xff]
    %v1568 = vld [vmem:[#allocation8 + $0x578] sm:$0xff]
    %v1569 = vld [vmem:[#allocation8 + $0x580] sm:$0xff]
    %v1570 = vld [vmem:[#allocation8 + $0x588] sm:$0xff]
    %v1571 = vld [vmem:[#allocation8 + $0x590] sm:$0xff]
    %v1572 = vld [vmem:[#allocation8 + $0x598] sm:$0xff]
    %v1573 = vld [vmem:[#allocation8 + $0x5a0] sm:$0xff]
    %v1574 = vld [vmem:[#allocation8 + $0x5a8] sm:$0xff]
    %v1575 = vld [vmem:[#allocation8 + $0x5b0] sm:$0xff]
    %v1576 = vld [vmem:[#allocation8 + $0x5b8] sm:$0xff]
    %v1577 = vld [vmem:[#allocation8 + $0x5c0] sm:$0xff]
    %v1578 = vld [vmem:[#allocation8 + $0x5c8] sm:$0xff]
    %v1579 = vld [vmem:[#allocation8 + $0x5d0] sm:$0xff]
    %v1580 = vld [vmem:[#allocation8 + $0x5d8] sm:$0xff]
    %v1581 = vld [vmem:[#allocation8 + $0x5e0] sm:$0xff]
    %v1582 = vld [vmem:[#allocation8 + $0x5e8] sm:$0xff]
    %v1583 = vld [vmem:[#allocation8 + $0x5f0] sm:$0xff]
    %v1584 = vld [vmem:[#allocation8 + $0x5f8] sm:$0xff]
    %v1585 = vld [vmem:[#allocation8 + $0x600] sm:$0xff]
    %v1586 = vld [vmem:[#allocation8 + $0x608] sm:$0xff]
    %v1587 = vld [vmem:[#allocation8 + $0x610] sm:$0xff]
    %v1588 = vld [vmem:[#allocation8 + $0x618] sm:$0xff]
    %v1589 = vld [vmem:[#allocation8 + $0x620] sm:$0xff]
    %v1590 = vld [vmem:[#allocation8 + $0x628] sm:$0xff]
    %v1591 = vld [vmem:[#allocation8 + $0x630] sm:$0xff]
    %v1592 = vld [vmem:[#allocation8 + $0x638] sm:$0xff]
    %v1593 = vld [vmem:[#allocation8 + $0x640] sm:$0xff]
    %v1594 = vld [vmem:[#allocation8 + $0x648] sm:$0xff]
    %v1595 = vld [vmem:[#allocation8 + $0x650] sm:$0xff]
    %v1596 = vld [vmem:[#allocation8 + $0x658] sm:$0xff]
    %v1597 = vld [vmem:[#allocation8 + $0x660] sm:$0xff]
    %v1598 = vld [vmem:[#allocation8 + $0x668] sm:$0xff]
    %v1599 = vld [vmem:[#allocation8 + $0x670] sm:$0xff]
    %v1600 = vld [vmem:[#allocation8 + $0x678] sm:$0xff]
    %v1601 = vpack.c.bf16 %v1403, %v1403
    %v1602 = vpack.c.bf16 %v1404, %v1404
    %v1603 = vpack.c.bf16 %v1405, %v1405
    %v1604 = vpack.c.bf16 %v1406, %v1406
    %v1605 = vpack.c.bf16 %v1407, %v1407
    %v1606 = vpack.c.bf16 %v1408, %v1408
    %s1607 = scalar_lea.vmem [#allocation9], 1
    %v1608 = vld [vmem:[%s1607] ss:$8 sm:$0xf]
    %v1610 = vlaneseq
    %v1611 = vshrl.u32 %v1610, 7
    %v1612 = vsub.s32 0, %v1611
    %v1613 = vrot.slane %v1608, %v1612
    %v1614 = vlaneseq
    %v1615 = vshrl.u32 %v1614, 7
    %v1616 = vsub.s32 1, %v1615
    %v1617 = vrot.slane %v1608, %v1616
    %v1618 = vlaneseq
    %v1619 = vshrl.u32 %v1618, 7
    %v1620 = vsub.s32 2, %v1619
    %v1621 = vrot.slane %v1608, %v1620
    %v1622 = vlaneseq
    %v1623 = vshrl.u32 %v1622, 7
    %v1624 = vsub.s32 3, %v1623
    %v1625 = vrot.slane %v1608, %v1624
    %v1822 = vunpack.c.l.b16 %v1409
    %v1823 = vunpack.c.h.b16 %v1409
    %v1824 = vunpack.c.l.b16 %v1410
    %v1825 = vunpack.c.h.b16 %v1410
    %v1826 = vunpack.c.l.b16 %v1411
    %v1827 = vunpack.c.h.b16 %v1411
    %v1828 = vunpack.c.l.b16 %v1412
    %v1829 = vunpack.c.h.b16 %v1412
    %v1830 = vunpack.c.l.b16 %v1413
    %v1831 = vunpack.c.h.b16 %v1413
    %v1832 = vunpack.c.l.b16 %v1414
    %v1833 = vunpack.c.h.b16 %v1414
    %v1834 = vunpack.c.l.b16 %v1415
    %v1835 = vunpack.c.h.b16 %v1415
    %v1836 = vunpack.c.l.b16 %v1416
    %v1837 = vunpack.c.h.b16 %v1416
    %v1838 = vunpack.c.l.b16 %v1417
    %v1839 = vunpack.c.h.b16 %v1417
    %v1840 = vunpack.c.l.b16 %v1418
    %v1841 = vunpack.c.h.b16 %v1418
    %v1842 = vunpack.c.l.b16 %v1419
    %v1843 = vunpack.c.h.b16 %v1419
    %v1844 = vunpack.c.l.b16 %v1420
    %v1845 = vunpack.c.h.b16 %v1420
    %v1846 = vunpack.c.l.b16 %v1421
    %v1847 = vunpack.c.h.b16 %v1421
    %v1848 = vunpack.c.l.b16 %v1422
    %v1849 = vunpack.c.h.b16 %v1422
    %v1850 = vunpack.c.l.b16 %v1423
    %v1851 = vunpack.c.h.b16 %v1423
    %v1852 = vunpack.c.l.b16 %v1424
    %v1853 = vunpack.c.h.b16 %v1424
    %v1854 = vunpack.c.l.b16 %v1425
    %v1855 = vunpack.c.h.b16 %v1425
    %v1856 = vunpack.c.l.b16 %v1426
    %v1857 = vunpack.c.h.b16 %v1426
    %v1858 = vunpack.c.l.b16 %v1427
    %v1859 = vunpack.c.h.b16 %v1427
    %v1860 = vunpack.c.l.b16 %v1428
    %v1861 = vunpack.c.h.b16 %v1428
    %v1862 = vunpack.c.l.b16 %v1429
    %v1863 = vunpack.c.h.b16 %v1429
    %v1864 = vunpack.c.l.b16 %v1430
    %v1865 = vunpack.c.h.b16 %v1430
    %v1866 = vunpack.c.l.b16 %v1431
    %v1867 = vunpack.c.h.b16 %v1431
    %v1868 = vunpack.c.l.b16 %v1432
    %v1869 = vunpack.c.h.b16 %v1432
    %v1870 = vunpack.c.l.b16 %v1433
    %v1871 = vunpack.c.h.b16 %v1433
    %v1872 = vunpack.c.l.b16 %v1434
    %v1873 = vunpack.c.h.b16 %v1434
    %v1874 = vunpack.c.l.b16 %v1435
    %v1875 = vunpack.c.h.b16 %v1435
    %v1876 = vunpack.c.l.b16 %v1436
    %v1877 = vunpack.c.h.b16 %v1436
    %v1878 = vunpack.c.l.b16 %v1437
    %v1879 = vunpack.c.h.b16 %v1437
    %v1880 = vunpack.c.l.b16 %v1438
    %v1881 = vunpack.c.h.b16 %v1438
    %v1882 = vunpack.c.l.b16 %v1439
    %v1883 = vunpack.c.h.b16 %v1439
    %v1884 = vunpack.c.l.b16 %v1440
    %v1885 = vunpack.c.h.b16 %v1440
    %v1886 = vunpack.c.l.b16 %v1441
    %v1887 = vunpack.c.h.b16 %v1441
    %v1888 = vunpack.c.l.b16 %v1442
    %v1889 = vunpack.c.h.b16 %v1442
    %v1890 = vunpack.c.l.b16 %v1443
    %v1891 = vunpack.c.h.b16 %v1443
    %v1892 = vunpack.c.l.b16 %v1444
    %v1893 = vunpack.c.h.b16 %v1444
    %v1894 = vunpack.c.l.b16 %v1445
    %v1895 = vunpack.c.h.b16 %v1445
    %v1896 = vunpack.c.l.b16 %v1446
    %v1897 = vunpack.c.h.b16 %v1446
    %v1898 = vunpack.c.l.b16 %v1447
    %v1899 = vunpack.c.h.b16 %v1447
    %v1900 = vunpack.c.l.b16 %v1448
    %v1901 = vunpack.c.h.b16 %v1448
    %v1902 = vunpack.c.l.b16 %v1449
    %v1903 = vunpack.c.h.b16 %v1449
    %v1904 = vunpack.c.l.b16 %v1450
    %v1905 = vunpack.c.h.b16 %v1450
    %v1906 = vunpack.c.l.b16 %v1451
    %v1907 = vunpack.c.h.b16 %v1451
    %v1908 = vunpack.c.l.b16 %v1452
    %v1909 = vunpack.c.h.b16 %v1452
    %v1910 = vunpack.c.l.b16 %v1453
    %v1911 = vunpack.c.h.b16 %v1453
    %v1912 = vunpack.c.l.b16 %v1454
    %v1913 = vunpack.c.h.b16 %v1454
    %v1914 = vunpack.c.l.b16 %v1455
    %v1915 = vunpack.c.h.b16 %v1455
    %v1916 = vunpack.c.l.b16 %v1456
    %v1917 = vunpack.c.h.b16 %v1456
    %v1918 = vunpack.c.l.b16 %v1457
    %v1919 = vunpack.c.h.b16 %v1457
    %v1920 = vunpack.c.l.b16 %v1458
    %v1921 = vunpack.c.h.b16 %v1458
    %v1922 = vunpack.c.l.b16 %v1459
    %v1923 = vunpack.c.h.b16 %v1459
    %v1924 = vunpack.c.l.b16 %v1460
    %v1925 = vunpack.c.h.b16 %v1460
    %v1926 = vunpack.c.l.b16 %v1461
    %v1927 = vunpack.c.h.b16 %v1461
    %v1928 = vunpack.c.l.b16 %v1462
    %v1929 = vunpack.c.h.b16 %v1462
    %v1930 = vunpack.c.l.b16 %v1463
    %v1931 = vunpack.c.h.b16 %v1463
    %v1932 = vunpack.c.l.b16 %v1464
    %v1933 = vunpack.c.h.b16 %v1464
    %v1934 = vunpack.c.l.b16 %v1465
    %v1935 = vunpack.c.h.b16 %v1465
    %v1936 = vunpack.c.l.b16 %v1466
    %v1937 = vunpack.c.h.b16 %v1466
    %v1938 = vunpack.c.l.b16 %v1467
    %v1939 = vunpack.c.h.b16 %v1467
    %v1940 = vunpack.c.l.b16 %v1468
    %v1941 = vunpack.c.h.b16 %v1468
    %v1942 = vunpack.c.l.b16 %v1469
    %v1943 = vunpack.c.h.b16 %v1469
    %v1944 = vunpack.c.l.b16 %v1470
    %v1945 = vunpack.c.h.b16 %v1470
    %v1946 = vunpack.c.l.b16 %v1471
    %v1947 = vunpack.c.h.b16 %v1471
    %v1948 = vunpack.c.l.b16 %v1472
    %v1949 = vunpack.c.h.b16 %v1472
    %v1950 = vunpack.c.l.b16 %v1473
    %v1951 = vunpack.c.h.b16 %v1473
    %v1952 = vunpack.c.l.b16 %v1474
    %v1953 = vunpack.c.h.b16 %v1474
    %v1954 = vunpack.c.l.b16 %v1475
    %v1955 = vunpack.c.h.b16 %v1475
    %v1956 = vunpack.c.l.b16 %v1476
    %v1957 = vunpack.c.h.b16 %v1476
    %v1958 = vunpack.c.l.b16 %v1477
    %v1959 = vunpack.c.h.b16 %v1477
    %v1960 = vunpack.c.l.b16 %v1478
    %v1961 = vunpack.c.h.b16 %v1478
    %v1962 = vunpack.c.l.b16 %v1479
    %v1963 = vunpack.c.h.b16 %v1479
    %v1964 = vunpack.c.l.b16 %v1480
    %v1965 = vunpack.c.h.b16 %v1480
    %v1966 = vunpack.c.l.b16 %v1481
    %v1967 = vunpack.c.h.b16 %v1481
    %v1968 = vunpack.c.l.b16 %v1482
    %v1969 = vunpack.c.h.b16 %v1482
    %v1970 = vunpack.c.l.b16 %v1483
    %v1971 = vunpack.c.h.b16 %v1483
    %v1972 = vunpack.c.l.b16 %v1484
    %v1973 = vunpack.c.h.b16 %v1484
    %v1974 = vunpack.c.l.b16 %v1485
    %v1975 = vunpack.c.h.b16 %v1485
    %v1976 = vunpack.c.l.b16 %v1486
    %v1977 = vunpack.c.h.b16 %v1486
    %v1978 = vunpack.c.l.b16 %v1487
    %v1979 = vunpack.c.h.b16 %v1487
    %v1980 = vunpack.c.l.b16 %v1488
    %v1981 = vunpack.c.h.b16 %v1488
    %v1982 = vunpack.c.l.b16 %v1489
    %v1983 = vunpack.c.h.b16 %v1489
    %v1984 = vunpack.c.l.b16 %v1490
    %v1985 = vunpack.c.h.b16 %v1490
    %v1986 = vunpack.c.l.b16 %v1491
    %v1987 = vunpack.c.h.b16 %v1491
    %v1988 = vunpack.c.l.b16 %v1492
    %v1989 = vunpack.c.h.b16 %v1492
    %v1990 = vunpack.c.l.b16 %v1493
    %v1991 = vunpack.c.h.b16 %v1493
    %v1992 = vunpack.c.l.b16 %v1494
    %v1993 = vunpack.c.h.b16 %v1494
    %v1994 = vunpack.c.l.b16 %v1495
    %v1995 = vunpack.c.h.b16 %v1495
    %v1996 = vunpack.c.l.b16 %v1496
    %v1997 = vunpack.c.h.b16 %v1496
    %v1998 = vunpack.c.l.b16 %v1497
    %v1999 = vunpack.c.h.b16 %v1497
    %v2000 = vunpack.c.l.b16 %v1498
    %v2001 = vunpack.c.h.b16 %v1498
    %v2002 = vunpack.c.l.b16 %v1499
    %v2003 = vunpack.c.h.b16 %v1499
    %v2004 = vunpack.c.l.b16 %v1500
    %v2005 = vunpack.c.h.b16 %v1500
    %v2006 = vunpack.c.l.b16 %v1501
    %v2007 = vunpack.c.h.b16 %v1501
    %v2008 = vunpack.c.l.b16 %v1502
    %v2009 = vunpack.c.h.b16 %v1502
    %v2010 = vunpack.c.l.b16 %v1503
    %v2011 = vunpack.c.h.b16 %v1503
    %v2012 = vunpack.c.l.b16 %v1504
    %v2013 = vunpack.c.h.b16 %v1504
    %v2014 = vunpack.c.l.b16 %v1505
    %v2015 = vunpack.c.h.b16 %v1505
    %v2016 = vunpack.c.l.b16 %v1506
    %v2017 = vunpack.c.h.b16 %v1506
    %v2018 = vunpack.c.l.b16 %v1507
    %v2019 = vunpack.c.h.b16 %v1507
    %v2020 = vunpack.c.l.b16 %v1508
    %v2021 = vunpack.c.h.b16 %v1508
    %v2022 = vunpack.c.l.b16 %v1509
    %v2023 = vunpack.c.h.b16 %v1509
    %v2024 = vunpack.c.l.b16 %v1510
    %v2025 = vunpack.c.h.b16 %v1510
    %v2026 = vunpack.c.l.b16 %v1511
    %v2027 = vunpack.c.h.b16 %v1511
    %v2028 = vunpack.c.l.b16 %v1512
    %v2029 = vunpack.c.h.b16 %v1512
    %v2030 = vunpack.c.l.b16 %v1513
    %v2031 = vunpack.c.h.b16 %v1513
    %v2032 = vunpack.c.l.b16 %v1514
    %v2033 = vunpack.c.h.b16 %v1514
    %v2034 = vunpack.c.l.b16 %v1515
    %v2035 = vunpack.c.h.b16 %v1515
    %v2036 = vunpack.c.l.b16 %v1516
    %v2037 = vunpack.c.h.b16 %v1516
    %v2038 = vunpack.c.l.b16 %v1517
    %v2039 = vunpack.c.h.b16 %v1517
    %v2040 = vunpack.c.l.b16 %v1518
    %v2041 = vunpack.c.h.b16 %v1518
    %v2042 = vunpack.c.l.b16 %v1519
    %v2043 = vunpack.c.h.b16 %v1519
    %v2044 = vunpack.c.l.b16 %v1520
    %v2045 = vunpack.c.h.b16 %v1520
    %v2046 = vunpack.c.l.b16 %v1521
    %v2047 = vunpack.c.h.b16 %v1521
    %v2048 = vunpack.c.l.b16 %v1522
    %v2049 = vunpack.c.h.b16 %v1522
    %v2050 = vunpack.c.l.b16 %v1523
    %v2051 = vunpack.c.h.b16 %v1523
    %v2052 = vunpack.c.l.b16 %v1524
    %v2053 = vunpack.c.h.b16 %v1524
    %v2054 = vunpack.c.l.b16 %v1525
    %v2055 = vunpack.c.h.b16 %v1525
    %v2056 = vunpack.c.l.b16 %v1526
    %v2057 = vunpack.c.h.b16 %v1526
    %v2058 = vunpack.c.l.b16 %v1527
    %v2059 = vunpack.c.h.b16 %v1527
    %v2060 = vunpack.c.l.b16 %v1528
    %v2061 = vunpack.c.h.b16 %v1528
    %v2062 = vunpack.c.l.b16 %v1529
    %v2063 = vunpack.c.h.b16 %v1529
    %v2064 = vunpack.c.l.b16 %v1530
    %v2065 = vunpack.c.h.b16 %v1530
    %v2066 = vunpack.c.l.b16 %v1531
    %v2067 = vunpack.c.h.b16 %v1531
    %v2068 = vunpack.c.l.b16 %v1532
    %v2069 = vunpack.c.h.b16 %v1532
    %v2070 = vunpack.c.l.b16 %v1533
    %v2071 = vunpack.c.h.b16 %v1533
    %v2072 = vunpack.c.l.b16 %v1534
    %v2073 = vunpack.c.h.b16 %v1534
    %v2074 = vunpack.c.l.b16 %v1535
    %v2075 = vunpack.c.h.b16 %v1535
    %v2076 = vunpack.c.l.b16 %v1536
    %v2077 = vunpack.c.h.b16 %v1536
    %v2078 = vunpack.c.l.b16 %v1537
    %v2079 = vunpack.c.h.b16 %v1537
    %v2080 = vunpack.c.l.b16 %v1538
    %v2081 = vunpack.c.h.b16 %v1538
    %v2082 = vunpack.c.l.b16 %v1539
    %v2083 = vunpack.c.h.b16 %v1539
    %v2084 = vunpack.c.l.b16 %v1540
    %v2085 = vunpack.c.h.b16 %v1540
    %v2086 = vunpack.c.l.b16 %v1541
    %v2087 = vunpack.c.h.b16 %v1541
    %v2088 = vunpack.c.l.b16 %v1542
    %v2089 = vunpack.c.h.b16 %v1542
    %v2090 = vunpack.c.l.b16 %v1543
    %v2091 = vunpack.c.h.b16 %v1543
    %v2092 = vunpack.c.l.b16 %v1544
    %v2093 = vunpack.c.h.b16 %v1544
    %v2094 = vunpack.c.l.b16 %v1545
    %v2095 = vunpack.c.h.b16 %v1545
    %v2096 = vunpack.c.l.b16 %v1546
    %v2097 = vunpack.c.h.b16 %v1546
    %v2098 = vunpack.c.l.b16 %v1547
    %v2099 = vunpack.c.h.b16 %v1547
    %v2100 = vunpack.c.l.b16 %v1548
    %v2101 = vunpack.c.h.b16 %v1548
    %v2102 = vunpack.c.l.b16 %v1549
    %v2103 = vunpack.c.h.b16 %v1549
    %v2104 = vunpack.c.l.b16 %v1550
    %v2105 = vunpack.c.h.b16 %v1550
    %v2106 = vunpack.c.l.b16 %v1551
    %v2107 = vunpack.c.h.b16 %v1551
    %v2108 = vunpack.c.l.b16 %v1552
    %v2109 = vunpack.c.h.b16 %v1552
    %v2110 = vunpack.c.l.b16 %v1553
    %v2111 = vunpack.c.h.b16 %v1553
    %v2112 = vunpack.c.l.b16 %v1554
    %v2113 = vunpack.c.h.b16 %v1554
    %v2114 = vunpack.c.l.b16 %v1555
    %v2115 = vunpack.c.h.b16 %v1555
    %v2116 = vunpack.c.l.b16 %v1556
    %v2117 = vunpack.c.h.b16 %v1556
    %v2118 = vunpack.c.l.b16 %v1557
    %v2119 = vunpack.c.h.b16 %v1557
    %v2120 = vunpack.c.l.b16 %v1558
    %v2121 = vunpack.c.h.b16 %v1558
    %v2122 = vunpack.c.l.b16 %v1559
    %v2123 = vunpack.c.h.b16 %v1559
    %v2124 = vunpack.c.l.b16 %v1560
    %v2125 = vunpack.c.h.b16 %v1560
    %v2126 = vunpack.c.l.b16 %v1561
    %v2127 = vunpack.c.h.b16 %v1561
    %v2128 = vunpack.c.l.b16 %v1562
    %v2129 = vunpack.c.h.b16 %v1562
    %v2130 = vunpack.c.l.b16 %v1563
    %v2131 = vunpack.c.h.b16 %v1563
    %v2132 = vunpack.c.l.b16 %v1564
    %v2133 = vunpack.c.h.b16 %v1564
    %v2134 = vunpack.c.l.b16 %v1565
    %v2135 = vunpack.c.h.b16 %v1565
    %v2136 = vunpack.c.l.b16 %v1566
    %v2137 = vunpack.c.h.b16 %v1566
    %v2138 = vunpack.c.l.b16 %v1567
    %v2139 = vunpack.c.h.b16 %v1567
    %v2140 = vunpack.c.l.b16 %v1568
    %v2141 = vunpack.c.h.b16 %v1568
    %v2142 = vunpack.c.l.b16 %v1569
    %v2143 = vunpack.c.h.b16 %v1569
    %v2144 = vunpack.c.l.b16 %v1570
    %v2145 = vunpack.c.h.b16 %v1570
    %v2146 = vunpack.c.l.b16 %v1571
    %v2147 = vunpack.c.h.b16 %v1571
    %v2148 = vunpack.c.l.b16 %v1572
    %v2149 = vunpack.c.h.b16 %v1572
    %v2150 = vunpack.c.l.b16 %v1573
    %v2151 = vunpack.c.h.b16 %v1573
    %v2152 = vunpack.c.l.b16 %v1574
    %v2153 = vunpack.c.h.b16 %v1574
    %v2154 = vunpack.c.l.b16 %v1575
    %v2155 = vunpack.c.h.b16 %v1575
    %v2156 = vunpack.c.l.b16 %v1576
    %v2157 = vunpack.c.h.b16 %v1576
    %v2158 = vunpack.c.l.b16 %v1577
    %v2159 = vunpack.c.h.b16 %v1577
    %v2160 = vunpack.c.l.b16 %v1578
    %v2161 = vunpack.c.h.b16 %v1578
    %v2162 = vunpack.c.l.b16 %v1579
    %v2163 = vunpack.c.h.b16 %v1579
    %v2164 = vunpack.c.l.b16 %v1580
    %v2165 = vunpack.c.h.b16 %v1580
    %v2166 = vunpack.c.l.b16 %v1581
    %v2167 = vunpack.c.h.b16 %v1581
    %v2168 = vunpack.c.l.b16 %v1582
    %v2169 = vunpack.c.h.b16 %v1582
    %v2170 = vunpack.c.l.b16 %v1583
    %v2171 = vunpack.c.h.b16 %v1583
    %v2172 = vunpack.c.l.b16 %v1584
    %v2173 = vunpack.c.h.b16 %v1584
    %v2174 = vunpack.c.l.b16 %v1585
    %v2175 = vunpack.c.h.b16 %v1585
    %v2176 = vunpack.c.l.b16 %v1586
    %v2177 = vunpack.c.h.b16 %v1586
    %v2178 = vunpack.c.l.b16 %v1587
    %v2179 = vunpack.c.h.b16 %v1587
    %v2180 = vunpack.c.l.b16 %v1588
    %v2181 = vunpack.c.h.b16 %v1588
    %v2182 = vunpack.c.l.b16 %v1589
    %v2183 = vunpack.c.h.b16 %v1589
    %v2184 = vunpack.c.l.b16 %v1590
    %v2185 = vunpack.c.h.b16 %v1590
    %v2186 = vunpack.c.l.b16 %v1591
    %v2187 = vunpack.c.h.b16 %v1591
    %v2188 = vunpack.c.l.b16 %v1592
    %v2189 = vunpack.c.h.b16 %v1592
    %v2190 = vunpack.c.l.b16 %v1593
    %v2191 = vunpack.c.h.b16 %v1593
    %v2192 = vunpack.c.l.b16 %v1594
    %v2193 = vunpack.c.h.b16 %v1594
    %v2194 = vunpack.c.l.b16 %v1595
    %v2195 = vunpack.c.h.b16 %v1595
    %v2196 = vunpack.c.l.b16 %v1596
    %v2197 = vunpack.c.h.b16 %v1596
    %v2198 = vunpack.c.l.b16 %v1597
    %v2199 = vunpack.c.h.b16 %v1597
    %v2200 = vunpack.c.l.b16 %v1598
    %v2201 = vunpack.c.h.b16 %v1598
    %v2202 = vunpack.c.l.b16 %v1599
    %v2203 = vunpack.c.h.b16 %v1599
    %v2204 = vunpack.c.l.b16 %v1600
    %v2205 = vunpack.c.h.b16 %v1600
    %v2206 = vpack.c.b16 %v1826, %v1822
    %v2207 = vpack.c.b16 %v1827, %v1823
    %v2208 = vpack.c.b16 %v1828, %v1824
    %v2209 = vpack.c.b16 %v1829, %v1825
    %v2210 = vpack.c.b16 %v1834, %v1830
    %v2211 = vpack.c.b16 %v1835, %v1831
    %v2212 = vpack.c.b16 %v1836, %v1832
    %v2213 = vpack.c.b16 %v1837, %v1833
    %v2214 = vpack.c.b16 %v1842, %v1838
    %v2215 = vpack.c.b16 %v1843, %v1839
    %v2216 = vpack.c.b16 %v1844, %v1840
    %v2217 = vpack.c.b16 %v1845, %v1841
    %v2218 = vpack.c.b16 %v1850, %v1846
    %v2219 = vpack.c.b16 %v1851, %v1847
    %v2220 = vpack.c.b16 %v1852, %v1848
    %v2221 = vpack.c.b16 %v1853, %v1849
    %v2222 = vpack.c.b16 %v1858, %v1854
    %v2223 = vpack.c.b16 %v1859, %v1855
    %v2224 = vpack.c.b16 %v1860, %v1856
    %v2225 = vpack.c.b16 %v1861, %v1857
    %v2226 = vpack.c.b16 %v1866, %v1862
    %v2227 = vpack.c.b16 %v1867, %v1863
    %v2228 = vpack.c.b16 %v1868, %v1864
    %v2229 = vpack.c.b16 %v1869, %v1865
    %v2230 = vpack.c.b16 %v1874, %v1870
    %v2231 = vpack.c.b16 %v1875, %v1871
    %v2232 = vpack.c.b16 %v1876, %v1872
    %v2233 = vpack.c.b16 %v1877, %v1873
    %v2234 = vpack.c.b16 %v1882, %v1878
    %v2235 = vpack.c.b16 %v1883, %v1879
    %v2236 = vpack.c.b16 %v1884, %v1880
    %v2237 = vpack.c.b16 %v1885, %v1881
    %v2238 = vpack.c.b16 %v1890, %v1886
    %v2239 = vpack.c.b16 %v1891, %v1887
    %v2240 = vpack.c.b16 %v1892, %v1888
    %v2241 = vpack.c.b16 %v1893, %v1889
    %v2242 = vpack.c.b16 %v1898, %v1894
    %v2243 = vpack.c.b16 %v1899, %v1895
    %v2244 = vpack.c.b16 %v1900, %v1896
    %v2245 = vpack.c.b16 %v1901, %v1897
    %v2246 = vpack.c.b16 %v1906, %v1902
    %v2247 = vpack.c.b16 %v1907, %v1903
    %v2248 = vpack.c.b16 %v1908, %v1904
    %v2249 = vpack.c.b16 %v1909, %v1905
    %v2250 = vpack.c.b16 %v1914, %v1910
    %v2251 = vpack.c.b16 %v1915, %v1911
    %v2252 = vpack.c.b16 %v1916, %v1912
    %v2253 = vpack.c.b16 %v1917, %v1913
    %v2254 = vpack.c.b16 %v1922, %v1918
    %v2255 = vpack.c.b16 %v1923, %v1919
    %v2256 = vpack.c.b16 %v1924, %v1920
    %v2257 = vpack.c.b16 %v1925, %v1921
    %v2258 = vpack.c.b16 %v1930, %v1926
    %v2259 = vpack.c.b16 %v1931, %v1927
    %v2260 = vpack.c.b16 %v1932, %v1928
    %v2261 = vpack.c.b16 %v1933, %v1929
    %v2262 = vpack.c.b16 %v1938, %v1934
    %v2263 = vpack.c.b16 %v1939, %v1935
    %v2264 = vpack.c.b16 %v1940, %v1936
    %v2265 = vpack.c.b16 %v1941, %v1937
    %v2266 = vpack.c.b16 %v1946, %v1942
    %v2267 = vpack.c.b16 %v1947, %v1943
    %v2268 = vpack.c.b16 %v1948, %v1944
    %v2269 = vpack.c.b16 %v1949, %v1945
    %v2270 = vpack.c.b16 %v1954, %v1950
    %v2271 = vpack.c.b16 %v1955, %v1951
    %v2272 = vpack.c.b16 %v1956, %v1952
    %v2273 = vpack.c.b16 %v1957, %v1953
    %v2274 = vpack.c.b16 %v1962, %v1958
    %v2275 = vpack.c.b16 %v1963, %v1959
    %v2276 = vpack.c.b16 %v1964, %v1960
    %v2277 = vpack.c.b16 %v1965, %v1961
    %v2278 = vpack.c.b16 %v1970, %v1966
    %v2279 = vpack.c.b16 %v1971, %v1967
    %v2280 = vpack.c.b16 %v1972, %v1968
    %v2281 = vpack.c.b16 %v1973, %v1969
    %v2282 = vpack.c.b16 %v1978, %v1974
    %v2283 = vpack.c.b16 %v1979, %v1975
    %v2284 = vpack.c.b16 %v1980, %v1976
    %v2285 = vpack.c.b16 %v1981, %v1977
    %v2286 = vpack.c.b16 %v1986, %v1982
    %v2287 = vpack.c.b16 %v1987, %v1983
    %v2288 = vpack.c.b16 %v1988, %v1984
    %v2289 = vpack.c.b16 %v1989, %v1985
    %v2290 = vpack.c.b16 %v1994, %v1990
    %v2291 = vpack.c.b16 %v1995, %v1991
    %v2292 = vpack.c.b16 %v1996, %v1992
    %v2293 = vpack.c.b16 %v1997, %v1993
    %v2294 = vpack.c.b16 %v2002, %v1998
    %v2295 = vpack.c.b16 %v2003, %v1999
    %v2296 = vpack.c.b16 %v2004, %v2000
    %v2297 = vpack.c.b16 %v2005, %v2001
    %v2298 = vpack.c.b16 %v2010, %v2006
    %v2299 = vpack.c.b16 %v2011, %v2007
    %v2300 = vpack.c.b16 %v2012, %v2008
    %v2301 = vpack.c.b16 %v2013, %v2009
    %v2302 = vpack.c.b16 %v2018, %v2014
    %v2303 = vpack.c.b16 %v2019, %v2015
    %v2304 = vpack.c.b16 %v2020, %v2016
    %v2305 = vpack.c.b16 %v2021, %v2017
    %v2306 = vpack.c.b16 %v2026, %v2022
    %v2307 = vpack.c.b16 %v2027, %v2023
    %v2308 = vpack.c.b16 %v2028, %v2024
    %v2309 = vpack.c.b16 %v2029, %v2025
    %v2310 = vpack.c.b16 %v2034, %v2030
    %v2311 = vpack.c.b16 %v2035, %v2031
    %v2312 = vpack.c.b16 %v2036, %v2032
    %v2313 = vpack.c.b16 %v2037, %v2033
    %v2314 = vpack.c.b16 %v2042, %v2038
    %v2315 = vpack.c.b16 %v2043, %v2039
    %v2316 = vpack.c.b16 %v2044, %v2040
    %v2317 = vpack.c.b16 %v2045, %v2041
    %v2318 = vpack.c.b16 %v2050, %v2046
    %v2319 = vpack.c.b16 %v2051, %v2047
    %v2320 = vpack.c.b16 %v2052, %v2048
    %v2321 = vpack.c.b16 %v2053, %v2049
    %v2322 = vpack.c.b16 %v2058, %v2054
    %v2323 = vpack.c.b16 %v2059, %v2055
    %v2324 = vpack.c.b16 %v2060, %v2056
    %v2325 = vpack.c.b16 %v2061, %v2057
    %v2326 = vpack.c.b16 %v2066, %v2062
    %v2327 = vpack.c.b16 %v2067, %v2063
    %v2328 = vpack.c.b16 %v2068, %v2064
    %v2329 = vpack.c.b16 %v2069, %v2065
    %v2330 = vpack.c.b16 %v2074, %v2070
    %v2331 = vpack.c.b16 %v2075, %v2071
    %v2332 = vpack.c.b16 %v2076, %v2072
    %v2333 = vpack.c.b16 %v2077, %v2073
    %v2334 = vpack.c.b16 %v2082, %v2078
    %v2335 = vpack.c.b16 %v2083, %v2079
    %v2336 = vpack.c.b16 %v2084, %v2080
    %v2337 = vpack.c.b16 %v2085, %v2081
    %v2338 = vpack.c.b16 %v2090, %v2086
    %v2339 = vpack.c.b16 %v2091, %v2087
    %v2340 = vpack.c.b16 %v2092, %v2088
    %v2341 = vpack.c.b16 %v2093, %v2089
    %v2342 = vpack.c.b16 %v2098, %v2094
    %v2343 = vpack.c.b16 %v2099, %v2095
    %v2344 = vpack.c.b16 %v2100, %v2096
    %v2345 = vpack.c.b16 %v2101, %v2097
    %v2346 = vpack.c.b16 %v2106, %v2102
    %v2347 = vpack.c.b16 %v2107, %v2103
    %v2348 = vpack.c.b16 %v2108, %v2104
    %v2349 = vpack.c.b16 %v2109, %v2105
    %v2350 = vpack.c.b16 %v2114, %v2110
    %v2351 = vpack.c.b16 %v2115, %v2111
    %v2352 = vpack.c.b16 %v2116, %v2112
    %v2353 = vpack.c.b16 %v2117, %v2113
    %v2354 = vpack.c.b16 %v2122, %v2118
    %v2355 = vpack.c.b16 %v2123, %v2119
    %v2356 = vpack.c.b16 %v2124, %v2120
    %v2357 = vpack.c.b16 %v2125, %v2121
    %v2358 = vpack.c.b16 %v2130, %v2126
    %v2359 = vpack.c.b16 %v2131, %v2127
    %v2360 = vpack.c.b16 %v2132, %v2128
    %v2361 = vpack.c.b16 %v2133, %v2129
    %v2362 = vpack.c.b16 %v2138, %v2134
    %v2363 = vpack.c.b16 %v2139, %v2135
    %v2364 = vpack.c.b16 %v2140, %v2136
    %v2365 = vpack.c.b16 %v2141, %v2137
    %v2366 = vpack.c.b16 %v2146, %v2142
    %v2367 = vpack.c.b16 %v2147, %v2143
    %v2368 = vpack.c.b16 %v2148, %v2144
    %v2369 = vpack.c.b16 %v2149, %v2145
    %v2370 = vpack.c.b16 %v2154, %v2150
    %v2371 = vpack.c.b16 %v2155, %v2151
    %v2372 = vpack.c.b16 %v2156, %v2152
    %v2373 = vpack.c.b16 %v2157, %v2153
    %v2374 = vpack.c.b16 %v2162, %v2158
    %v2375 = vpack.c.b16 %v2163, %v2159
    %v2376 = vpack.c.b16 %v2164, %v2160
    %v2377 = vpack.c.b16 %v2165, %v2161
    %v2378 = vpack.c.b16 %v2170, %v2166
    %v2379 = vpack.c.b16 %v2171, %v2167
    %v2380 = vpack.c.b16 %v2172, %v2168
    %v2381 = vpack.c.b16 %v2173, %v2169
    %v2382 = vpack.c.b16 %v2178, %v2174
    %v2383 = vpack.c.b16 %v2179, %v2175
    %v2384 = vpack.c.b16 %v2180, %v2176
    %v2385 = vpack.c.b16 %v2181, %v2177
    %v2386 = vpack.c.b16 %v2186, %v2182
    %v2387 = vpack.c.b16 %v2187, %v2183
    %v2388 = vpack.c.b16 %v2188, %v2184
    %v2389 = vpack.c.b16 %v2189, %v2185
    %v2390 = vpack.c.b16 %v2194, %v2190
    %v2391 = vpack.c.b16 %v2195, %v2191
    %v2392 = vpack.c.b16 %v2196, %v2192
    %v2393 = vpack.c.b16 %v2197, %v2193
    %v2394 = vpack.c.b16 %v2202, %v2198
    %v2395 = vpack.c.b16 %v2203, %v2199
    %v2396 = vpack.c.b16 %v2204, %v2200
    %v2397 = vpack.c.b16 %v2205, %v2201
    %2590 = vmatprep.subr.bf16.mxu0 %v2235
    %2591 = vmatpush1.bf16.msra.mxu0 %v2234
    %2592 = vmatprep.subr.bf16.mxu0 %v2231
    %2593 = vmatpush1.bf16.msra.mxu0 %v2230
    %2594 = vmatprep.subr.bf16.mxu0 %v2227
    %2595 = vmatpush1.bf16.msra.mxu0 %v2226
    %2596 = vmatprep.subr.bf16.mxu0 %v2223
    %2597 = vmatpush1.bf16.msra.mxu0 %v2222
    %2598 = vmatprep.subr.bf16.mxu0 %v2219
    %2599 = vmatpush1.bf16.msra.mxu0 %v2218
    %2600 = vmatprep.subr.bf16.mxu0 %v2215
    %2601 = vmatpush1.bf16.msra.mxu0 %v2214
    %2602 = vmatprep.subr.bf16.mxu0 %v2211
    %2603 = vmatpush1.bf16.msra.mxu0 %v2210
    %2604 = vmatprep.subr.bf16.mxu0 %v2207
    %2605 = vmatpush1.bf16.msra.mxu0 %v2206
    %2606 = vmatprep.subr.bf16.mxu0 %v2267
    %2607 = vmatpush2.bf16.msra.mxu0 %v2266
    %2608 = vmatprep.subr.bf16.mxu0 %v2263
    %2609 = vmatpush2.bf16.msra.mxu0 %v2262
    %2610 = vmatprep.subr.bf16.mxu0 %v2259
    %2611 = vmatpush2.bf16.msra.mxu0 %v2258
    %2612 = vmatprep.subr.bf16.mxu0 %v2255
    %2613 = vmatpush2.bf16.msra.mxu0 %v2254
    %2614 = vmatprep.subr.bf16.mxu0 %v2251
    %2615 = vmatpush2.bf16.msra.mxu0 %v2250
    %2616 = vmatprep.subr.bf16.mxu0 %v2247
    %2617 = vmatpush2.bf16.msra.mxu0 %v2246
    %2618 = vmatprep.subr.bf16.mxu0 %v2243
    %2619 = vmatpush2.bf16.msra.mxu0 %v2242
    %2620 = vmatprep.subr.bf16.mxu0 %v2239
    %2621 = vmatpush2.bf16.msra.mxu0 %v2238
    %2622 = vmatprep.mubr.bf16.mxu0 %v1602
    %2623 = vmatmul.mubr.bf16.gmra.mxu0 %v1601
    %v2624 = vpop.f32.mrf.mxu0
    %v2625 = vadd.f32 %v1613, %v2624
    %v2626 = vpop.f32.mrf.mxu0
    %v2627 = vadd.f32 %v1617, %v2626
    %v2628 = vpop.f32.mrf.mxu0
    %v2629 = vpop.f32.mrf.mxu0
    %2630 = vdwg.mxu0
    %2631 = vmatprep.subr.bf16.mxu0 %v2299
    %2632 = vmatpush1.bf16.msra.mxu0 %v2298
    %2633 = vmatprep.subr.bf16.mxu0 %v2295
    %2634 = vmatpush1.bf16.msra.mxu0 %v2294
    %2635 = vmatprep.subr.bf16.mxu0 %v2291
    %2636 = vmatpush1.bf16.msra.mxu0 %v2290
    %2637 = vmatprep.subr.bf16.mxu0 %v2287
    %2638 = vmatpush1.bf16.msra.mxu0 %v2286
    %2639 = vmatprep.subr.bf16.mxu0 %v2283
    %2640 = vmatpush1.bf16.msra.mxu0 %v2282
    %2641 = vmatprep.subr.bf16.mxu0 %v2279
    %2642 = vmatpush1.bf16.msra.mxu0 %v2278
    %2643 = vmatprep.subr.bf16.mxu0 %v2275
    %2644 = vmatpush1.bf16.msra.mxu0 %v2274
    %2645 = vmatprep.subr.bf16.mxu0 %v2271
    %2646 = vmatpush1.bf16.msra.mxu0 %v2270
    %2647 = vmatprep.subr.bf16.mxu0 %v2331
    %2648 = vmatpush2.bf16.msra.mxu0 %v2330
    %2649 = vmatprep.subr.bf16.mxu0 %v2327
    %2650 = vmatpush2.bf16.msra.mxu0 %v2326
    %2651 = vmatprep.subr.bf16.mxu0 %v2323
    %2652 = vmatpush2.bf16.msra.mxu0 %v2322
    %2653 = vmatprep.subr.bf16.mxu0 %v2319
    %2654 = vmatpush2.bf16.msra.mxu0 %v2318
    %2655 = vmatprep.subr.bf16.mxu0 %v2315
    %2656 = vmatpush2.bf16.msra.mxu0 %v2314
    %2657 = vmatprep.subr.bf16.mxu0 %v2311
    %2658 = vmatpush2.bf16.msra.mxu0 %v2310
    %2659 = vmatprep.subr.bf16.mxu0 %v2307
    %2660 = vmatpush2.bf16.msra.mxu0 %v2306
    %2661 = vmatprep.subr.bf16.mxu0 %v2303
    %2662 = vmatpush2.bf16.msra.mxu0 %v2302
    %2663 = vmatprep.mubr.bf16.mxu0 %v1604
    %2664 = vmatmul.mubr.bf16.gmra.mxu0 %v1603
    %v2665 = vpop.f32.mrf.mxu0
    %v2666 = vadd.f32 %v2625, %v2665
    %v2667 = vpop.f32.mrf.mxu0
    %v2668 = vadd.f32 %v2627, %v2667
    %v2669 = vpop.f32.mrf.mxu0
    %v2670 = vpop.f32.mrf.mxu0
    %2671 = vdwg.mxu0
    %2672 = vmatprep.subr.bf16.mxu0 %v2363
    %2673 = vmatpush1.bf16.msra.mxu0 %v2362
    %2674 = vmatprep.subr.bf16.mxu0 %v2359
    %2675 = vmatpush1.bf16.msra.mxu0 %v2358
    %2676 = vmatprep.subr.bf16.mxu0 %v2355
    %2677 = vmatpush1.bf16.msra.mxu0 %v2354
    %2678 = vmatprep.subr.bf16.mxu0 %v2351
    %2679 = vmatpush1.bf16.msra.mxu0 %v2350
    %2680 = vmatprep.subr.bf16.mxu0 %v2347
    %2681 = vmatpush1.bf16.msra.mxu0 %v2346
    %2682 = vmatprep.subr.bf16.mxu0 %v2343
    %2683 = vmatpush1.bf16.msra.mxu0 %v2342
    %2684 = vmatprep.subr.bf16.mxu0 %v2339
    %2685 = vmatpush1.bf16.msra.mxu0 %v2338
    %2686 = vmatprep.subr.bf16.mxu0 %v2335
    %2687 = vmatpush1.bf16.msra.mxu0 %v2334
    %2688 = vmatprep.subr.bf16.mxu0 %v2395
    %2689 = vmatpush2.bf16.msra.mxu0 %v2394
    %2690 = vmatprep.subr.bf16.mxu0 %v2391
    %2691 = vmatpush2.bf16.msra.mxu0 %v2390
    %2692 = vmatprep.subr.bf16.mxu0 %v2387
    %2693 = vmatpush2.bf16.msra.mxu0 %v2386
    %2694 = vmatprep.subr.bf16.mxu0 %v2383
    %2695 = vmatpush2.bf16.msra.mxu0 %v2382
    %2696 = vmatprep.subr.bf16.mxu0 %v2379
    %2697 = vmatpush2.bf16.msra.mxu0 %v2378
    %2698 = vmatprep.subr.bf16.mxu0 %v2375
    %2699 = vmatpush2.bf16.msra.mxu0 %v2374
    %2700 = vmatprep.subr.bf16.mxu0 %v2371
    %2701 = vmatpush2.bf16.msra.mxu0 %v2370
    %2702 = vmatprep.subr.bf16.mxu0 %v2367
    %2703 = vmatpush2.bf16.msra.mxu0 %v2366
    %2704 = vmatprep.mubr.bf16.mxu0 %v1606
    %2705 = vmatmul.mubr.bf16.gmra.mxu0 %v1605
    %v2706 = vpop.f32.mrf.mxu0
    %v2707 = vadd.f32 %v2666, %v2706
    %v2708 = vpop.f32.mrf.mxu0
    %v2709 = vadd.f32 %v2668, %v2708
    %v2710 = vpop.f32.mrf.mxu0
    %v2711 = vpop.f32.mrf.mxu0
    %2712 = vdwg.mxu0
    %2713 = vmatprep.subr.bf16.mxu0 %v2237
    %2714 = vmatpush1.bf16.msra.mxu0 %v2236
    %2715 = vmatprep.subr.bf16.mxu0 %v2233
    %2716 = vmatpush1.bf16.msra.mxu0 %v2232
    %2717 = vmatprep.subr.bf16.mxu0 %v2229
    %2718 = vmatpush1.bf16.msra.mxu0 %v2228
    %2719 = vmatprep.subr.bf16.mxu0 %v2225
    %2720 = vmatpush1.bf16.msra.mxu0 %v2224
    %2721 = vmatprep.subr.bf16.mxu0 %v2221
    %2722 = vmatpush1.bf16.msra.mxu0 %v2220
    %2723 = vmatprep.subr.bf16.mxu0 %v2217
    %2724 = vmatpush1.bf16.msra.mxu0 %v2216
    %2725 = vmatprep.subr.bf16.mxu0 %v2213
    %2726 = vmatpush1.bf16.msra.mxu0 %v2212
    %2727 = vmatprep.subr.bf16.mxu0 %v2209
    %2728 = vmatpush1.bf16.msra.mxu0 %v2208
    %2729 = vmatprep.subr.bf16.mxu0 %v2269
    %2730 = vmatpush2.bf16.msra.mxu0 %v2268
    %2731 = vmatprep.subr.bf16.mxu0 %v2265
    %2732 = vmatpush2.bf16.msra.mxu0 %v2264
    %2733 = vmatprep.subr.bf16.mxu0 %v2261
    %2734 = vmatpush2.bf16.msra.mxu0 %v2260
    %2735 = vmatprep.subr.bf16.mxu0 %v2257
    %2736 = vmatpush2.bf16.msra.mxu0 %v2256
    %2737 = vmatprep.subr.bf16.mxu0 %v2253
    %2738 = vmatpush2.bf16.msra.mxu0 %v2252
    %2739 = vmatprep.subr.bf16.mxu0 %v2249
    %2740 = vmatpush2.bf16.msra.mxu0 %v2248
    %2741 = vmatprep.subr.bf16.mxu0 %v2245
    %2742 = vmatpush2.bf16.msra.mxu0 %v2244
    %2743 = vmatprep.subr.bf16.mxu0 %v2241
    %2744 = vmatpush2.bf16.msra.mxu0 %v2240
    %2745 = vmatprep.mubr.bf16.mxu0 %v1602
    %2746 = vmatmul.mubr.bf16.gmra.mxu0 %v1601
    %v2747 = vpop.f32.mrf.mxu0
    %v2748 = vadd.f32 %v1621, %v2747
    %v2749 = vpop.f32.mrf.mxu0
    %v2750 = vadd.f32 %v1625, %v2749
    %v2751 = vpop.f32.mrf.mxu0
    %v2752 = vpop.f32.mrf.mxu0
    %2753 = vdwg.mxu0
    %2754 = vmatprep.subr.bf16.mxu0 %v2301
    %2755 = vmatpush1.bf16.msra.mxu0 %v2300
    %2756 = vmatprep.subr.bf16.mxu0 %v2297
    %2757 = vmatpush1.bf16.msra.mxu0 %v2296
    %2758 = vmatprep.subr.bf16.mxu0 %v2293
    %2759 = vmatpush1.bf16.msra.mxu0 %v2292
    %2760 = vmatprep.subr.bf16.mxu0 %v2289
    %2761 = vmatpush1.bf16.msra.mxu0 %v2288
    %2762 = vmatprep.subr.bf16.mxu0 %v2285
    %2763 = vmatpush1.bf16.msra.mxu0 %v2284
    %2764 = vmatprep.subr.bf16.mxu0 %v2281
    %2765 = vmatpush1.bf16.msra.mxu0 %v2280
    %2766 = vmatprep.subr.bf16.mxu0 %v2277
    %2767 = vmatpush1.bf16.msra.mxu0 %v2276
    %2768 = vmatprep.subr.bf16.mxu0 %v2273
    %2769 = vmatpush1.bf16.msra.mxu0 %v2272
    %2770 = vmatprep.subr.bf16.mxu0 %v2333
    %2771 = vmatpush2.bf16.msra.mxu0 %v2332
    %2772 = vmatprep.subr.bf16.mxu0 %v2329
    %2773 = vmatpush2.bf16.msra.mxu0 %v2328
    %2774 = vmatprep.subr.bf16.mxu0 %v2325
    %2775 = vmatpush2.bf16.msra.mxu0 %v2324
    %2776 = vmatprep.subr.bf16.mxu0 %v2321
    %2777 = vmatpush2.bf16.msra.mxu0 %v2320
    %2778 = vmatprep.subr.bf16.mxu0 %v2317
    %2779 = vmatpush2.bf16.msra.mxu0 %v2316
    %2780 = vmatprep.subr.bf16.mxu0 %v2313
    %2781 = vmatpush2.bf16.msra.mxu0 %v2312
    %2782 = vmatprep.subr.bf16.mxu0 %v2309
    %2783 = vmatpush2.bf16.msra.mxu0 %v2308
    %2784 = vmatprep.subr.bf16.mxu0 %v2305
    %2785 = vmatpush2.bf16.msra.mxu0 %v2304
    %2786 = vmatprep.mubr.bf16.mxu0 %v1604
    %2787 = vmatmul.mubr.bf16.gmra.mxu0 %v1603
    %v2788 = vpop.f32.mrf.mxu0
    %v2789 = vadd.f32 %v2748, %v2788
    %v2790 = vpop.f32.mrf.mxu0
    %v2791 = vadd.f32 %v2750, %v2790
    %v2792 = vpop.f32.mrf.mxu0
    %v2793 = vpop.f32.mrf.mxu0
    %2794 = vdwg.mxu0
    %2795 = vmatprep.subr.bf16.mxu0 %v2365
    %2796 = vmatpush1.bf16.msra.mxu0 %v2364
    %2797 = vmatprep.subr.bf16.mxu0 %v2361
    %2798 = vmatpush1.bf16.msra.mxu0 %v2360
    %2799 = vmatprep.subr.bf16.mxu0 %v2357
    %2800 = vmatpush1.bf16.msra.mxu0 %v2356
    %2801 = vmatprep.subr.bf16.mxu0 %v2353
    %2802 = vmatpush1.bf16.msra.mxu0 %v2352
    %2803 = vmatprep.subr.bf16.mxu0 %v2349
    %2804 = vmatpush1.bf16.msra.mxu0 %v2348
    %2805 = vmatprep.subr.bf16.mxu0 %v2345
    %2806 = vmatpush1.bf16.msra.mxu0 %v2344
    %2807 = vmatprep.subr.bf16.mxu0 %v2341
    %2808 = vmatpush1.bf16.msra.mxu0 %v2340
    %2809 = vmatprep.subr.bf16.mxu0 %v2337
    %2810 = vmatpush1.bf16.msra.mxu0 %v2336
    %2811 = vmatprep.subr.bf16.mxu0 %v2397
    %2812 = vmatpush2.bf16.msra.mxu0 %v2396
    %2813 = vmatprep.subr.bf16.mxu0 %v2393
    %2814 = vmatpush2.bf16.msra.mxu0 %v2392
    %2815 = vmatprep.subr.bf16.mxu0 %v2389
    %2816 = vmatpush2.bf16.msra.mxu0 %v2388
    %2817 = vmatprep.subr.bf16.mxu0 %v2385
    %2818 = vmatpush2.bf16.msra.mxu0 %v2384
    %2819 = vmatprep.subr.bf16.mxu0 %v2381
    %2820 = vmatpush2.bf16.msra.mxu0 %v2380
    %2821 = vmatprep.subr.bf16.mxu0 %v2377
    %2822 = vmatpush2.bf16.msra.mxu0 %v2376
    %2823 = vmatprep.subr.bf16.mxu0 %v2373
    %2824 = vmatpush2.bf16.msra.mxu0 %v2372
    %2825 = vmatprep.subr.bf16.mxu0 %v2369
    %2826 = vmatpush2.bf16.msra.mxu0 %v2368
    %2827 = vmatprep.mubr.bf16.mxu0 %v1606
    %2828 = vmatmul.mubr.bf16.gmra.mxu0 %v1605
    %v2829 = vpop.f32.mrf.mxu0
    %v2830 = vadd.f32 %v2789, %v2829
    %v2831 = vpop.f32.mrf.mxu0
    %v2832 = vadd.f32 %v2791, %v2831
    %v2833 = vpop.f32.mrf.mxu0
    %v2834 = vpop.f32.mrf.mxu0
    %2835 = vdwg.mxu0
    %v2836 = vmax.f32 %v2707, 0.0
    %v2837 = vmax.f32 %v2709, 0.0
    %v2838 = vmax.f32 %v2830, 0.0
    %v2839 = vmax.f32 %v2832, 0.0
    %v2840 = vld [vmem:[%s3] sm:$0x3]
    %v2841 = vld [vmem:[%s6 + $0x140] sm:$0xf]
    %v2842 = vld [vmem:[%s6 + $0x144] sm:$0xf]
    %v2843 = vpack.c.bf16 %v2840, %v2840
    %v2844 = vld [vmem:[#allocation9 + $0x1b] ss:$0 sm:$0xff]
    %v2847 = vunpack.c.l.b16 %v2841
    %v2848 = vunpack.c.l.b16 %v2842
    %v2849 = vpack.c.b16 %v2848, %v2847
    %2850 = vrot.lane.b32.xlu0 %v2849, 64
    %v2851 = vpop.permute.xlu0 %2850
    %vm2853 = vcmask 130048
    %v2855 = vsel %vm2853, %v2843, 0
    %2857 = vmatprep.subr.bf16.mxu0 0
    %2858 = vmatpush1.bf16.msra.mxu0 0
    %2859 = vmatprep.subr.bf16.mxu0 0
    %2860 = vmatpush1.bf16.msra.mxu0 0
    %2861 = vmatprep.subr.bf16.mxu0 0
    %2862 = vmatpush1.bf16.msra.mxu0 0
    %2863 = vmatprep.subr.bf16.mxu0 0
    %2864 = vmatpush1.bf16.msra.mxu0 0
    %2865 = vmatprep.subr.bf16.mxu0 0
    %2866 = vmatpush1.bf16.msra.mxu0 0
    %2867 = vmatprep.subr.bf16.mxu0 0
    %2868 = vmatpush1.bf16.msra.mxu0 0
    %2869 = vmatprep.subr.bf16.mxu0 0
    %2870 = vmatpush1.bf16.msra.mxu0 0
    %2871 = vmatprep.subr.bf16.mxu0 0
    %2872 = vmatpush1.bf16.msra.mxu0 %v2851
    %2873 = vmatprep.subr.bf16.mxu0 0
    %2874 = vmatpush2.bf16.msra.mxu0 0
    %2875 = vmatprep.subr.bf16.mxu0 0
    %2876 = vmatpush2.bf16.msra.mxu0 0
    %2877 = vmatprep.subr.bf16.mxu0 0
    %2878 = vmatpush2.bf16.msra.mxu0 0
    %2879 = vmatprep.subr.bf16.mxu0 0
    %2880 = vmatpush2.bf16.msra.mxu0 0
    %2881 = vmatprep.subr.bf16.mxu0 0
    %2882 = vmatpush2.bf16.msra.mxu0 0
    %2883 = vmatprep.subr.bf16.mxu0 0
    %2884 = vmatpush2.bf16.msra.mxu0 0
    %2885 = vmatprep.subr.bf16.mxu0 0
    %2886 = vmatpush2.bf16.msra.mxu0 0
    %2887 = vmatprep.subr.bf16.mxu0 0
    %2888 = vmatpush2.bf16.msra.mxu0 0
    %2889 = vmatprep.mubr.bf16.mxu0 0
    %2890 = vmatmul.mubr.bf16.gmra.mxu0 %v2855
    %v2891 = vpop.f32.mrf.mxu0
    %v2892 = vadd.f32 %v2844, %v2891
    %v2893 = vpop.f32.mrf.mxu0
    %v2894 = vpop.f32.mrf.mxu0
    %v2895 = vpop.f32.mrf.mxu0
    %2896 = vdwg.mxu0
    %v2897 = vmax.f32 %v2892, 0.0
    %v2898 = vld [vmem:[%s6 + $0x180] sm:$0xf]
    %v2899 = vld [vmem:[%s6 + $0x184] sm:$0xf]
    %v2900 = vld [vmem:[%s6 + $0x188] sm:$0xf]
    %v2901 = vld [vmem:[%s6 + $0x18c] sm:$0xf]
    %v2902 = vld [vmem:[%s6 + $0x190] sm:$0xf]
    %v2903 = vld [vmem:[%s6 + $0x194] sm:$0xf]
    %v2904 = vld [vmem:[%s6 + $0x198] sm:$0xf]
    %v2905 = vld [vmem:[%s6 + $0x19c] sm:$0xf]
    %v2906 = vpack.c.bf16 %v2897, %v2897
    %v2907 = vld [vmem:[#allocation9 + $0x13] ss:$0 sm:$0xff]
    %v2916 = vunpack.c.l.b16 %v2898
    %v2917 = vunpack.c.l.b16 %v2899
    %v2918 = vunpack.c.l.b16 %v2900
    %v2919 = vunpack.c.l.b16 %v2901
    %v2920 = vunpack.c.l.b16 %v2902
    %v2921 = vunpack.c.l.b16 %v2903
    %v2922 = vunpack.c.l.b16 %v2904
    %v2923 = vunpack.c.l.b16 %v2905
    %v2924 = vpack.c.b16 %v2917, %v2916
    %v2925 = vpack.c.b16 %v2919, %v2918
    %v2926 = vpack.c.b16 %v2921, %v2920
    %v2927 = vpack.c.b16 %v2923, %v2922
    %v2933 = vsel %vm759, %v2906, 0
    %2935 = vmatprep.subr.bf16.mxu0 0
    %2936 = vmatpush1.bf16.msra.mxu0 0
    %2937 = vmatprep.subr.bf16.mxu0 0
    %2938 = vmatpush1.bf16.msra.mxu0 0
    %2939 = vmatprep.subr.bf16.mxu0 0
    %2940 = vmatpush1.bf16.msra.mxu0 0
    %2941 = vmatprep.subr.bf16.mxu0 0
    %2942 = vmatpush1.bf16.msra.mxu0 0
    %2943 = vmatprep.subr.bf16.mxu0 0
    %2944 = vmatpush1.bf16.msra.mxu0 %v2927
    %2945 = vmatprep.subr.bf16.mxu0 0
    %2946 = vmatpush1.bf16.msra.mxu0 %v2926
    %2947 = vmatprep.subr.bf16.mxu0 0
    %2948 = vmatpush1.bf16.msra.mxu0 %v2925
    %2949 = vmatprep.subr.bf16.mxu0 0
    %2950 = vmatpush1.bf16.msra.mxu0 %v2924
    %2951 = vmatprep.subr.bf16.mxu0 0
    %2952 = vmatpush2.bf16.msra.mxu0 0
    %2953 = vmatprep.subr.bf16.mxu0 0
    %2954 = vmatpush2.bf16.msra.mxu0 0
    %2955 = vmatprep.subr.bf16.mxu0 0
    %2956 = vmatpush2.bf16.msra.mxu0 0
    %2957 = vmatprep.subr.bf16.mxu0 0
    %2958 = vmatpush2.bf16.msra.mxu0 0
    %2959 = vmatprep.subr.bf16.mxu0 0
    %2960 = vmatpush2.bf16.msra.mxu0 0
    %2961 = vmatprep.subr.bf16.mxu0 0
    %2962 = vmatpush2.bf16.msra.mxu0 0
    %2963 = vmatprep.subr.bf16.mxu0 0
    %2964 = vmatpush2.bf16.msra.mxu0 0
    %2965 = vmatprep.subr.bf16.mxu0 0
    %2966 = vmatpush2.bf16.msra.mxu0 0
    %2967 = vmatprep.mubr.bf16.mxu0 0
    %2968 = vmatmul.mubr.bf16.gmra.mxu0 %v2933
    %v2969 = vpop.f32.mrf.mxu0
    %v2970 = vadd.f32 %v2907, %v2969
    %v2971 = vpop.f32.mrf.mxu0
    %v2972 = vpop.f32.mrf.mxu0
    %v2973 = vpop.f32.mrf.mxu0
    %2974 = vdwg.mxu0
    %v2975 = vmax.f32 %v2970, 0.0
    %s2976 = smul.u32 4, 208
    %s2977 = smul.u32 %s2976, 2
    %s2978 = sshll.u32 %s2977, 4
    %2979 = dma.done [#allocation3], %s2978
    %v2980 = vld [vmem:[#allocation2] sm:$0xff]
    %v2981 = vld [vmem:[#allocation2 + $0x8] sm:$0xff]
    %v2982 = vld [vmem:[#allocation2 + $0x10] sm:$0xff]
    %v2983 = vld [vmem:[#allocation2 + $0x18] sm:$0xff]
    %v2984 = vld [vmem:[#allocation2 + $0x20] sm:$0xff]
    %v2985 = vld [vmem:[#allocation2 + $0x28] sm:$0xff]
    %v2986 = vld [vmem:[#allocation2 + $0x30] sm:$0xff]
    %v2987 = vld [vmem:[#allocation2 + $0x38] sm:$0xff]
    %v2988 = vld [vmem:[#allocation2 + $0x40] sm:$0xff]
    %v2989 = vld [vmem:[#allocation2 + $0x48] sm:$0xff]
    %v2990 = vld [vmem:[#allocation2 + $0x50] sm:$0xff]
    %v2991 = vld [vmem:[#allocation2 + $0x58] sm:$0xff]
    %v2992 = vld [vmem:[#allocation2 + $0x60] sm:$0xff]
    %v2993 = vld [vmem:[#allocation2 + $0x68] sm:$0xff]
    %v2994 = vld [vmem:[#allocation2 + $0x70] sm:$0xff]
    %v2995 = vld [vmem:[#allocation2 + $0x78] sm:$0xff]
    %v2996 = vld [vmem:[#allocation2 + $0x80] sm:$0xff]
    %v2997 = vld [vmem:[#allocation2 + $0x88] sm:$0xff]
    %v2998 = vld [vmem:[#allocation2 + $0x90] sm:$0xff]
    %v2999 = vld [vmem:[#allocation2 + $0x98] sm:$0xff]
    %v3000 = vld [vmem:[#allocation2 + $0xa0] sm:$0xff]
    %v3001 = vld [vmem:[#allocation2 + $0xa8] sm:$0xff]
    %v3002 = vld [vmem:[#allocation2 + $0xb0] sm:$0xff]
    %v3003 = vld [vmem:[#allocation2 + $0xb8] sm:$0xff]
    %v3004 = vld [vmem:[#allocation2 + $0xc0] sm:$0xff]
    %v3005 = vld [vmem:[#allocation2 + $0xc8] sm:$0xff]
    %v3006 = vld [vmem:[#allocation2 + $0xd0] sm:$0xff]
    %v3007 = vld [vmem:[#allocation2 + $0xd8] sm:$0xff]
    %v3008 = vld [vmem:[#allocation2 + $0xe0] sm:$0xff]
    %v3009 = vld [vmem:[#allocation2 + $0xe8] sm:$0xff]
    %v3010 = vld [vmem:[#allocation2 + $0xf0] sm:$0xff]
    %v3011 = vld [vmem:[#allocation2 + $0xf8] sm:$0xff]
    %v3012 = vld [vmem:[#allocation2 + $0x100] sm:$0xff]
    %v3013 = vld [vmem:[#allocation2 + $0x108] sm:$0xff]
    %v3014 = vld [vmem:[#allocation2 + $0x110] sm:$0xff]
    %v3015 = vld [vmem:[#allocation2 + $0x118] sm:$0xff]
    %v3016 = vld [vmem:[#allocation2 + $0x120] sm:$0xff]
    %v3017 = vld [vmem:[#allocation2 + $0x128] sm:$0xff]
    %v3018 = vld [vmem:[#allocation2 + $0x130] sm:$0xff]
    %v3019 = vld [vmem:[#allocation2 + $0x138] sm:$0xff]
    %v3020 = vld [vmem:[#allocation2 + $0x140] sm:$0xff]
    %v3021 = vld [vmem:[#allocation2 + $0x148] sm:$0xff]
    %v3022 = vld [vmem:[#allocation2 + $0x150] sm:$0xff]
    %v3023 = vld [vmem:[#allocation2 + $0x158] sm:$0xff]
    %v3024 = vld [vmem:[#allocation2 + $0x160] sm:$0xff]
    %v3025 = vld [vmem:[#allocation2 + $0x168] sm:$0xff]
    %v3026 = vld [vmem:[#allocation2 + $0x170] sm:$0xff]
    %v3027 = vld [vmem:[#allocation2 + $0x178] sm:$0xff]
    %v3028 = vld [vmem:[#allocation2 + $0x180] sm:$0xff]
    %v3029 = vld [vmem:[#allocation2 + $0x188] sm:$0xff]
    %v3030 = vld [vmem:[#allocation2 + $0x190] sm:$0xff]
    %v3031 = vld [vmem:[#allocation2 + $0x198] sm:$0xff]
    %v3032 = vld [vmem:[#allocation2 + $0x1a0] sm:$0xff]
    %v3033 = vld [vmem:[#allocation2 + $0x1a8] sm:$0xff]
    %v3034 = vld [vmem:[#allocation2 + $0x1b0] sm:$0xff]
    %v3035 = vld [vmem:[#allocation2 + $0x1b8] sm:$0xff]
    %v3036 = vld [vmem:[#allocation2 + $0x1c0] sm:$0xff]
    %v3037 = vld [vmem:[#allocation2 + $0x1c8] sm:$0xff]
    %v3038 = vld [vmem:[#allocation2 + $0x1d0] sm:$0xff]
    %v3039 = vld [vmem:[#allocation2 + $0x1d8] sm:$0xff]
    %v3040 = vld [vmem:[#allocation2 + $0x1e0] sm:$0xff]
    %v3041 = vld [vmem:[#allocation2 + $0x1e8] sm:$0xff]
    %v3042 = vld [vmem:[#allocation2 + $0x1f0] sm:$0xff]
    %v3043 = vld [vmem:[#allocation2 + $0x1f8] sm:$0xff]
    %v3044 = vpack.c.bf16 %v845, %v845
    %v3045 = vpack.c.bf16 %v846, %v846
    %v3046 = vpack.c.bf16 %v847, %v847
    %v3047 = vpack.c.bf16 %v848, %v848
    %s3048 = scalar_lea.vmem [#allocation9], 34
    %v3049 = vld [vmem:[%s3048] ss:$8 sm:$0x3]
    %v3051 = vlaneseq
    %v3052 = vshrl.u32 %v3051, 7
    %v3053 = vsub.s32 0, %v3052
    %v3054 = vrot.slane %v3049, %v3053
    %v3055 = vlaneseq
    %v3056 = vshrl.u32 %v3055, 7
    %v3057 = vsub.s32 1, %v3056
    %v3058 = vrot.slane %v3049, %v3057
    %v3125 = vunpack.c.l.b16 %v2980
    %v3126 = vunpack.c.h.b16 %v2980
    %v3127 = vunpack.c.l.b16 %v2981
    %v3128 = vunpack.c.h.b16 %v2981
    %v3129 = vunpack.c.l.b16 %v2982
    %v3130 = vunpack.c.h.b16 %v2982
    %v3131 = vunpack.c.l.b16 %v2983
    %v3132 = vunpack.c.h.b16 %v2983
    %v3133 = vunpack.c.l.b16 %v2984
    %v3134 = vunpack.c.h.b16 %v2984
    %v3135 = vunpack.c.l.b16 %v2985
    %v3136 = vunpack.c.h.b16 %v2985
    %v3137 = vunpack.c.l.b16 %v2986
    %v3138 = vunpack.c.h.b16 %v2986
    %v3139 = vunpack.c.l.b16 %v2987
    %v3140 = vunpack.c.h.b16 %v2987
    %v3141 = vunpack.c.l.b16 %v2988
    %v3142 = vunpack.c.h.b16 %v2988
    %v3143 = vunpack.c.l.b16 %v2989
    %v3144 = vunpack.c.h.b16 %v2989
    %v3145 = vunpack.c.l.b16 %v2990
    %v3146 = vunpack.c.h.b16 %v2990
    %v3147 = vunpack.c.l.b16 %v2991
    %v3148 = vunpack.c.h.b16 %v2991
    %v3149 = vunpack.c.l.b16 %v2992
    %v3150 = vunpack.c.h.b16 %v2992
    %v3151 = vunpack.c.l.b16 %v2993
    %v3152 = vunpack.c.h.b16 %v2993
    %v3153 = vunpack.c.l.b16 %v2994
    %v3154 = vunpack.c.h.b16 %v2994
    %v3155 = vunpack.c.l.b16 %v2995
    %v3156 = vunpack.c.h.b16 %v2995
    %v3157 = vunpack.c.l.b16 %v2996
    %v3158 = vunpack.c.h.b16 %v2996
    %v3159 = vunpack.c.l.b16 %v2997
    %v3160 = vunpack.c.h.b16 %v2997
    %v3161 = vunpack.c.l.b16 %v2998
    %v3162 = vunpack.c.h.b16 %v2998
    %v3163 = vunpack.c.l.b16 %v2999
    %v3164 = vunpack.c.h.b16 %v2999
    %v3165 = vunpack.c.l.b16 %v3000
    %v3166 = vunpack.c.h.b16 %v3000
    %v3167 = vunpack.c.l.b16 %v3001
    %v3168 = vunpack.c.h.b16 %v3001
    %v3169 = vunpack.c.l.b16 %v3002
    %v3170 = vunpack.c.h.b16 %v3002
    %v3171 = vunpack.c.l.b16 %v3003
    %v3172 = vunpack.c.h.b16 %v3003
    %v3173 = vunpack.c.l.b16 %v3004
    %v3174 = vunpack.c.h.b16 %v3004
    %v3175 = vunpack.c.l.b16 %v3005
    %v3176 = vunpack.c.h.b16 %v3005
    %v3177 = vunpack.c.l.b16 %v3006
    %v3178 = vunpack.c.h.b16 %v3006
    %v3179 = vunpack.c.l.b16 %v3007
    %v3180 = vunpack.c.h.b16 %v3007
    %v3181 = vunpack.c.l.b16 %v3008
    %v3182 = vunpack.c.h.b16 %v3008
    %v3183 = vunpack.c.l.b16 %v3009
    %v3184 = vunpack.c.h.b16 %v3009
    %v3185 = vunpack.c.l.b16 %v3010
    %v3186 = vunpack.c.h.b16 %v3010
    %v3187 = vunpack.c.l.b16 %v3011
    %v3188 = vunpack.c.h.b16 %v3011
    %v3189 = vunpack.c.l.b16 %v3012
    %v3190 = vunpack.c.h.b16 %v3012
    %v3191 = vunpack.c.l.b16 %v3013
    %v3192 = vunpack.c.h.b16 %v3013
    %v3193 = vunpack.c.l.b16 %v3014
    %v3194 = vunpack.c.h.b16 %v3014
    %v3195 = vunpack.c.l.b16 %v3015
    %v3196 = vunpack.c.h.b16 %v3015
    %v3197 = vunpack.c.l.b16 %v3016
    %v3198 = vunpack.c.h.b16 %v3016
    %v3199 = vunpack.c.l.b16 %v3017
    %v3200 = vunpack.c.h.b16 %v3017
    %v3201 = vunpack.c.l.b16 %v3018
    %v3202 = vunpack.c.h.b16 %v3018
    %v3203 = vunpack.c.l.b16 %v3019
    %v3204 = vunpack.c.h.b16 %v3019
    %v3205 = vunpack.c.l.b16 %v3020
    %v3206 = vunpack.c.h.b16 %v3020
    %v3207 = vunpack.c.l.b16 %v3021
    %v3208 = vunpack.c.h.b16 %v3021
    %v3209 = vunpack.c.l.b16 %v3022
    %v3210 = vunpack.c.h.b16 %v3022
    %v3211 = vunpack.c.l.b16 %v3023
    %v3212 = vunpack.c.h.b16 %v3023
    %v3213 = vunpack.c.l.b16 %v3024
    %v3214 = vunpack.c.h.b16 %v3024
    %v3215 = vunpack.c.l.b16 %v3025
    %v3216 = vunpack.c.h.b16 %v3025
    %v3217 = vunpack.c.l.b16 %v3026
    %v3218 = vunpack.c.h.b16 %v3026
    %v3219 = vunpack.c.l.b16 %v3027
    %v3220 = vunpack.c.h.b16 %v3027
    %v3221 = vunpack.c.l.b16 %v3028
    %v3222 = vunpack.c.h.b16 %v3028
    %v3223 = vunpack.c.l.b16 %v3029
    %v3224 = vunpack.c.h.b16 %v3029
    %v3225 = vunpack.c.l.b16 %v3030
    %v3226 = vunpack.c.h.b16 %v3030
    %v3227 = vunpack.c.l.b16 %v3031
    %v3228 = vunpack.c.h.b16 %v3031
    %v3229 = vunpack.c.l.b16 %v3032
    %v3230 = vunpack.c.h.b16 %v3032
    %v3231 = vunpack.c.l.b16 %v3033
    %v3232 = vunpack.c.h.b16 %v3033
    %v3233 = vunpack.c.l.b16 %v3034
    %v3234 = vunpack.c.h.b16 %v3034
    %v3235 = vunpack.c.l.b16 %v3035
    %v3236 = vunpack.c.h.b16 %v3035
    %v3237 = vunpack.c.l.b16 %v3036
    %v3238 = vunpack.c.h.b16 %v3036
    %v3239 = vunpack.c.l.b16 %v3037
    %v3240 = vunpack.c.h.b16 %v3037
    %v3241 = vunpack.c.l.b16 %v3038
    %v3242 = vunpack.c.h.b16 %v3038
    %v3243 = vunpack.c.l.b16 %v3039
    %v3244 = vunpack.c.h.b16 %v3039
    %v3245 = vunpack.c.l.b16 %v3040
    %v3246 = vunpack.c.h.b16 %v3040
    %v3247 = vunpack.c.l.b16 %v3041
    %v3248 = vunpack.c.h.b16 %v3041
    %v3249 = vunpack.c.l.b16 %v3042
    %v3250 = vunpack.c.h.b16 %v3042
    %v3251 = vunpack.c.l.b16 %v3043
    %v3252 = vunpack.c.h.b16 %v3043
    %v3253 = vpack.c.b16 %v3127, %v3125
    %v3254 = vpack.c.b16 %v3128, %v3126
    %v3255 = vpack.c.b16 %v3131, %v3129
    %v3256 = vpack.c.b16 %v3132, %v3130
    %v3257 = vpack.c.b16 %v3135, %v3133
    %v3258 = vpack.c.b16 %v3136, %v3134
    %v3259 = vpack.c.b16 %v3139, %v3137
    %v3260 = vpack.c.b16 %v3140, %v3138
    %v3261 = vpack.c.b16 %v3143, %v3141
    %v3262 = vpack.c.b16 %v3144, %v3142
    %v3263 = vpack.c.b16 %v3147, %v3145
    %v3264 = vpack.c.b16 %v3148, %v3146
    %v3265 = vpack.c.b16 %v3151, %v3149
    %v3266 = vpack.c.b16 %v3152, %v3150
    %v3267 = vpack.c.b16 %v3155, %v3153
    %v3268 = vpack.c.b16 %v3156, %v3154
    %v3269 = vpack.c.b16 %v3159, %v3157
    %v3270 = vpack.c.b16 %v3160, %v3158
    %v3271 = vpack.c.b16 %v3163, %v3161
    %v3272 = vpack.c.b16 %v3164, %v3162
    %v3273 = vpack.c.b16 %v3167, %v3165
    %v3274 = vpack.c.b16 %v3168, %v3166
    %v3275 = vpack.c.b16 %v3171, %v3169
    %v3276 = vpack.c.b16 %v3172, %v3170
    %v3277 = vpack.c.b16 %v3175, %v3173
    %v3278 = vpack.c.b16 %v3176, %v3174
    %v3279 = vpack.c.b16 %v3179, %v3177
    %v3280 = vpack.c.b16 %v3180, %v3178
    %v3281 = vpack.c.b16 %v3183, %v3181
    %v3282 = vpack.c.b16 %v3184, %v3182
    %v3283 = vpack.c.b16 %v3187, %v3185
    %v3284 = vpack.c.b16 %v3188, %v3186
    %v3285 = vpack.c.b16 %v3191, %v3189
    %v3286 = vpack.c.b16 %v3192, %v3190
    %v3287 = vpack.c.b16 %v3195, %v3193
    %v3288 = vpack.c.b16 %v3196, %v3194
    %v3289 = vpack.c.b16 %v3199, %v3197
    %v3290 = vpack.c.b16 %v3200, %v3198
    %v3291 = vpack.c.b16 %v3203, %v3201
    %v3292 = vpack.c.b16 %v3204, %v3202
    %v3293 = vpack.c.b16 %v3207, %v3205
    %v3294 = vpack.c.b16 %v3208, %v3206
    %v3295 = vpack.c.b16 %v3211, %v3209
    %v3296 = vpack.c.b16 %v3212, %v3210
    %v3297 = vpack.c.b16 %v3215, %v3213
    %v3298 = vpack.c.b16 %v3216, %v3214
    %v3299 = vpack.c.b16 %v3219, %v3217
    %v3300 = vpack.c.b16 %v3220, %v3218
    %v3301 = vpack.c.b16 %v3223, %v3221
    %v3302 = vpack.c.b16 %v3224, %v3222
    %v3303 = vpack.c.b16 %v3227, %v3225
    %v3304 = vpack.c.b16 %v3228, %v3226
    %v3305 = vpack.c.b16 %v3231, %v3229
    %v3306 = vpack.c.b16 %v3232, %v3230
    %v3307 = vpack.c.b16 %v3235, %v3233
    %v3308 = vpack.c.b16 %v3236, %v3234
    %v3309 = vpack.c.b16 %v3239, %v3237
    %v3310 = vpack.c.b16 %v3240, %v3238
    %v3311 = vpack.c.b16 %v3243, %v3241
    %v3312 = vpack.c.b16 %v3244, %v3242
    %v3313 = vpack.c.b16 %v3247, %v3245
    %v3314 = vpack.c.b16 %v3248, %v3246
    %v3315 = vpack.c.b16 %v3251, %v3249
    %v3316 = vpack.c.b16 %v3252, %v3250
    %3381 = vmatprep.subr.bf16.mxu0 %v3268
    %3382 = vmatpush1.bf16.msra.mxu0 %v3267
    %3383 = vmatprep.subr.bf16.mxu0 %v3266
    %3384 = vmatpush1.bf16.msra.mxu0 %v3265
    %3385 = vmatprep.subr.bf16.mxu0 %v3264
    %3386 = vmatpush1.bf16.msra.mxu0 %v3263
    %3387 = vmatprep.subr.bf16.mxu0 %v3262
    %3388 = vmatpush1.bf16.msra.mxu0 %v3261
    %3389 = vmatprep.subr.bf16.mxu0 %v3260
    %3390 = vmatpush1.bf16.msra.mxu0 %v3259
    %3391 = vmatprep.subr.bf16.mxu0 %v3258
    %3392 = vmatpush1.bf16.msra.mxu0 %v3257
    %3393 = vmatprep.subr.bf16.mxu0 %v3256
    %3394 = vmatpush1.bf16.msra.mxu0 %v3255
    %3395 = vmatprep.subr.bf16.mxu0 %v3254
    %3396 = vmatpush1.bf16.msra.mxu0 %v3253
    %3397 = vmatprep.subr.bf16.mxu0 %v3284
    %3398 = vmatpush2.bf16.msra.mxu0 %v3283
    %3399 = vmatprep.subr.bf16.mxu0 %v3282
    %3400 = vmatpush2.bf16.msra.mxu0 %v3281
    %3401 = vmatprep.subr.bf16.mxu0 %v3280
    %3402 = vmatpush2.bf16.msra.mxu0 %v3279
    %3403 = vmatprep.subr.bf16.mxu0 %v3278
    %3404 = vmatpush2.bf16.msra.mxu0 %v3277
    %3405 = vmatprep.subr.bf16.mxu0 %v3276
    %3406 = vmatpush2.bf16.msra.mxu0 %v3275
    %3407 = vmatprep.subr.bf16.mxu0 %v3274
    %3408 = vmatpush2.bf16.msra.mxu0 %v3273
    %3409 = vmatprep.subr.bf16.mxu0 %v3272
    %3410 = vmatpush2.bf16.msra.mxu0 %v3271
    %3411 = vmatprep.subr.bf16.mxu0 %v3270
    %3412 = vmatpush2.bf16.msra.mxu0 %v3269
    %3413 = vmatprep.mubr.bf16.mxu0 %v3045
    %3414 = vmatmul.mubr.bf16.gmra.mxu0 %v3044
    %v3415 = vpop.f32.mrf.mxu0
    %v3416 = vadd.f32 %v3054, %v3415
    %v3417 = vpop.f32.mrf.mxu0
    %v3418 = vadd.f32 %v3058, %v3417
    %v3419 = vpop.f32.mrf.mxu0
    %v3420 = vpop.f32.mrf.mxu0
    %3421 = vdwg.mxu0
    %3422 = vmatprep.subr.bf16.mxu0 %v3300
    %3423 = vmatpush1.bf16.msra.mxu0 %v3299
    %3424 = vmatprep.subr.bf16.mxu0 %v3298
    %3425 = vmatpush1.bf16.msra.mxu0 %v3297
    %3426 = vmatprep.subr.bf16.mxu0 %v3296
    %3427 = vmatpush1.bf16.msra.mxu0 %v3295
    %3428 = vmatprep.subr.bf16.mxu0 %v3294
    %3429 = vmatpush1.bf16.msra.mxu0 %v3293
    %3430 = vmatprep.subr.bf16.mxu0 %v3292
    %3431 = vmatpush1.bf16.msra.mxu0 %v3291
    %3432 = vmatprep.subr.bf16.mxu0 %v3290
    %3433 = vmatpush1.bf16.msra.mxu0 %v3289
    %3434 = vmatprep.subr.bf16.mxu0 %v3288
    %3435 = vmatpush1.bf16.msra.mxu0 %v3287
    %3436 = vmatprep.subr.bf16.mxu0 %v3286
    %3437 = vmatpush1.bf16.msra.mxu0 %v3285
    %3438 = vmatprep.subr.bf16.mxu0 %v3316
    %3439 = vmatpush2.bf16.msra.mxu0 %v3315
    %3440 = vmatprep.subr.bf16.mxu0 %v3314
    %3441 = vmatpush2.bf16.msra.mxu0 %v3313
    %3442 = vmatprep.subr.bf16.mxu0 %v3312
    %3443 = vmatpush2.bf16.msra.mxu0 %v3311
    %3444 = vmatprep.subr.bf16.mxu0 %v3310
    %3445 = vmatpush2.bf16.msra.mxu0 %v3309
    %3446 = vmatprep.subr.bf16.mxu0 %v3308
    %3447 = vmatpush2.bf16.msra.mxu0 %v3307
    %3448 = vmatprep.subr.bf16.mxu0 %v3306
    %3449 = vmatpush2.bf16.msra.mxu0 %v3305
    %3450 = vmatprep.subr.bf16.mxu0 %v3304
    %3451 = vmatpush2.bf16.msra.mxu0 %v3303
    %3452 = vmatprep.subr.bf16.mxu0 %v3302
    %3453 = vmatpush2.bf16.msra.mxu0 %v3301
    %3454 = vmatprep.mubr.bf16.mxu0 %v3047
    %3455 = vmatmul.mubr.bf16.gmra.mxu0 %v3046
    %v3456 = vpop.f32.mrf.mxu0
    %v3457 = vadd.f32 %v3416, %v3456
    %v3458 = vpop.f32.mrf.mxu0
    %v3459 = vadd.f32 %v3418, %v3458
    %v3460 = vpop.f32.mrf.mxu0
    %v3461 = vpop.f32.mrf.mxu0
    %3462 = vdwg.mxu0
    %v3463 = vmax.f32 %v3457, 0.0
    %v3464 = vmax.f32 %v3459, 0.0
    %v3465 = vld [vmem:[#allocation2 + $0x200] sm:$0xff]
    %v3466 = vld [vmem:[#allocation2 + $0x208] sm:$0xff]
    %v3467 = vld [vmem:[#allocation2 + $0x210] sm:$0xff]
    %v3468 = vld [vmem:[#allocation2 + $0x218] sm:$0xff]
    %v3469 = vld [vmem:[#allocation2 + $0x220] sm:$0xff]
    %v3470 = vld [vmem:[#allocation2 + $0x228] sm:$0xff]
    %v3471 = vld [vmem:[#allocation2 + $0x230] sm:$0xff]
    %v3472 = vld [vmem:[#allocation2 + $0x238] sm:$0xff]
    %v3473 = vld [vmem:[#allocation2 + $0x240] sm:$0xff]
    %v3474 = vld [vmem:[#allocation2 + $0x248] sm:$0xff]
    %v3475 = vld [vmem:[#allocation2 + $0x250] sm:$0xff]
    %v3476 = vld [vmem:[#allocation2 + $0x258] sm:$0xff]
    %v3477 = vld [vmem:[#allocation2 + $0x260] sm:$0xff]
    %v3478 = vld [vmem:[#allocation2 + $0x268] sm:$0xff]
    %v3479 = vld [vmem:[#allocation2 + $0x270] sm:$0xff]
    %v3480 = vld [vmem:[#allocation2 + $0x278] sm:$0xff]
    %v3481 = vld [vmem:[#allocation2 + $0x280] sm:$0xff]
    %v3482 = vld [vmem:[#allocation2 + $0x288] sm:$0xff]
    %v3483 = vld [vmem:[#allocation2 + $0x290] sm:$0xff]
    %v3484 = vld [vmem:[#allocation2 + $0x298] sm:$0xff]
    %v3485 = vld [vmem:[#allocation2 + $0x2a0] sm:$0xff]
    %v3486 = vld [vmem:[#allocation2 + $0x2a8] sm:$0xff]
    %v3487 = vld [vmem:[#allocation2 + $0x2b0] sm:$0xff]
    %v3488 = vld [vmem:[#allocation2 + $0x2b8] sm:$0xff]
    %v3489 = vld [vmem:[#allocation2 + $0x2c0] sm:$0xff]
    %v3490 = vld [vmem:[#allocation2 + $0x2c8] sm:$0xff]
    %v3491 = vld [vmem:[#allocation2 + $0x2d0] sm:$0xff]
    %v3492 = vld [vmem:[#allocation2 + $0x2d8] sm:$0xff]
    %v3493 = vld [vmem:[#allocation2 + $0x2e0] sm:$0xff]
    %v3494 = vld [vmem:[#allocation2 + $0x2e8] sm:$0xff]
    %v3495 = vld [vmem:[#allocation2 + $0x2f0] sm:$0xff]
    %v3496 = vld [vmem:[#allocation2 + $0x2f8] sm:$0xff]
    %v3497 = vld [vmem:[#allocation2 + $0x300] sm:$0xff]
    %v3498 = vld [vmem:[#allocation2 + $0x308] sm:$0xff]
    %v3499 = vld [vmem:[#allocation2 + $0x310] sm:$0xff]
    %v3500 = vld [vmem:[#allocation2 + $0x318] sm:$0xff]
    %v3501 = vld [vmem:[#allocation2 + $0x320] sm:$0xff]
    %v3502 = vld [vmem:[#allocation2 + $0x328] sm:$0xff]
    %v3503 = vld [vmem:[#allocation2 + $0x330] sm:$0xff]
    %v3504 = vld [vmem:[#allocation2 + $0x338] sm:$0xff]
    %v3505 = vld [vmem:[#allocation2 + $0x340] sm:$0xff]
    %v3506 = vld [vmem:[#allocation2 + $0x348] sm:$0xff]
    %v3507 = vld [vmem:[#allocation2 + $0x350] sm:$0xff]
    %v3508 = vld [vmem:[#allocation2 + $0x358] sm:$0xff]
    %v3509 = vld [vmem:[#allocation2 + $0x360] sm:$0xff]
    %v3510 = vld [vmem:[#allocation2 + $0x368] sm:$0xff]
    %v3511 = vld [vmem:[#allocation2 + $0x370] sm:$0xff]
    %v3512 = vld [vmem:[#allocation2 + $0x378] sm:$0xff]
    %v3513 = vld [vmem:[#allocation2 + $0x380] sm:$0xff]
    %v3514 = vld [vmem:[#allocation2 + $0x388] sm:$0xff]
    %v3515 = vld [vmem:[#allocation2 + $0x390] sm:$0xff]
    %v3516 = vld [vmem:[#allocation2 + $0x398] sm:$0xff]
    %v3517 = vld [vmem:[#allocation2 + $0x3a0] sm:$0xff]
    %v3518 = vld [vmem:[#allocation2 + $0x3a8] sm:$0xff]
    %v3519 = vld [vmem:[#allocation2 + $0x3b0] sm:$0xff]
    %v3520 = vld [vmem:[#allocation2 + $0x3b8] sm:$0xff]
    %v3521 = vld [vmem:[#allocation2 + $0x3c0] sm:$0xff]
    %v3522 = vld [vmem:[#allocation2 + $0x3c8] sm:$0xff]
    %v3523 = vld [vmem:[#allocation2 + $0x3d0] sm:$0xff]
    %v3524 = vld [vmem:[#allocation2 + $0x3d8] sm:$0xff]
    %v3525 = vld [vmem:[#allocation2 + $0x3e0] sm:$0xff]
    %v3526 = vld [vmem:[#allocation2 + $0x3e8] sm:$0xff]
    %v3527 = vld [vmem:[#allocation2 + $0x3f0] sm:$0xff]
    %v3528 = vld [vmem:[#allocation2 + $0x3f8] sm:$0xff]
    %v3529 = vpack.c.bf16 %v2836, %v2836
    %v3530 = vpack.c.bf16 %v2837, %v2837
    %v3531 = vpack.c.bf16 %v2838, %v2838
    %v3532 = vpack.c.bf16 %v2839, %v2839
    %s3533 = scalar_lea.vmem [#allocation9], 33
    %v3534 = vld [vmem:[%s3533] ss:$8 sm:$0x3]
    %v3536 = vlaneseq
    %v3537 = vshrl.u32 %v3536, 7
    %v3538 = vsub.s32 0, %v3537
    %v3539 = vrot.slane %v3534, %v3538
    %v3540 = vlaneseq
    %v3541 = vshrl.u32 %v3540, 7
    %v3542 = vsub.s32 1, %v3541
    %v3543 = vrot.slane %v3534, %v3542
    %v3610 = vunpack.c.l.b16 %v3465
    %v3611 = vunpack.c.h.b16 %v3465
    %v3612 = vunpack.c.l.b16 %v3466
    %v3613 = vunpack.c.h.b16 %v3466
    %v3614 = vunpack.c.l.b16 %v3467
    %v3615 = vunpack.c.h.b16 %v3467
    %v3616 = vunpack.c.l.b16 %v3468
    %v3617 = vunpack.c.h.b16 %v3468
    %v3618 = vunpack.c.l.b16 %v3469
    %v3619 = vunpack.c.h.b16 %v3469
    %v3620 = vunpack.c.l.b16 %v3470
    %v3621 = vunpack.c.h.b16 %v3470
    %v3622 = vunpack.c.l.b16 %v3471
    %v3623 = vunpack.c.h.b16 %v3471
    %v3624 = vunpack.c.l.b16 %v3472
    %v3625 = vunpack.c.h.b16 %v3472
    %v3626 = vunpack.c.l.b16 %v3473
    %v3627 = vunpack.c.h.b16 %v3473
    %v3628 = vunpack.c.l.b16 %v3474
    %v3629 = vunpack.c.h.b16 %v3474
    %v3630 = vunpack.c.l.b16 %v3475
    %v3631 = vunpack.c.h.b16 %v3475
    %v3632 = vunpack.c.l.b16 %v3476
    %v3633 = vunpack.c.h.b16 %v3476
    %v3634 = vunpack.c.l.b16 %v3477
    %v3635 = vunpack.c.h.b16 %v3477
    %v3636 = vunpack.c.l.b16 %v3478
    %v3637 = vunpack.c.h.b16 %v3478
    %v3638 = vunpack.c.l.b16 %v3479
    %v3639 = vunpack.c.h.b16 %v3479
    %v3640 = vunpack.c.l.b16 %v3480
    %v3641 = vunpack.c.h.b16 %v3480
    %v3642 = vunpack.c.l.b16 %v3481
    %v3643 = vunpack.c.h.b16 %v3481
    %v3644 = vunpack.c.l.b16 %v3482
    %v3645 = vunpack.c.h.b16 %v3482
    %v3646 = vunpack.c.l.b16 %v3483
    %v3647 = vunpack.c.h.b16 %v3483
    %v3648 = vunpack.c.l.b16 %v3484
    %v3649 = vunpack.c.h.b16 %v3484
    %v3650 = vunpack.c.l.b16 %v3485
    %v3651 = vunpack.c.h.b16 %v3485
    %v3652 = vunpack.c.l.b16 %v3486
    %v3653 = vunpack.c.h.b16 %v3486
    %v3654 = vunpack.c.l.b16 %v3487
    %v3655 = vunpack.c.h.b16 %v3487
    %v3656 = vunpack.c.l.b16 %v3488
    %v3657 = vunpack.c.h.b16 %v3488
    %v3658 = vunpack.c.l.b16 %v3489
    %v3659 = vunpack.c.h.b16 %v3489
    %v3660 = vunpack.c.l.b16 %v3490
    %v3661 = vunpack.c.h.b16 %v3490
    %v3662 = vunpack.c.l.b16 %v3491
    %v3663 = vunpack.c.h.b16 %v3491
    %v3664 = vunpack.c.l.b16 %v3492
    %v3665 = vunpack.c.h.b16 %v3492
    %v3666 = vunpack.c.l.b16 %v3493
    %v3667 = vunpack.c.h.b16 %v3493
    %v3668 = vunpack.c.l.b16 %v3494
    %v3669 = vunpack.c.h.b16 %v3494
    %v3670 = vunpack.c.l.b16 %v3495
    %v3671 = vunpack.c.h.b16 %v3495
    %v3672 = vunpack.c.l.b16 %v3496
    %v3673 = vunpack.c.h.b16 %v3496
    %v3674 = vunpack.c.l.b16 %v3497
    %v3675 = vunpack.c.h.b16 %v3497
    %v3676 = vunpack.c.l.b16 %v3498
    %v3677 = vunpack.c.h.b16 %v3498
    %v3678 = vunpack.c.l.b16 %v3499
    %v3679 = vunpack.c.h.b16 %v3499
    %v3680 = vunpack.c.l.b16 %v3500
    %v3681 = vunpack.c.h.b16 %v3500
    %v3682 = vunpack.c.l.b16 %v3501
    %v3683 = vunpack.c.h.b16 %v3501
    %v3684 = vunpack.c.l.b16 %v3502
    %v3685 = vunpack.c.h.b16 %v3502
    %v3686 = vunpack.c.l.b16 %v3503
    %v3687 = vunpack.c.h.b16 %v3503
    %v3688 = vunpack.c.l.b16 %v3504
    %v3689 = vunpack.c.h.b16 %v3504
    %v3690 = vunpack.c.l.b16 %v3505
    %v3691 = vunpack.c.h.b16 %v3505
    %v3692 = vunpack.c.l.b16 %v3506
    %v3693 = vunpack.c.h.b16 %v3506
    %v3694 = vunpack.c.l.b16 %v3507
    %v3695 = vunpack.c.h.b16 %v3507
    %v3696 = vunpack.c.l.b16 %v3508
    %v3697 = vunpack.c.h.b16 %v3508
    %v3698 = vunpack.c.l.b16 %v3509
    %v3699 = vunpack.c.h.b16 %v3509
    %v3700 = vunpack.c.l.b16 %v3510
    %v3701 = vunpack.c.h.b16 %v3510
    %v3702 = vunpack.c.l.b16 %v3511
    %v3703 = vunpack.c.h.b16 %v3511
    %v3704 = vunpack.c.l.b16 %v3512
    %v3705 = vunpack.c.h.b16 %v3512
    %v3706 = vunpack.c.l.b16 %v3513
    %v3707 = vunpack.c.h.b16 %v3513
    %v3708 = vunpack.c.l.b16 %v3514
    %v3709 = vunpack.c.h.b16 %v3514
    %v3710 = vunpack.c.l.b16 %v3515
    %v3711 = vunpack.c.h.b16 %v3515
    %v3712 = vunpack.c.l.b16 %v3516
    %v3713 = vunpack.c.h.b16 %v3516
    %v3714 = vunpack.c.l.b16 %v3517
    %v3715 = vunpack.c.h.b16 %v3517
    %v3716 = vunpack.c.l.b16 %v3518
    %v3717 = vunpack.c.h.b16 %v3518
    %v3718 = vunpack.c.l.b16 %v3519
    %v3719 = vunpack.c.h.b16 %v3519
    %v3720 = vunpack.c.l.b16 %v3520
    %v3721 = vunpack.c.h.b16 %v3520
    %v3722 = vunpack.c.l.b16 %v3521
    %v3723 = vunpack.c.h.b16 %v3521
    %v3724 = vunpack.c.l.b16 %v3522
    %v3725 = vunpack.c.h.b16 %v3522
    %v3726 = vunpack.c.l.b16 %v3523
    %v3727 = vunpack.c.h.b16 %v3523
    %v3728 = vunpack.c.l.b16 %v3524
    %v3729 = vunpack.c.h.b16 %v3524
    %v3730 = vunpack.c.l.b16 %v3525
    %v3731 = vunpack.c.h.b16 %v3525
    %v3732 = vunpack.c.l.b16 %v3526
    %v3733 = vunpack.c.h.b16 %v3526
    %v3734 = vunpack.c.l.b16 %v3527
    %v3735 = vunpack.c.h.b16 %v3527
    %v3736 = vunpack.c.l.b16 %v3528
    %v3737 = vunpack.c.h.b16 %v3528
    %v3738 = vpack.c.b16 %v3612, %v3610
    %v3739 = vpack.c.b16 %v3613, %v3611
    %v3740 = vpack.c.b16 %v3616, %v3614
    %v3741 = vpack.c.b16 %v3617, %v3615
    %v3742 = vpack.c.b16 %v3620, %v3618
    %v3743 = vpack.c.b16 %v3621, %v3619
    %v3744 = vpack.c.b16 %v3624, %v3622
    %v3745 = vpack.c.b16 %v3625, %v3623
    %v3746 = vpack.c.b16 %v3628, %v3626
    %v3747 = vpack.c.b16 %v3629, %v3627
    %v3748 = vpack.c.b16 %v3632, %v3630
    %v3749 = vpack.c.b16 %v3633, %v3631
    %v3750 = vpack.c.b16 %v3636, %v3634
    %v3751 = vpack.c.b16 %v3637, %v3635
    %v3752 = vpack.c.b16 %v3640, %v3638
    %v3753 = vpack.c.b16 %v3641, %v3639
    %v3754 = vpack.c.b16 %v3644, %v3642
    %v3755 = vpack.c.b16 %v3645, %v3643
    %v3756 = vpack.c.b16 %v3648, %v3646
    %v3757 = vpack.c.b16 %v3649, %v3647
    %v3758 = vpack.c.b16 %v3652, %v3650
    %v3759 = vpack.c.b16 %v3653, %v3651
    %v3760 = vpack.c.b16 %v3656, %v3654
    %v3761 = vpack.c.b16 %v3657, %v3655
    %v3762 = vpack.c.b16 %v3660, %v3658
    %v3763 = vpack.c.b16 %v3661, %v3659
    %v3764 = vpack.c.b16 %v3664, %v3662
    %v3765 = vpack.c.b16 %v3665, %v3663
    %v3766 = vpack.c.b16 %v3668, %v3666
    %v3767 = vpack.c.b16 %v3669, %v3667
    %v3768 = vpack.c.b16 %v3672, %v3670
    %v3769 = vpack.c.b16 %v3673, %v3671
    %v3770 = vpack.c.b16 %v3676, %v3674
    %v3771 = vpack.c.b16 %v3677, %v3675
    %v3772 = vpack.c.b16 %v3680, %v3678
    %v3773 = vpack.c.b16 %v3681, %v3679
    %v3774 = vpack.c.b16 %v3684, %v3682
    %v3775 = vpack.c.b16 %v3685, %v3683
    %v3776 = vpack.c.b16 %v3688, %v3686
    %v3777 = vpack.c.b16 %v3689, %v3687
    %v3778 = vpack.c.b16 %v3692, %v3690
    %v3779 = vpack.c.b16 %v3693, %v3691
    %v3780 = vpack.c.b16 %v3696, %v3694
    %v3781 = vpack.c.b16 %v3697, %v3695
    %v3782 = vpack.c.b16 %v3700, %v3698
    %v3783 = vpack.c.b16 %v3701, %v3699
    %v3784 = vpack.c.b16 %v3704, %v3702
    %v3785 = vpack.c.b16 %v3705, %v3703
    %v3786 = vpack.c.b16 %v3708, %v3706
    %v3787 = vpack.c.b16 %v3709, %v3707
    %v3788 = vpack.c.b16 %v3712, %v3710
    %v3789 = vpack.c.b16 %v3713, %v3711
    %v3790 = vpack.c.b16 %v3716, %v3714
    %v3791 = vpack.c.b16 %v3717, %v3715
    %v3792 = vpack.c.b16 %v3720, %v3718
    %v3793 = vpack.c.b16 %v3721, %v3719
    %v3794 = vpack.c.b16 %v3724, %v3722
    %v3795 = vpack.c.b16 %v3725, %v3723
    %v3796 = vpack.c.b16 %v3728, %v3726
    %v3797 = vpack.c.b16 %v3729, %v3727
    %v3798 = vpack.c.b16 %v3732, %v3730
    %v3799 = vpack.c.b16 %v3733, %v3731
    %v3800 = vpack.c.b16 %v3736, %v3734
    %v3801 = vpack.c.b16 %v3737, %v3735
    %3866 = vmatprep.subr.bf16.mxu0 %v3753
    %3867 = vmatpush1.bf16.msra.mxu0 %v3752
    %3868 = vmatprep.subr.bf16.mxu0 %v3751
    %3869 = vmatpush1.bf16.msra.mxu0 %v3750
    %3870 = vmatprep.subr.bf16.mxu0 %v3749
    %3871 = vmatpush1.bf16.msra.mxu0 %v3748
    %3872 = vmatprep.subr.bf16.mxu0 %v3747
    %3873 = vmatpush1.bf16.msra.mxu0 %v3746
    %3874 = vmatprep.subr.bf16.mxu0 %v3745
    %3875 = vmatpush1.bf16.msra.mxu0 %v3744
    %3876 = vmatprep.subr.bf16.mxu0 %v3743
    %3877 = vmatpush1.bf16.msra.mxu0 %v3742
    %3878 = vmatprep.subr.bf16.mxu0 %v3741
    %3879 = vmatpush1.bf16.msra.mxu0 %v3740
    %3880 = vmatprep.subr.bf16.mxu0 %v3739
    %3881 = vmatpush1.bf16.msra.mxu0 %v3738
    %3882 = vmatprep.subr.bf16.mxu0 %v3769
    %3883 = vmatpush2.bf16.msra.mxu0 %v3768
    %3884 = vmatprep.subr.bf16.mxu0 %v3767
    %3885 = vmatpush2.bf16.msra.mxu0 %v3766
    %3886 = vmatprep.subr.bf16.mxu0 %v3765
    %3887 = vmatpush2.bf16.msra.mxu0 %v3764
    %3888 = vmatprep.subr.bf16.mxu0 %v3763
    %3889 = vmatpush2.bf16.msra.mxu0 %v3762
    %3890 = vmatprep.subr.bf16.mxu0 %v3761
    %3891 = vmatpush2.bf16.msra.mxu0 %v3760
    %3892 = vmatprep.subr.bf16.mxu0 %v3759
    %3893 = vmatpush2.bf16.msra.mxu0 %v3758
    %3894 = vmatprep.subr.bf16.mxu0 %v3757
    %3895 = vmatpush2.bf16.msra.mxu0 %v3756
    %3896 = vmatprep.subr.bf16.mxu0 %v3755
    %3897 = vmatpush2.bf16.msra.mxu0 %v3754
    %3898 = vmatprep.mubr.bf16.mxu0 %v3530
    %3899 = vmatmul.mubr.bf16.gmra.mxu0 %v3529
    %v3900 = vpop.f32.mrf.mxu0
    %v3901 = vadd.f32 %v3539, %v3900
    %v3902 = vpop.f32.mrf.mxu0
    %v3903 = vadd.f32 %v3543, %v3902
    %v3904 = vpop.f32.mrf.mxu0
    %v3905 = vpop.f32.mrf.mxu0
    %3906 = vdwg.mxu0
    %3907 = vmatprep.subr.bf16.mxu0 %v3785
    %3908 = vmatpush1.bf16.msra.mxu0 %v3784
    %3909 = vmatprep.subr.bf16.mxu0 %v3783
    %3910 = vmatpush1.bf16.msra.mxu0 %v3782
    %3911 = vmatprep.subr.bf16.mxu0 %v3781
    %3912 = vmatpush1.bf16.msra.mxu0 %v3780
    %3913 = vmatprep.subr.bf16.mxu0 %v3779
    %3914 = vmatpush1.bf16.msra.mxu0 %v3778
    %3915 = vmatprep.subr.bf16.mxu0 %v3777
    %3916 = vmatpush1.bf16.msra.mxu0 %v3776
    %3917 = vmatprep.subr.bf16.mxu0 %v3775
    %3918 = vmatpush1.bf16.msra.mxu0 %v3774
    %3919 = vmatprep.subr.bf16.mxu0 %v3773
    %3920 = vmatpush1.bf16.msra.mxu0 %v3772
    %3921 = vmatprep.subr.bf16.mxu0 %v3771
    %3922 = vmatpush1.bf16.msra.mxu0 %v3770
    %3923 = vmatprep.subr.bf16.mxu0 %v3801
    %3924 = vmatpush2.bf16.msra.mxu0 %v3800
    %3925 = vmatprep.subr.bf16.mxu0 %v3799
    %3926 = vmatpush2.bf16.msra.mxu0 %v3798
    %3927 = vmatprep.subr.bf16.mxu0 %v3797
    %3928 = vmatpush2.bf16.msra.mxu0 %v3796
    %3929 = vmatprep.subr.bf16.mxu0 %v3795
    %3930 = vmatpush2.bf16.msra.mxu0 %v3794
    %3931 = vmatprep.subr.bf16.mxu0 %v3793
    %3932 = vmatpush2.bf16.msra.mxu0 %v3792
    %3933 = vmatprep.subr.bf16.mxu0 %v3791
    %3934 = vmatpush2.bf16.msra.mxu0 %v3790
    %3935 = vmatprep.subr.bf16.mxu0 %v3789
    %3936 = vmatpush2.bf16.msra.mxu0 %v3788
    %3937 = vmatprep.subr.bf16.mxu0 %v3787
    %3938 = vmatpush2.bf16.msra.mxu0 %v3786
    %3939 = vmatprep.mubr.bf16.mxu0 %v3532
    %3940 = vmatmul.mubr.bf16.gmra.mxu0 %v3531
    %v3941 = vpop.f32.mrf.mxu0
    %v3942 = vadd.f32 %v3901, %v3941
    %v3943 = vpop.f32.mrf.mxu0
    %v3944 = vadd.f32 %v3903, %v3943
    %v3945 = vpop.f32.mrf.mxu0
    %v3946 = vpop.f32.mrf.mxu0
    %3947 = vdwg.mxu0
    %v3948 = vmax.f32 %v3942, 0.0
    %v3949 = vmax.f32 %v3944, 0.0
    %v3950 = vld [vmem:[%s6] sm:$0xf]
    %v3951 = vld [vmem:[%s6 + $0x4] sm:$0xf]
    %v3952 = vld [vmem:[%s6 + $0x8] sm:$0xf]
    %v3953 = vld [vmem:[%s6 + $0xc] sm:$0xf]
    %v3954 = vld [vmem:[%s6 + $0x10] sm:$0xf]
    %v3955 = vld [vmem:[%s6 + $0x14] sm:$0xf]
    %v3956 = vld [vmem:[%s6 + $0x18] sm:$0xf]
    %v3957 = vld [vmem:[%s6 + $0x1c] sm:$0xf]
    %v3958 = vld [vmem:[%s6 + $0x20] sm:$0xf]
    %v3959 = vld [vmem:[%s6 + $0x24] sm:$0xf]
    %v3960 = vld [vmem:[%s6 + $0x28] sm:$0xf]
    %v3961 = vld [vmem:[%s6 + $0x2c] sm:$0xf]
    %v3962 = vld [vmem:[%s6 + $0x30] sm:$0xf]
    %v3963 = vld [vmem:[%s6 + $0x34] sm:$0xf]
    %v3964 = vld [vmem:[%s6 + $0x38] sm:$0xf]
    %v3965 = vld [vmem:[%s6 + $0x3c] sm:$0xf]
    %v3966 = vld [vmem:[%s6 + $0x40] sm:$0xf]
    %v3967 = vld [vmem:[%s6 + $0x44] sm:$0xf]
    %v3968 = vld [vmem:[%s6 + $0x48] sm:$0xf]
    %v3969 = vld [vmem:[%s6 + $0x4c] sm:$0xf]
    %v3970 = vld [vmem:[%s6 + $0x50] sm:$0xf]
    %v3971 = vld [vmem:[%s6 + $0x54] sm:$0xf]
    %v3972 = vld [vmem:[%s6 + $0x58] sm:$0xf]
    %v3973 = vld [vmem:[%s6 + $0x5c] sm:$0xf]
    %v3974 = vld [vmem:[%s6 + $0x60] sm:$0xf]
    %v3975 = vld [vmem:[%s6 + $0x64] sm:$0xf]
    %v3976 = vld [vmem:[%s6 + $0x68] sm:$0xf]
    %v3977 = vld [vmem:[%s6 + $0x6c] sm:$0xf]
    %v3978 = vld [vmem:[%s6 + $0x70] sm:$0xf]
    %v3979 = vld [vmem:[%s6 + $0x74] sm:$0xf]
    %v3980 = vld [vmem:[%s6 + $0x78] sm:$0xf]
    %v3981 = vld [vmem:[%s6 + $0x7c] sm:$0xf]
    %v3982 = vld [vmem:[%s6 + $0x80] sm:$0xf]
    %v3983 = vld [vmem:[%s6 + $0x84] sm:$0xf]
    %v3984 = vld [vmem:[%s6 + $0x88] sm:$0xf]
    %v3985 = vld [vmem:[%s6 + $0x8c] sm:$0xf]
    %v3986 = vld [vmem:[%s6 + $0x90] sm:$0xf]
    %v3987 = vld [vmem:[%s6 + $0x94] sm:$0xf]
    %v3988 = vld [vmem:[%s6 + $0x98] sm:$0xf]
    %v3989 = vld [vmem:[%s6 + $0x9c] sm:$0xf]
    %v3990 = vld [vmem:[%s6 + $0xa0] sm:$0xf]
    %v3991 = vld [vmem:[%s6 + $0xa4] sm:$0xf]
    %v3992 = vld [vmem:[%s6 + $0xa8] sm:$0xf]
    %v3993 = vld [vmem:[%s6 + $0xac] sm:$0xf]
    %v3994 = vld [vmem:[%s6 + $0xb0] sm:$0xf]
    %v3995 = vld [vmem:[%s6 + $0xb4] sm:$0xf]
    %v3996 = vld [vmem:[%s6 + $0xb8] sm:$0xf]
    %v3997 = vld [vmem:[%s6 + $0xbc] sm:$0xf]
    %v3998 = vld [vmem:[%s6 + $0xc0] sm:$0xf]
    %v3999 = vld [vmem:[%s6 + $0xc4] sm:$0xf]
    %v4000 = vld [vmem:[%s6 + $0xc8] sm:$0xf]
    %v4001 = vld [vmem:[%s6 + $0xcc] sm:$0xf]
    %v4002 = vld [vmem:[%s6 + $0xd0] sm:$0xf]
    %v4003 = vld [vmem:[%s6 + $0xd4] sm:$0xf]
    %v4004 = vld [vmem:[%s6 + $0xd8] sm:$0xf]
    %v4005 = vld [vmem:[%s6 + $0xdc] sm:$0xf]
    %v4006 = vld [vmem:[%s6 + $0xe0] sm:$0xf]
    %v4007 = vld [vmem:[%s6 + $0xe4] sm:$0xf]
    %v4008 = vld [vmem:[%s6 + $0xe8] sm:$0xf]
    %v4009 = vld [vmem:[%s6 + $0xec] sm:$0xf]
    %v4010 = vld [vmem:[%s6 + $0xf0] sm:$0xf]
    %v4011 = vld [vmem:[%s6 + $0xf4] sm:$0xf]
    %v4012 = vld [vmem:[%s6 + $0xf8] sm:$0xf]
    %v4013 = vld [vmem:[%s6 + $0xfc] sm:$0xf]
    %v4014 = vld [vmem:[%s6 + $0x100] sm:$0xf]
    %v4015 = vld [vmem:[%s6 + $0x104] sm:$0xf]
    %v4016 = vld [vmem:[%s6 + $0x108] sm:$0xf]
    %v4017 = vld [vmem:[%s6 + $0x10c] sm:$0xf]
    %v4018 = vld [vmem:[%s6 + $0x110] sm:$0xf]
    %v4019 = vld [vmem:[%s6 + $0x114] sm:$0xf]
    %v4020 = vld [vmem:[%s6 + $0x118] sm:$0xf]
    %v4021 = vld [vmem:[%s6 + $0x11c] sm:$0xf]
    %v4022 = vld [vmem:[%s6 + $0x120] sm:$0xf]
    %v4023 = vld [vmem:[%s6 + $0x124] sm:$0xf]
    %v4024 = vld [vmem:[%s6 + $0x128] sm:$0xf]
    %v4025 = vld [vmem:[%s6 + $0x12c] sm:$0xf]
    %v4026 = vld [vmem:[%s6 + $0x130] sm:$0xf]
    %v4027 = vld [vmem:[%s6 + $0x134] sm:$0xf]
    %v4028 = vld [vmem:[%s6 + $0x138] sm:$0xf]
    %v4029 = vld [vmem:[%s6 + $0x13c] sm:$0xf]
    %v4030 = vpack.c.bf16 %v3463, %v3463
    %v4031 = vpack.c.bf16 %v3464, %v3464
    %v4032 = vpack.c.bf16 %v3948, %v3948
    %v4033 = vpack.c.bf16 %v3949, %v3949
    %v4034 = vpack.c.bf16 %v2975, %v2975
    %v4035 = vld [vmem:[#allocation9 + $0x4] ss:$0 sm:$0xff]
    %v4116 = vunpack.c.l.b16 %v3950
    %v4117 = vunpack.c.l.b16 %v3951
    %v4118 = vunpack.c.l.b16 %v3952
    %v4119 = vunpack.c.l.b16 %v3953
    %v4120 = vunpack.c.l.b16 %v3954
    %v4121 = vunpack.c.l.b16 %v3955
    %v4122 = vunpack.c.l.b16 %v3956
    %v4123 = vunpack.c.l.b16 %v3957
    %v4124 = vunpack.c.l.b16 %v3958
    %v4125 = vunpack.c.l.b16 %v3959
    %v4126 = vunpack.c.l.b16 %v3960
    %v4127 = vunpack.c.l.b16 %v3961
    %v4128 = vunpack.c.l.b16 %v3962
    %v4129 = vunpack.c.l.b16 %v3963
    %v4130 = vunpack.c.l.b16 %v3964
    %v4131 = vunpack.c.l.b16 %v3965
    %v4132 = vunpack.c.l.b16 %v3966
    %v4133 = vunpack.c.l.b16 %v3967
    %v4134 = vunpack.c.l.b16 %v3968
    %v4135 = vunpack.c.l.b16 %v3969
    %v4136 = vunpack.c.l.b16 %v3970
    %v4137 = vunpack.c.l.b16 %v3971
    %v4138 = vunpack.c.l.b16 %v3972
    %v4139 = vunpack.c.l.b16 %v3973
    %v4140 = vunpack.c.l.b16 %v3974
    %v4141 = vunpack.c.l.b16 %v3975
    %v4142 = vunpack.c.l.b16 %v3976
    %v4143 = vunpack.c.l.b16 %v3977
    %v4144 = vunpack.c.l.b16 %v3978
    %v4145 = vunpack.c.l.b16 %v3979
    %v4146 = vunpack.c.l.b16 %v3980
    %v4147 = vunpack.c.l.b16 %v3981
    %v4148 = vunpack.c.l.b16 %v3982
    %v4149 = vunpack.c.l.b16 %v3983
    %v4150 = vunpack.c.l.b16 %v3984
    %v4151 = vunpack.c.l.b16 %v3985
    %v4152 = vunpack.c.l.b16 %v3986
    %v4153 = vunpack.c.l.b16 %v3987
    %v4154 = vunpack.c.l.b16 %v3988
    %v4155 = vunpack.c.l.b16 %v3989
    %v4156 = vunpack.c.l.b16 %v3990
    %v4157 = vunpack.c.l.b16 %v3991
    %v4158 = vunpack.c.l.b16 %v3992
    %v4159 = vunpack.c.l.b16 %v3993
    %v4160 = vunpack.c.l.b16 %v3994
    %v4161 = vunpack.c.l.b16 %v3995
    %v4162 = vunpack.c.l.b16 %v3996
    %v4163 = vunpack.c.l.b16 %v3997
    %v4164 = vunpack.c.l.b16 %v3998
    %v4165 = vunpack.c.l.b16 %v3999
    %v4166 = vunpack.c.l.b16 %v4000
    %v4167 = vunpack.c.l.b16 %v4001
    %v4168 = vunpack.c.l.b16 %v4002
    %v4169 = vunpack.c.l.b16 %v4003
    %v4170 = vunpack.c.l.b16 %v4004
    %v4171 = vunpack.c.l.b16 %v4005
    %v4172 = vunpack.c.l.b16 %v4006
    %v4173 = vunpack.c.l.b16 %v4007
    %v4174 = vunpack.c.l.b16 %v4008
    %v4175 = vunpack.c.l.b16 %v4009
    %v4176 = vunpack.c.l.b16 %v4010
    %v4177 = vunpack.c.l.b16 %v4011
    %v4178 = vunpack.c.l.b16 %v4012
    %v4179 = vunpack.c.l.b16 %v4013
    %v4180 = vunpack.c.l.b16 %v4014
    %v4181 = vunpack.c.l.b16 %v4015
    %v4182 = vunpack.c.l.b16 %v4016
    %v4183 = vunpack.c.l.b16 %v4017
    %v4184 = vunpack.c.l.b16 %v4018
    %v4185 = vunpack.c.l.b16 %v4019
    %v4186 = vunpack.c.l.b16 %v4020
    %v4187 = vunpack.c.l.b16 %v4021
    %v4188 = vunpack.c.l.b16 %v4022
    %v4189 = vunpack.c.l.b16 %v4023
    %v4190 = vunpack.c.l.b16 %v4024
    %v4191 = vunpack.c.l.b16 %v4025
    %v4192 = vunpack.c.l.b16 %v4026
    %v4193 = vunpack.c.l.b16 %v4027
    %v4194 = vunpack.c.l.b16 %v4028
    %v4195 = vunpack.c.l.b16 %v4029
    %v4196 = vpack.c.b16 %v4117, %v4116
    %v4197 = vpack.c.b16 %v4119, %v4118
    %v4198 = vpack.c.b16 %v4121, %v4120
    %v4199 = vpack.c.b16 %v4123, %v4122
    %v4200 = vpack.c.b16 %v4125, %v4124
    %v4201 = vpack.c.b16 %v4127, %v4126
    %v4202 = vpack.c.b16 %v4129, %v4128
    %v4203 = vpack.c.b16 %v4131, %v4130
    %v4204 = vpack.c.b16 %v4133, %v4132
    %v4205 = vpack.c.b16 %v4135, %v4134
    %v4206 = vpack.c.b16 %v4137, %v4136
    %v4207 = vpack.c.b16 %v4139, %v4138
    %v4208 = vpack.c.b16 %v4141, %v4140
    %v4209 = vpack.c.b16 %v4143, %v4142
    %v4210 = vpack.c.b16 %v4145, %v4144
    %v4211 = vpack.c.b16 %v4147, %v4146
    %v4212 = vpack.c.b16 %v4149, %v4148
    %v4213 = vpack.c.b16 %v4151, %v4150
    %v4214 = vpack.c.b16 %v4153, %v4152
    %v4215 = vpack.c.b16 %v4155, %v4154
    %v4216 = vpack.c.b16 %v4157, %v4156
    %v4217 = vpack.c.b16 %v4159, %v4158
    %v4218 = vpack.c.b16 %v4161, %v4160
    %v4219 = vpack.c.b16 %v4163, %v4162
    %v4220 = vpack.c.b16 %v4165, %v4164
    %v4221 = vpack.c.b16 %v4167, %v4166
    %v4222 = vpack.c.b16 %v4169, %v4168
    %v4223 = vpack.c.b16 %v4171, %v4170
    %v4224 = vpack.c.b16 %v4173, %v4172
    %v4225 = vpack.c.b16 %v4175, %v4174
    %v4226 = vpack.c.b16 %v4177, %v4176
    %v4227 = vpack.c.b16 %v4179, %v4178
    %v4228 = vpack.c.b16 %v4181, %v4180
    %v4229 = vpack.c.b16 %v4183, %v4182
    %v4230 = vpack.c.b16 %v4185, %v4184
    %v4231 = vpack.c.b16 %v4187, %v4186
    %v4232 = vpack.c.b16 %v4189, %v4188
    %v4233 = vpack.c.b16 %v4191, %v4190
    %v4234 = vpack.c.b16 %v4193, %v4192
    %v4235 = vpack.c.b16 %v4195, %v4194
    %4236 = vrot.lane.b32.xlu0 %v4196, 64
    %v4237 = vpop.permute.xlu0 %4236
    %4238 = vrot.lane.b32.xlu0 %v4197, 64
    %v4239 = vpop.permute.xlu0 %4238
    %4240 = vrot.lane.b32.xlu0 %v4198, 64
    %v4241 = vpop.permute.xlu0 %4240
    %4242 = vrot.lane.b32.xlu0 %v4199, 64
    %v4243 = vpop.permute.xlu0 %4242
    %4244 = vrot.lane.b32.xlu0 %v4200, 64
    %v4245 = vpop.permute.xlu0 %4244
    %4246 = vrot.lane.b32.xlu0 %v4201, 64
    %v4247 = vpop.permute.xlu0 %4246
    %4248 = vrot.lane.b32.xlu0 %v4202, 64
    %v4249 = vpop.permute.xlu0 %4248
    %4250 = vrot.lane.b32.xlu0 %v4203, 64
    %v4251 = vpop.permute.xlu0 %4250
    %4252 = vrot.lane.b32.xlu0 %v4204, 64
    %v4253 = vpop.permute.xlu0 %4252
    %4254 = vrot.lane.b32.xlu0 %v4205, 64
    %v4255 = vpop.permute.xlu0 %4254
    %4256 = vrot.lane.b32.xlu0 %v4206, 64
    %v4257 = vpop.permute.xlu0 %4256
    %4258 = vrot.lane.b32.xlu0 %v4207, 64
    %v4259 = vpop.permute.xlu0 %4258
    %4260 = vrot.lane.b32.xlu0 %v4208, 64
    %v4261 = vpop.permute.xlu0 %4260
    %4262 = vrot.lane.b32.xlu0 %v4209, 64
    %v4263 = vpop.permute.xlu0 %4262
    %4264 = vrot.lane.b32.xlu0 %v4210, 64
    %v4265 = vpop.permute.xlu0 %4264
    %4266 = vrot.lane.b32.xlu0 %v4211, 64
    %v4267 = vpop.permute.xlu0 %4266
    %4268 = vrot.lane.b32.xlu0 %v4212, 64
    %v4269 = vpop.permute.xlu0 %4268
    %4270 = vrot.lane.b32.xlu0 %v4213, 64
    %v4271 = vpop.permute.xlu0 %4270
    %4272 = vrot.lane.b32.xlu0 %v4214, 64
    %v4273 = vpop.permute.xlu0 %4272
    %4274 = vrot.lane.b32.xlu0 %v4215, 64
    %v4275 = vpop.permute.xlu0 %4274
    %4276 = vrot.lane.b32.xlu0 %v4216, 64
    %v4277 = vpop.permute.xlu0 %4276
    %4278 = vrot.lane.b32.xlu0 %v4217, 64
    %v4279 = vpop.permute.xlu0 %4278
    %4280 = vrot.lane.b32.xlu0 %v4218, 64
    %v4281 = vpop.permute.xlu0 %4280
    %4282 = vrot.lane.b32.xlu0 %v4219, 64
    %v4283 = vpop.permute.xlu0 %4282
    %4284 = vrot.lane.b32.xlu0 %v4220, 64
    %v4285 = vpop.permute.xlu0 %4284
    %4286 = vrot.lane.b32.xlu0 %v4221, 64
    %v4287 = vpop.permute.xlu0 %4286
    %4288 = vrot.lane.b32.xlu0 %v4222, 64
    %v4289 = vpop.permute.xlu0 %4288
    %4290 = vrot.lane.b32.xlu0 %v4223, 64
    %v4291 = vpop.permute.xlu0 %4290
    %4292 = vrot.lane.b32.xlu0 %v4224, 64
    %v4293 = vpop.permute.xlu0 %4292
    %4294 = vrot.lane.b32.xlu0 %v4225, 64
    %v4295 = vpop.permute.xlu0 %4294
    %4296 = vrot.lane.b32.xlu0 %v4226, 64
    %v4297 = vpop.permute.xlu0 %4296
    %4298 = vrot.lane.b32.xlu0 %v4227, 64
    %v4299 = vpop.permute.xlu0 %4298
    %4300 = vrot.lane.b32.xlu0 %v4228, 64
    %v4301 = vpop.permute.xlu0 %4300
    %4302 = vrot.lane.b32.xlu0 %v4229, 64
    %v4303 = vpop.permute.xlu0 %4302
    %4304 = vrot.lane.b32.xlu0 %v4230, 64
    %v4305 = vpop.permute.xlu0 %4304
    %4306 = vrot.lane.b32.xlu0 %v4231, 64
    %v4307 = vpop.permute.xlu0 %4306
    %4308 = vrot.lane.b32.xlu0 %v4232, 64
    %v4309 = vpop.permute.xlu0 %4308
    %4310 = vrot.lane.b32.xlu0 %v4233, 64
    %v4311 = vpop.permute.xlu0 %4310
    %4312 = vrot.lane.b32.xlu0 %v4234, 64
    %v4313 = vpop.permute.xlu0 %4312
    %4314 = vrot.lane.b32.xlu0 %v4235, 64
    %v4315 = vpop.permute.xlu0 %4314
    %4356 = vmatprep.subr.bf16.mxu0 0
    %4357 = vmatpush1.bf16.msra.mxu0 %v4251
    %4358 = vmatprep.subr.bf16.mxu0 0
    %4359 = vmatpush1.bf16.msra.mxu0 %v4249
    %4360 = vmatprep.subr.bf16.mxu0 0
    %4361 = vmatpush1.bf16.msra.mxu0 %v4247
    %4362 = vmatprep.subr.bf16.mxu0 0
    %4363 = vmatpush1.bf16.msra.mxu0 %v4245
    %4364 = vmatprep.subr.bf16.mxu0 0
    %4365 = vmatpush1.bf16.msra.mxu0 %v4243
    %4366 = vmatprep.subr.bf16.mxu0 0
    %4367 = vmatpush1.bf16.msra.mxu0 %v4241
    %4368 = vmatprep.subr.bf16.mxu0 0
    %4369 = vmatpush1.bf16.msra.mxu0 %v4239
    %4370 = vmatprep.subr.bf16.mxu0 0
    %4371 = vmatpush1.bf16.msra.mxu0 %v4237
    %4372 = vmatprep.subr.bf16.mxu0 0
    %4373 = vmatpush2.bf16.msra.mxu0 %v4267
    %4374 = vmatprep.subr.bf16.mxu0 0
    %4375 = vmatpush2.bf16.msra.mxu0 %v4265
    %4376 = vmatprep.subr.bf16.mxu0 0
    %4377 = vmatpush2.bf16.msra.mxu0 %v4263
    %4378 = vmatprep.subr.bf16.mxu0 0
    %4379 = vmatpush2.bf16.msra.mxu0 %v4261
    %4380 = vmatprep.subr.bf16.mxu0 0
    %4381 = vmatpush2.bf16.msra.mxu0 %v4259
    %4382 = vmatprep.subr.bf16.mxu0 0
    %4383 = vmatpush2.bf16.msra.mxu0 %v4257
    %4384 = vmatprep.subr.bf16.mxu0 0
    %4385 = vmatpush2.bf16.msra.mxu0 %v4255
    %4386 = vmatprep.subr.bf16.mxu0 0
    %4387 = vmatpush2.bf16.msra.mxu0 %v4253
    %4388 = vmatprep.mubr.bf16.mxu0 %v4031
    %4389 = vmatmul.mubr.bf16.gmra.mxu0 %v4030
    %v4390 = vpop.f32.mrf.mxu0
    %v4391 = vadd.f32 %v4035, %v4390
    %v4392 = vpop.f32.mrf.mxu0
    %v4393 = vpop.f32.mrf.mxu0
    %v4394 = vpop.f32.mrf.mxu0
    %4395 = vdwg.mxu0
    %4396 = vmatprep.subr.bf16.mxu0 0
    %4397 = vmatpush1.bf16.msra.mxu0 %v4283
    %4398 = vmatprep.subr.bf16.mxu0 0
    %4399 = vmatpush1.bf16.msra.mxu0 %v4281
    %4400 = vmatprep.subr.bf16.mxu0 0
    %4401 = vmatpush1.bf16.msra.mxu0 %v4279
    %4402 = vmatprep.subr.bf16.mxu0 0
    %4403 = vmatpush1.bf16.msra.mxu0 %v4277
    %4404 = vmatprep.subr.bf16.mxu0 0
    %4405 = vmatpush1.bf16.msra.mxu0 %v4275
    %4406 = vmatprep.subr.bf16.mxu0 0
    %4407 = vmatpush1.bf16.msra.mxu0 %v4273
    %4408 = vmatprep.subr.bf16.mxu0 0
    %4409 = vmatpush1.bf16.msra.mxu0 %v4271
    %4410 = vmatprep.subr.bf16.mxu0 0
    %4411 = vmatpush1.bf16.msra.mxu0 %v4269
    %4412 = vmatprep.subr.bf16.mxu0 0
    %4413 = vmatpush2.bf16.msra.mxu0 %v4299
    %4414 = vmatprep.subr.bf16.mxu0 0
    %4415 = vmatpush2.bf16.msra.mxu0 %v4297
    %4416 = vmatprep.subr.bf16.mxu0 0
    %4417 = vmatpush2.bf16.msra.mxu0 %v4295
    %4418 = vmatprep.subr.bf16.mxu0 0
    %4419 = vmatpush2.bf16.msra.mxu0 %v4293
    %4420 = vmatprep.subr.bf16.mxu0 0
    %4421 = vmatpush2.bf16.msra.mxu0 %v4291
    %4422 = vmatprep.subr.bf16.mxu0 0
    %4423 = vmatpush2.bf16.msra.mxu0 %v4289
    %4424 = vmatprep.subr.bf16.mxu0 0
    %4425 = vmatpush2.bf16.msra.mxu0 %v4287
    %4426 = vmatprep.subr.bf16.mxu0 0
    %4427 = vmatpush2.bf16.msra.mxu0 %v4285
    %4428 = vmatprep.mubr.bf16.mxu0 %v4033
    %4429 = vmatmul.mubr.bf16.gmra.mxu0 %v4032
    %v4430 = vpop.f32.mrf.mxu0
    %v4431 = vadd.f32 %v4391, %v4430
    %v4432 = vpop.f32.mrf.mxu0
    %v4433 = vpop.f32.mrf.mxu0
    %v4434 = vpop.f32.mrf.mxu0
    %4435 = vdwg.mxu0
    %4436 = vmatprep.subr.bf16.mxu0 0
    %4437 = vmatpush1.bf16.msra.mxu0 %v4315
    %4438 = vmatprep.subr.bf16.mxu0 0
    %4439 = vmatpush1.bf16.msra.mxu0 %v4313
    %4440 = vmatprep.subr.bf16.mxu0 0
    %4441 = vmatpush1.bf16.msra.mxu0 %v4311
    %4442 = vmatprep.subr.bf16.mxu0 0
    %4443 = vmatpush1.bf16.msra.mxu0 %v4309
    %4444 = vmatprep.subr.bf16.mxu0 0
    %4445 = vmatpush1.bf16.msra.mxu0 %v4307
    %4446 = vmatprep.subr.bf16.mxu0 0
    %4447 = vmatpush1.bf16.msra.mxu0 %v4305
    %4448 = vmatprep.subr.bf16.mxu0 0
    %4449 = vmatpush1.bf16.msra.mxu0 %v4303
    %4450 = vmatprep.subr.bf16.mxu0 0
    %4451 = vmatpush1.bf16.msra.mxu0 %v4301
    %4452 = vmatprep.subr.bf16.mxu0 0
    %4453 = vmatpush2.bf16.msra.mxu0 0
    %4454 = vmatprep.subr.bf16.mxu0 0
    %4455 = vmatpush2.bf16.msra.mxu0 0
    %4456 = vmatprep.subr.bf16.mxu0 0
    %4457 = vmatpush2.bf16.msra.mxu0 0
    %4458 = vmatprep.subr.bf16.mxu0 0
    %4459 = vmatpush2.bf16.msra.mxu0 0
    %4460 = vmatprep.subr.bf16.mxu0 0
    %4461 = vmatpush2.bf16.msra.mxu0 0
    %4462 = vmatprep.subr.bf16.mxu0 0
    %4463 = vmatpush2.bf16.msra.mxu0 0
    %4464 = vmatprep.subr.bf16.mxu0 0
    %4465 = vmatpush2.bf16.msra.mxu0 0
    %4466 = vmatprep.subr.bf16.mxu0 0
    %4467 = vmatpush2.bf16.msra.mxu0 0
    %4468 = vmatprep.mubr.bf16.mxu0 0
    %4469 = vmatmul.mubr.bf16.gmra.mxu0 %v4034
    %v4470 = vpop.f32.mrf.mxu0
    %v4471 = vadd.f32 %v4431, %v4470
    %v4472 = vpop.f32.mrf.mxu0
    %v4473 = vpop.f32.mrf.mxu0
    %v4474 = vpop.f32.mrf.mxu0
    %4475 = vdwg.mxu0
    %vm4476 = vcmask 25600
    %v4477 = vsel %vm4476, %v4471, -inf
    %4478 = vmax.xlane.f32.xlu0 %v4477
    %v4479 = vpop.xlane.xlu0 %4478
    %v4480 = vsub.f32 %v4471, %v4479
    %v4481 = vmul.f32 %v4480, 1.442695
    %v4482 = vpow.pop %v4481
    %v4483 = vsel %vm4476, %v4482, 0.0
    %4484 = vadd.xlane.f32.xlu0 %v4483
    %v4485 = vpop.xlane.xlu0 %4484
    %v4486 = vrcp.pop %v4485
    %v4487 = vmul.f32 %v4482, %v4486
    %v4488 = vxor.u32 %v4471, 2147483648
    %v4489 = vmul.f32 %v4488, 1.442695
    %v4490 = vpow.pop %v4489
    %v4491 = vadd.f32 %v4490, 1.0
    %v4492 = vrcp.pop %v4491
    %v4493 = vmul.f32 1.0, %v4492
    %v4494 = vsub.f32 0.0, %v4471
    %v4495 = vxor.u32 %v4494, 2147483648
    %v4496 = vmul.f32 %v4495, 1.442695
    %v4497 = vpow.pop %v4496
    %v4498 = vadd.f32 %v4497, 1.0
    %v4499 = vrcp.pop %v4498
    %v4500 = vmul.f32 1.0, %v4499
    %v4501 = vmul.f32 %v4500, 0.5
    %v4502 = vlaneseq
    %v4503 = vand.u32 %v4502, 127
    %vm4504 = vcmp.eq.s32.totalorder %v4503, 0
    %v4505 = vsub.f32 0.0, %v4501
    %v4506 = vmul.f32 %v4505, 0.2
    %vm4507 = vcmp.eq.s32.totalorder %v4503, 1
    %v4508 = vmul.f32 %v4493, 0.3
    %4510 = vset.pattern.permute.xlu0 5
    %4511 = vperm.xlu0 %4510, %v4508
    %v4512 = vpop.permute.xlu0 %4511
    %v4514 = vsel %vm4507, %v4512, 0.0
    %4516 = vset.pattern.permute.xlu0 4
    %4517 = vperm.xlu0 %4516, %v4506
    %v4518 = vpop.permute.xlu0 %4517
    %v4520 = vsel %vm4504, %v4518, %v4514
    %v4521 = vadd.f32 %v4487, %v4520
    %v4522 = vsel %vm4476, %v4521, -inf
    %4523 = vmax.xlane.f32.xlu0 %v4522
    %v4524 = vpop.xlane.xlu0 %4523
    %v4525 = vsub.f32 %v4521, %v4524
    %v4526 = vmul.f32 %v4525, 1.442695
    %v4527 = vpow.pop %v4526
    %v4528 = vsel %vm4476, %v4527, 0.0
    %4529 = vadd.xlane.f32.xlu0 %v4528
    %v4530 = vpop.xlane.xlu0 %4529
    %v4531 = vrcp.pop %v4530
    %v4532 = vmul.f32 %v4527, %v4531
    %v4533 = vadd.s32 %v4503, 128
    %v4534 = vadd.s32 %v4503, 256
    %v4535 = vadd.s32 %v4503, 384
    %v4536 = vadd.s32 %v4503, 512
    %vm4537 = vcmp.lt.s32.totalorder %v4503, 256
    %vm4538 = vcmp.lt.s32.totalorder %v4533, 256
    %vm4539 = vcmp.lt.s32.totalorder %v4534, 256
    %vm4540 = vcmp.lt.s32.totalorder %v4535, 256
    %vm4541 = vcmp.lt.s32.totalorder %v4536, 256
    %vm4542 = vcmp.lt.s32.totalorder %v4503, 512
    %vm4543 = vcmp.lt.s32.totalorder %v4533, 512
    %vm4544 = vcmp.lt.s32.totalorder %v4534, 512
    %vm4545 = vcmp.lt.s32.totalorder %v4535, 512
    %vm4546 = vcmp.lt.s32.totalorder %v4536, 512
    %vm4547 = vcmp.lt.s32.totalorder %v4503, 576
    %vm4548 = vcmp.lt.s32.totalorder %v4533, 576
    %vm4549 = vcmp.lt.s32.totalorder %v4534, 576
    %vm4550 = vcmp.lt.s32.totalorder %v4535, 576
    %vm4551 = vcmp.lt.s32.totalorder %v4536, 576
    %4553 = vset.pattern.permute.xlu0 2
    %4554 = vperm.xlu0 %4553, %v4532
    %v4555 = vpop.permute.xlu0 %4554
    %4557 = vset.pattern.permute.xlu0 3
    %4558 = vperm.xlu0 %4557, %v4532
    %v4559 = vpop.permute.xlu0 %4558
    %v4561 = vsel %vm4547, %v4555, %v4559
    %v4562 = vsel %vm4548, %v4555, %v4559
    %v4563 = vsel %vm4549, %v4555, %v4559
    %v4564 = vsel %vm4550, %v4555, %v4559
    %v4565 = vsel %vm4551, %v4555, %v4559
    %4566 = vset.pattern.permute.xlu0 1
    %4567 = vperm.xlu0 %4566, %v4532
    %v4568 = vpop.permute.xlu0 %4567
    %v4570 = vsel %vm4542, %v4568, %v4561
    %v4571 = vsel %vm4543, %v4568, %v4562
    %v4572 = vsel %vm4544, %v4568, %v4563
    %v4573 = vsel %vm4545, %v4568, %v4564
    %v4574 = vsel %vm4546, %v4568, %v4565
    %4575 = vset.pattern.permute.xlu0 0
    %4576 = vperm.xlu0 %4575, %v4532
    %v4577 = vpop.permute.xlu0 %4576
    %v4579 = vsel %vm4537, %v4577, %v4570
    %v4580 = vsel %vm4538, %v4577, %v4571
    %v4581 = vsel %vm4539, %v4577, %v4572
    %v4582 = vsel %vm4540, %v4577, %v4573
    %v4583 = vsel %vm4541, %v4577, %v4574
    %v4584 = vmul.f32 %v3463, %v4579
    %v4585 = vmul.f32 %v3464, %v4580
    %v4586 = vmul.f32 %v3948, %v4581
    %v4587 = vmul.f32 %v3949, %v4582
    %v4588 = vmul.f32 %v2975, %v4583
    %v4589 = vld [vmem:[#allocation2 + $0x400] sm:$0xff]
    %v4590 = vld [vmem:[#allocation2 + $0x408] sm:$0xff]
    %v4591 = vld [vmem:[#allocation2 + $0x410] sm:$0xff]
    %v4592 = vld [vmem:[#allocation2 + $0x418] sm:$0xff]
    %v4593 = vld [vmem:[#allocation2 + $0x420] sm:$0xff]
    %v4594 = vld [vmem:[#allocation2 + $0x428] sm:$0xff]
    %v4595 = vld [vmem:[#allocation2 + $0x430] sm:$0xff]
    %v4596 = vld [vmem:[#allocation2 + $0x438] sm:$0xff]
    %v4597 = vld [vmem:[#allocation2 + $0x440] sm:$0xff]
    %v4598 = vld [vmem:[#allocation2 + $0x448] sm:$0xff]
    %v4599 = vld [vmem:[#allocation2 + $0x450] sm:$0xff]
    %v4600 = vld [vmem:[#allocation2 + $0x458] sm:$0xff]
    %v4601 = vld [vmem:[#allocation2 + $0x460] sm:$0xff]
    %v4602 = vld [vmem:[#allocation2 + $0x468] sm:$0xff]
    %v4603 = vld [vmem:[#allocation2 + $0x470] sm:$0xff]
    %v4604 = vld [vmem:[#allocation2 + $0x478] sm:$0xff]
    %v4605 = vld [vmem:[#allocation2 + $0x480] sm:$0xff]
    %v4606 = vld [vmem:[#allocation2 + $0x488] sm:$0xff]
    %v4607 = vld [vmem:[#allocation2 + $0x490] sm:$0xff]
    %v4608 = vld [vmem:[#allocation2 + $0x498] sm:$0xff]
    %v4609 = vld [vmem:[#allocation2 + $0x4a0] sm:$0xff]
    %v4610 = vld [vmem:[#allocation2 + $0x4a8] sm:$0xff]
    %v4611 = vld [vmem:[#allocation2 + $0x4b0] sm:$0xff]
    %v4612 = vld [vmem:[#allocation2 + $0x4b8] sm:$0xff]
    %v4613 = vld [vmem:[#allocation2 + $0x4c0] sm:$0xff]
    %v4614 = vld [vmem:[#allocation2 + $0x4c8] sm:$0xff]
    %v4615 = vld [vmem:[#allocation2 + $0x4d0] sm:$0xff]
    %v4616 = vld [vmem:[#allocation2 + $0x4d8] sm:$0xff]
    %v4617 = vld [vmem:[#allocation2 + $0x4e0] sm:$0xff]
    %v4618 = vld [vmem:[#allocation2 + $0x4e8] sm:$0xff]
    %v4619 = vld [vmem:[#allocation2 + $0x4f0] sm:$0xff]
    %v4620 = vld [vmem:[#allocation2 + $0x4f8] sm:$0xff]
    %v4621 = vld [vmem:[#allocation2 + $0x500] sm:$0xff]
    %v4622 = vld [vmem:[#allocation2 + $0x508] sm:$0xff]
    %v4623 = vld [vmem:[#allocation2 + $0x510] sm:$0xff]
    %v4624 = vld [vmem:[#allocation2 + $0x518] sm:$0xff]
    %v4625 = vld [vmem:[#allocation2 + $0x520] sm:$0xff]
    %v4626 = vld [vmem:[#allocation2 + $0x528] sm:$0xff]
    %v4627 = vld [vmem:[#allocation2 + $0x530] sm:$0xff]
    %v4628 = vld [vmem:[#allocation2 + $0x538] sm:$0xff]
    %v4629 = vld [vmem:[#allocation2 + $0x540] sm:$0xff]
    %v4630 = vld [vmem:[#allocation2 + $0x548] sm:$0xff]
    %v4631 = vld [vmem:[#allocation2 + $0x550] sm:$0xff]
    %v4632 = vld [vmem:[#allocation2 + $0x558] sm:$0xff]
    %v4633 = vld [vmem:[#allocation2 + $0x560] sm:$0xff]
    %v4634 = vld [vmem:[#allocation2 + $0x568] sm:$0xff]
    %v4635 = vld [vmem:[#allocation2 + $0x570] sm:$0xff]
    %v4636 = vld [vmem:[#allocation2 + $0x578] sm:$0xff]
    %v4637 = vld [vmem:[#allocation2 + $0x580] sm:$0xff]
    %v4638 = vld [vmem:[#allocation2 + $0x588] sm:$0xff]
    %v4639 = vld [vmem:[#allocation2 + $0x590] sm:$0xff]
    %v4640 = vld [vmem:[#allocation2 + $0x598] sm:$0xff]
    %v4641 = vld [vmem:[#allocation2 + $0x5a0] sm:$0xff]
    %v4642 = vld [vmem:[#allocation2 + $0x5a8] sm:$0xff]
    %v4643 = vld [vmem:[#allocation2 + $0x5b0] sm:$0xff]
    %v4644 = vld [vmem:[#allocation2 + $0x5b8] sm:$0xff]
    %v4645 = vld [vmem:[#allocation2 + $0x5c0] sm:$0xff]
    %v4646 = vld [vmem:[#allocation2 + $0x5c8] sm:$0xff]
    %v4647 = vld [vmem:[#allocation2 + $0x5d0] sm:$0xff]
    %v4648 = vld [vmem:[#allocation2 + $0x5d8] sm:$0xff]
    %v4649 = vld [vmem:[#allocation2 + $0x5e0] sm:$0xff]
    %v4650 = vld [vmem:[#allocation2 + $0x5e8] sm:$0xff]
    %v4651 = vld [vmem:[#allocation2 + $0x5f0] sm:$0xff]
    %v4652 = vld [vmem:[#allocation2 + $0x5f8] sm:$0xff]
    %v4653 = vld [vmem:[#allocation2 + $0x600] sm:$0xff]
    %v4654 = vld [vmem:[#allocation2 + $0x608] sm:$0xff]
    %v4655 = vld [vmem:[#allocation2 + $0x610] sm:$0xff]
    %v4656 = vld [vmem:[#allocation2 + $0x618] sm:$0xff]
    %v4657 = vld [vmem:[#allocation2 + $0x620] sm:$0xff]
    %v4658 = vld [vmem:[#allocation2 + $0x628] sm:$0xff]
    %v4659 = vld [vmem:[#allocation2 + $0x630] sm:$0xff]
    %v4660 = vld [vmem:[#allocation2 + $0x638] sm:$0xff]
    %v4661 = vld [vmem:[#allocation2 + $0x640] sm:$0xff]
    %v4662 = vld [vmem:[#allocation2 + $0x648] sm:$0xff]
    %v4663 = vld [vmem:[#allocation2 + $0x650] sm:$0xff]
    %v4664 = vld [vmem:[#allocation2 + $0x658] sm:$0xff]
    %v4665 = vld [vmem:[#allocation2 + $0x660] sm:$0xff]
    %v4666 = vld [vmem:[#allocation2 + $0x668] sm:$0xff]
    %v4667 = vld [vmem:[#allocation2 + $0x670] sm:$0xff]
    %v4668 = vld [vmem:[#allocation2 + $0x678] sm:$0xff]
    %v4669 = vpack.c.bf16 %v4584, %v4584
    %v4670 = vpack.c.bf16 %v4585, %v4585
    %v4671 = vpack.c.bf16 %v4586, %v4586
    %v4672 = vpack.c.bf16 %v4587, %v4587
    %v4673 = vpack.c.bf16 %v4588, %v4588
    %s4674 = scalar_lea.vmem [#allocation9], 3
    %v4675 = vld [vmem:[%s4674] ss:$8 sm:$0x3]
    %v4677 = vlaneseq
    %v4678 = vshrl.u32 %v4677, 7
    %v4679 = vsub.s32 0, %v4678
    %v4680 = vrot.slane %v4675, %v4679
    %v4681 = vlaneseq
    %v4682 = vshrl.u32 %v4681, 7
    %v4683 = vsub.s32 1, %v4682
    %v4684 = vrot.slane %v4675, %v4683
    %v4767 = vunpack.c.l.b16 %v4589
    %v4768 = vunpack.c.h.b16 %v4589
    %v4769 = vunpack.c.l.b16 %v4590
    %v4770 = vunpack.c.h.b16 %v4590
    %v4771 = vunpack.c.l.b16 %v4591
    %v4772 = vunpack.c.h.b16 %v4591
    %v4773 = vunpack.c.l.b16 %v4592
    %v4774 = vunpack.c.h.b16 %v4592
    %v4775 = vunpack.c.l.b16 %v4593
    %v4776 = vunpack.c.h.b16 %v4593
    %v4777 = vunpack.c.l.b16 %v4594
    %v4778 = vunpack.c.h.b16 %v4594
    %v4779 = vunpack.c.l.b16 %v4595
    %v4780 = vunpack.c.h.b16 %v4595
    %v4781 = vunpack.c.l.b16 %v4596
    %v4782 = vunpack.c.h.b16 %v4596
    %v4783 = vunpack.c.l.b16 %v4597
    %v4784 = vunpack.c.h.b16 %v4597
    %v4785 = vunpack.c.l.b16 %v4598
    %v4786 = vunpack.c.h.b16 %v4598
    %v4787 = vunpack.c.l.b16 %v4599
    %v4788 = vunpack.c.h.b16 %v4599
    %v4789 = vunpack.c.l.b16 %v4600
    %v4790 = vunpack.c.h.b16 %v4600
    %v4791 = vunpack.c.l.b16 %v4601
    %v4792 = vunpack.c.h.b16 %v4601
    %v4793 = vunpack.c.l.b16 %v4602
    %v4794 = vunpack.c.h.b16 %v4602
    %v4795 = vunpack.c.l.b16 %v4603
    %v4796 = vunpack.c.h.b16 %v4603
    %v4797 = vunpack.c.l.b16 %v4604
    %v4798 = vunpack.c.h.b16 %v4604
    %v4799 = vunpack.c.l.b16 %v4605
    %v4800 = vunpack.c.h.b16 %v4605
    %v4801 = vunpack.c.l.b16 %v4606
    %v4802 = vunpack.c.h.b16 %v4606
    %v4803 = vunpack.c.l.b16 %v4607
    %v4804 = vunpack.c.h.b16 %v4607
    %v4805 = vunpack.c.l.b16 %v4608
    %v4806 = vunpack.c.h.b16 %v4608
    %v4807 = vunpack.c.l.b16 %v4609
    %v4808 = vunpack.c.h.b16 %v4609
    %v4809 = vunpack.c.l.b16 %v4610
    %v4810 = vunpack.c.h.b16 %v4610
    %v4811 = vunpack.c.l.b16 %v4611
    %v4812 = vunpack.c.h.b16 %v4611
    %v4813 = vunpack.c.l.b16 %v4612
    %v4814 = vunpack.c.h.b16 %v4612
    %v4815 = vunpack.c.l.b16 %v4613
    %v4816 = vunpack.c.h.b16 %v4613
    %v4817 = vunpack.c.l.b16 %v4614
    %v4818 = vunpack.c.h.b16 %v4614
    %v4819 = vunpack.c.l.b16 %v4615
    %v4820 = vunpack.c.h.b16 %v4615
    %v4821 = vunpack.c.l.b16 %v4616
    %v4822 = vunpack.c.h.b16 %v4616
    %v4823 = vunpack.c.l.b16 %v4617
    %v4824 = vunpack.c.h.b16 %v4617
    %v4825 = vunpack.c.l.b16 %v4618
    %v4826 = vunpack.c.h.b16 %v4618
    %v4827 = vunpack.c.l.b16 %v4619
    %v4828 = vunpack.c.h.b16 %v4619
    %v4829 = vunpack.c.l.b16 %v4620
    %v4830 = vunpack.c.h.b16 %v4620
    %v4831 = vunpack.c.l.b16 %v4621
    %v4832 = vunpack.c.h.b16 %v4621
    %v4833 = vunpack.c.l.b16 %v4622
    %v4834 = vunpack.c.h.b16 %v4622
    %v4835 = vunpack.c.l.b16 %v4623
    %v4836 = vunpack.c.h.b16 %v4623
    %v4837 = vunpack.c.l.b16 %v4624
    %v4838 = vunpack.c.h.b16 %v4624
    %v4839 = vunpack.c.l.b16 %v4625
    %v4840 = vunpack.c.h.b16 %v4625
    %v4841 = vunpack.c.l.b16 %v4626
    %v4842 = vunpack.c.h.b16 %v4626
    %v4843 = vunpack.c.l.b16 %v4627
    %v4844 = vunpack.c.h.b16 %v4627
    %v4845 = vunpack.c.l.b16 %v4628
    %v4846 = vunpack.c.h.b16 %v4628
    %v4847 = vunpack.c.l.b16 %v4629
    %v4848 = vunpack.c.h.b16 %v4629
    %v4849 = vunpack.c.l.b16 %v4630
    %v4850 = vunpack.c.h.b16 %v4630
    %v4851 = vunpack.c.l.b16 %v4631
    %v4852 = vunpack.c.h.b16 %v4631
    %v4853 = vunpack.c.l.b16 %v4632
    %v4854 = vunpack.c.h.b16 %v4632
    %v4855 = vunpack.c.l.b16 %v4633
    %v4856 = vunpack.c.h.b16 %v4633
    %v4857 = vunpack.c.l.b16 %v4634
    %v4858 = vunpack.c.h.b16 %v4634
    %v4859 = vunpack.c.l.b16 %v4635
    %v4860 = vunpack.c.h.b16 %v4635
    %v4861 = vunpack.c.l.b16 %v4636
    %v4862 = vunpack.c.h.b16 %v4636
    %v4863 = vunpack.c.l.b16 %v4637
    %v4864 = vunpack.c.h.b16 %v4637
    %v4865 = vunpack.c.l.b16 %v4638
    %v4866 = vunpack.c.h.b16 %v4638
    %v4867 = vunpack.c.l.b16 %v4639
    %v4868 = vunpack.c.h.b16 %v4639
    %v4869 = vunpack.c.l.b16 %v4640
    %v4870 = vunpack.c.h.b16 %v4640
    %v4871 = vunpack.c.l.b16 %v4641
    %v4872 = vunpack.c.h.b16 %v4641
    %v4873 = vunpack.c.l.b16 %v4642
    %v4874 = vunpack.c.h.b16 %v4642
    %v4875 = vunpack.c.l.b16 %v4643
    %v4876 = vunpack.c.h.b16 %v4643
    %v4877 = vunpack.c.l.b16 %v4644
    %v4878 = vunpack.c.h.b16 %v4644
    %v4879 = vunpack.c.l.b16 %v4645
    %v4880 = vunpack.c.h.b16 %v4645
    %v4881 = vunpack.c.l.b16 %v4646
    %v4882 = vunpack.c.h.b16 %v4646
    %v4883 = vunpack.c.l.b16 %v4647
    %v4884 = vunpack.c.h.b16 %v4647
    %v4885 = vunpack.c.l.b16 %v4648
    %v4886 = vunpack.c.h.b16 %v4648
    %v4887 = vunpack.c.l.b16 %v4649
    %v4888 = vunpack.c.h.b16 %v4649
    %v4889 = vunpack.c.l.b16 %v4650
    %v4890 = vunpack.c.h.b16 %v4650
    %v4891 = vunpack.c.l.b16 %v4651
    %v4892 = vunpack.c.h.b16 %v4651
    %v4893 = vunpack.c.l.b16 %v4652
    %v4894 = vunpack.c.h.b16 %v4652
    %v4895 = vunpack.c.l.b16 %v4653
    %v4896 = vunpack.c.h.b16 %v4653
    %v4897 = vunpack.c.l.b16 %v4654
    %v4898 = vunpack.c.h.b16 %v4654
    %v4899 = vunpack.c.l.b16 %v4655
    %v4900 = vunpack.c.h.b16 %v4655
    %v4901 = vunpack.c.l.b16 %v4656
    %v4902 = vunpack.c.h.b16 %v4656
    %v4903 = vunpack.c.l.b16 %v4657
    %v4904 = vunpack.c.h.b16 %v4657
    %v4905 = vunpack.c.l.b16 %v4658
    %v4906 = vunpack.c.h.b16 %v4658
    %v4907 = vunpack.c.l.b16 %v4659
    %v4908 = vunpack.c.h.b16 %v4659
    %v4909 = vunpack.c.l.b16 %v4660
    %v4910 = vunpack.c.h.b16 %v4660
    %v4911 = vunpack.c.l.b16 %v4661
    %v4912 = vunpack.c.h.b16 %v4661
    %v4913 = vunpack.c.l.b16 %v4662
    %v4914 = vunpack.c.h.b16 %v4662
    %v4915 = vunpack.c.l.b16 %v4663
    %v4916 = vunpack.c.h.b16 %v4663
    %v4917 = vunpack.c.l.b16 %v4664
    %v4918 = vunpack.c.h.b16 %v4664
    %v4919 = vunpack.c.l.b16 %v4665
    %v4920 = vunpack.c.h.b16 %v4665
    %v4921 = vunpack.c.l.b16 %v4666
    %v4922 = vunpack.c.h.b16 %v4666
    %v4923 = vunpack.c.l.b16 %v4667
    %v4924 = vunpack.c.h.b16 %v4667
    %v4925 = vunpack.c.l.b16 %v4668
    %v4926 = vunpack.c.h.b16 %v4668
    %v4927 = vpack.c.b16 %v4769, %v4767
    %v4928 = vpack.c.b16 %v4770, %v4768
    %v4929 = vpack.c.b16 %v4773, %v4771
    %v4930 = vpack.c.b16 %v4774, %v4772
    %v4931 = vpack.c.b16 %v4777, %v4775
    %v4932 = vpack.c.b16 %v4778, %v4776
    %v4933 = vpack.c.b16 %v4781, %v4779
    %v4934 = vpack.c.b16 %v4782, %v4780
    %v4935 = vpack.c.b16 %v4785, %v4783
    %v4936 = vpack.c.b16 %v4786, %v4784
    %v4937 = vpack.c.b16 %v4789, %v4787
    %v4938 = vpack.c.b16 %v4790, %v4788
    %v4939 = vpack.c.b16 %v4793, %v4791
    %v4940 = vpack.c.b16 %v4794, %v4792
    %v4941 = vpack.c.b16 %v4797, %v4795
    %v4942 = vpack.c.b16 %v4798, %v4796
    %v4943 = vpack.c.b16 %v4801, %v4799
    %v4944 = vpack.c.b16 %v4802, %v4800
    %v4945 = vpack.c.b16 %v4805, %v4803
    %v4946 = vpack.c.b16 %v4806, %v4804
    %v4947 = vpack.c.b16 %v4809, %v4807
    %v4948 = vpack.c.b16 %v4810, %v4808
    %v4949 = vpack.c.b16 %v4813, %v4811
    %v4950 = vpack.c.b16 %v4814, %v4812
    %v4951 = vpack.c.b16 %v4817, %v4815
    %v4952 = vpack.c.b16 %v4818, %v4816
    %v4953 = vpack.c.b16 %v4821, %v4819
    %v4954 = vpack.c.b16 %v4822, %v4820
    %v4955 = vpack.c.b16 %v4825, %v4823
    %v4956 = vpack.c.b16 %v4826, %v4824
    %v4957 = vpack.c.b16 %v4829, %v4827
    %v4958 = vpack.c.b16 %v4830, %v4828
    %v4959 = vpack.c.b16 %v4833, %v4831
    %v4960 = vpack.c.b16 %v4834, %v4832
    %v4961 = vpack.c.b16 %v4837, %v4835
    %v4962 = vpack.c.b16 %v4838, %v4836
    %v4963 = vpack.c.b16 %v4841, %v4839
    %v4964 = vpack.c.b16 %v4842, %v4840
    %v4965 = vpack.c.b16 %v4845, %v4843
    %v4966 = vpack.c.b16 %v4846, %v4844
    %v4967 = vpack.c.b16 %v4849, %v4847
    %v4968 = vpack.c.b16 %v4850, %v4848
    %v4969 = vpack.c.b16 %v4853, %v4851
    %v4970 = vpack.c.b16 %v4854, %v4852
    %v4971 = vpack.c.b16 %v4857, %v4855
    %v4972 = vpack.c.b16 %v4858, %v4856
    %v4973 = vpack.c.b16 %v4861, %v4859
    %v4974 = vpack.c.b16 %v4862, %v4860
    %v4975 = vpack.c.b16 %v4865, %v4863
    %v4976 = vpack.c.b16 %v4866, %v4864
    %v4977 = vpack.c.b16 %v4869, %v4867
    %v4978 = vpack.c.b16 %v4870, %v4868
    %v4979 = vpack.c.b16 %v4873, %v4871
    %v4980 = vpack.c.b16 %v4874, %v4872
    %v4981 = vpack.c.b16 %v4877, %v4875
    %v4982 = vpack.c.b16 %v4878, %v4876
    %v4983 = vpack.c.b16 %v4881, %v4879
    %v4984 = vpack.c.b16 %v4882, %v4880
    %v4985 = vpack.c.b16 %v4885, %v4883
    %v4986 = vpack.c.b16 %v4886, %v4884
    %v4987 = vpack.c.b16 %v4889, %v4887
    %v4988 = vpack.c.b16 %v4890, %v4888
    %v4989 = vpack.c.b16 %v4893, %v4891
    %v4990 = vpack.c.b16 %v4894, %v4892
    %v4991 = vpack.c.b16 %v4897, %v4895
    %v4992 = vpack.c.b16 %v4898, %v4896
    %v4993 = vpack.c.b16 %v4901, %v4899
    %v4994 = vpack.c.b16 %v4902, %v4900
    %v4995 = vpack.c.b16 %v4905, %v4903
    %v4996 = vpack.c.b16 %v4906, %v4904
    %v4997 = vpack.c.b16 %v4909, %v4907
    %v4998 = vpack.c.b16 %v4910, %v4908
    %v4999 = vpack.c.b16 %v4913, %v4911
    %v5000 = vpack.c.b16 %v4914, %v4912
    %v5001 = vpack.c.b16 %v4917, %v4915
    %v5002 = vpack.c.b16 %v4918, %v4916
    %v5003 = vpack.c.b16 %v4921, %v4919
    %v5004 = vpack.c.b16 %v4922, %v4920
    %v5005 = vpack.c.b16 %v4925, %v4923
    %v5006 = vpack.c.b16 %v4926, %v4924
    %5087 = vmatprep.subr.bf16.mxu0 %v4942
    %5088 = vmatpush1.bf16.msra.mxu0 %v4941
    %5089 = vmatprep.subr.bf16.mxu0 %v4940
    %5090 = vmatpush1.bf16.msra.mxu0 %v4939
    %5091 = vmatprep.subr.bf16.mxu0 %v4938
    %5092 = vmatpush1.bf16.msra.mxu0 %v4937
    %5093 = vmatprep.subr.bf16.mxu0 %v4936
    %5094 = vmatpush1.bf16.msra.mxu0 %v4935
    %5095 = vmatprep.subr.bf16.mxu0 %v4934
    %5096 = vmatpush1.bf16.msra.mxu0 %v4933
    %5097 = vmatprep.subr.bf16.mxu0 %v4932
    %5098 = vmatpush1.bf16.msra.mxu0 %v4931
    %5099 = vmatprep.subr.bf16.mxu0 %v4930
    %5100 = vmatpush1.bf16.msra.mxu0 %v4929
    %5101 = vmatprep.subr.bf16.mxu0 %v4928
    %5102 = vmatpush1.bf16.msra.mxu0 %v4927
    %5103 = vmatprep.subr.bf16.mxu0 %v4958
    %5104 = vmatpush2.bf16.msra.mxu0 %v4957
    %5105 = vmatprep.subr.bf16.mxu0 %v4956
    %5106 = vmatpush2.bf16.msra.mxu0 %v4955
    %5107 = vmatprep.subr.bf16.mxu0 %v4954
    %5108 = vmatpush2.bf16.msra.mxu0 %v4953
    %5109 = vmatprep.subr.bf16.mxu0 %v4952
    %5110 = vmatpush2.bf16.msra.mxu0 %v4951
    %5111 = vmatprep.subr.bf16.mxu0 %v4950
    %5112 = vmatpush2.bf16.msra.mxu0 %v4949
    %5113 = vmatprep.subr.bf16.mxu0 %v4948
    %5114 = vmatpush2.bf16.msra.mxu0 %v4947
    %5115 = vmatprep.subr.bf16.mxu0 %v4946
    %5116 = vmatpush2.bf16.msra.mxu0 %v4945
    %5117 = vmatprep.subr.bf16.mxu0 %v4944
    %5118 = vmatpush2.bf16.msra.mxu0 %v4943
    %5119 = vmatprep.mubr.bf16.mxu0 %v4670
    %5120 = vmatmul.mubr.bf16.gmra.mxu0 %v4669
    %v5121 = vpop.f32.mrf.mxu0
    %v5122 = vadd.f32 %v4680, %v5121
    %v5123 = vpop.f32.mrf.mxu0
    %v5124 = vadd.f32 %v4684, %v5123
    %v5125 = vpop.f32.mrf.mxu0
    %v5126 = vpop.f32.mrf.mxu0
    %5127 = vdwg.mxu0
    %5128 = vmatprep.subr.bf16.mxu0 %v4974
    %5129 = vmatpush1.bf16.msra.mxu0 %v4973
    %5130 = vmatprep.subr.bf16.mxu0 %v4972
    %5131 = vmatpush1.bf16.msra.mxu0 %v4971
    %5132 = vmatprep.subr.bf16.mxu0 %v4970
    %5133 = vmatpush1.bf16.msra.mxu0 %v4969
    %5134 = vmatprep.subr.bf16.mxu0 %v4968
    %5135 = vmatpush1.bf16.msra.mxu0 %v4967
    %5136 = vmatprep.subr.bf16.mxu0 %v4966
    %5137 = vmatpush1.bf16.msra.mxu0 %v4965
    %5138 = vmatprep.subr.bf16.mxu0 %v4964
    %5139 = vmatpush1.bf16.msra.mxu0 %v4963
    %5140 = vmatprep.subr.bf16.mxu0 %v4962
    %5141 = vmatpush1.bf16.msra.mxu0 %v4961
    %5142 = vmatprep.subr.bf16.mxu0 %v4960
    %5143 = vmatpush1.bf16.msra.mxu0 %v4959
    %5144 = vmatprep.subr.bf16.mxu0 %v4990
    %5145 = vmatpush2.bf16.msra.mxu0 %v4989
    %5146 = vmatprep.subr.bf16.mxu0 %v4988
    %5147 = vmatpush2.bf16.msra.mxu0 %v4987
    %5148 = vmatprep.subr.bf16.mxu0 %v4986
    %5149 = vmatpush2.bf16.msra.mxu0 %v4985
    %5150 = vmatprep.subr.bf16.mxu0 %v4984
    %5151 = vmatpush2.bf16.msra.mxu0 %v4983
    %5152 = vmatprep.subr.bf16.mxu0 %v4982
    %5153 = vmatpush2.bf16.msra.mxu0 %v4981
    %5154 = vmatprep.subr.bf16.mxu0 %v4980
    %5155 = vmatpush2.bf16.msra.mxu0 %v4979
    %5156 = vmatprep.subr.bf16.mxu0 %v4978
    %5157 = vmatpush2.bf16.msra.mxu0 %v4977
    %5158 = vmatprep.subr.bf16.mxu0 %v4976
    %5159 = vmatpush2.bf16.msra.mxu0 %v4975
    %5160 = vmatprep.mubr.bf16.mxu0 %v4672
    %5161 = vmatmul.mubr.bf16.gmra.mxu0 %v4671
    %v5162 = vpop.f32.mrf.mxu0
    %v5163 = vadd.f32 %v5122, %v5162
    %v5164 = vpop.f32.mrf.mxu0
    %v5165 = vadd.f32 %v5124, %v5164
    %v5166 = vpop.f32.mrf.mxu0
    %v5167 = vpop.f32.mrf.mxu0
    %5168 = vdwg.mxu0
    %5169 = vmatprep.subr.bf16.mxu0 %v5006
    %5170 = vmatpush1.bf16.msra.mxu0 %v5005
    %5171 = vmatprep.subr.bf16.mxu0 %v5004
    %5172 = vmatpush1.bf16.msra.mxu0 %v5003
    %5173 = vmatprep.subr.bf16.mxu0 %v5002
    %5174 = vmatpush1.bf16.msra.mxu0 %v5001
    %5175 = vmatprep.subr.bf16.mxu0 %v5000
    %5176 = vmatpush1.bf16.msra.mxu0 %v4999
    %5177 = vmatprep.subr.bf16.mxu0 %v4998
    %5178 = vmatpush1.bf16.msra.mxu0 %v4997
    %5179 = vmatprep.subr.bf16.mxu0 %v4996
    %5180 = vmatpush1.bf16.msra.mxu0 %v4995
    %5181 = vmatprep.subr.bf16.mxu0 %v4994
    %5182 = vmatpush1.bf16.msra.mxu0 %v4993
    %5183 = vmatprep.subr.bf16.mxu0 %v4992
    %5184 = vmatpush1.bf16.msra.mxu0 %v4991
    %5185 = vmatprep.subr.bf16.mxu0 0
    %5186 = vmatpush2.bf16.msra.mxu0 0
    %5187 = vmatprep.subr.bf16.mxu0 0
    %5188 = vmatpush2.bf16.msra.mxu0 0
    %5189 = vmatprep.subr.bf16.mxu0 0
    %5190 = vmatpush2.bf16.msra.mxu0 0
    %5191 = vmatprep.subr.bf16.mxu0 0
    %5192 = vmatpush2.bf16.msra.mxu0 0
    %5193 = vmatprep.subr.bf16.mxu0 0
    %5194 = vmatpush2.bf16.msra.mxu0 0
    %5195 = vmatprep.subr.bf16.mxu0 0
    %5196 = vmatpush2.bf16.msra.mxu0 0
    %5197 = vmatprep.subr.bf16.mxu0 0
    %5198 = vmatpush2.bf16.msra.mxu0 0
    %5199 = vmatprep.subr.bf16.mxu0 0
    %5200 = vmatpush2.bf16.msra.mxu0 0
    %5201 = vmatprep.mubr.bf16.mxu0 0
    %5202 = vmatmul.mubr.bf16.gmra.mxu0 %v4673
    %v5203 = vpop.f32.mrf.mxu0
    %v5204 = vadd.f32 %v5163, %v5203
    %v5205 = vpop.f32.mrf.mxu0
    %v5206 = vadd.f32 %v5165, %v5205
    %v5207 = vpop.f32.mrf.mxu0
    %v5208 = vpop.f32.mrf.mxu0
    %5209 = vdwg.mxu0
    %v5210 = vmax.f32 %v5204, 0.0
    %v5211 = vmax.f32 %v5206, 0.0
    %v5212 = vld [vmem:[%s6] sm:$0xf]
    %v5213 = vld [vmem:[%s6 + $0x4] sm:$0xf]
    %v5214 = vld [vmem:[%s6 + $0x8] sm:$0xf]
    %v5215 = vld [vmem:[%s6 + $0xc] sm:$0xf]
    %v5216 = vld [vmem:[%s6 + $0x10] sm:$0xf]
    %v5217 = vld [vmem:[%s6 + $0x14] sm:$0xf]
    %v5218 = vld [vmem:[%s6 + $0x18] sm:$0xf]
    %v5219 = vld [vmem:[%s6 + $0x1c] sm:$0xf]
    %v5220 = vld [vmem:[%s6 + $0x20] sm:$0xf]
    %v5221 = vld [vmem:[%s6 + $0x24] sm:$0xf]
    %v5222 = vld [vmem:[%s6 + $0x28] sm:$0xf]
    %v5223 = vld [vmem:[%s6 + $0x2c] sm:$0xf]
    %v5224 = vld [vmem:[%s6 + $0x30] sm:$0xf]
    %v5225 = vld [vmem:[%s6 + $0x34] sm:$0xf]
    %v5226 = vld [vmem:[%s6 + $0x38] sm:$0xf]
    %v5227 = vld [vmem:[%s6 + $0x3c] sm:$0xf]
    %v5228 = vld [vmem:[%s6 + $0x40] sm:$0xf]
    %v5229 = vld [vmem:[%s6 + $0x44] sm:$0xf]
    %v5230 = vld [vmem:[%s6 + $0x48] sm:$0xf]
    %v5231 = vld [vmem:[%s6 + $0x4c] sm:$0xf]
    %v5232 = vld [vmem:[%s6 + $0x50] sm:$0xf]
    %v5233 = vld [vmem:[%s6 + $0x54] sm:$0xf]
    %v5234 = vld [vmem:[%s6 + $0x58] sm:$0xf]
    %v5235 = vld [vmem:[%s6 + $0x5c] sm:$0xf]
    %v5236 = vld [vmem:[%s6 + $0x60] sm:$0xf]
    %v5237 = vld [vmem:[%s6 + $0x64] sm:$0xf]
    %v5238 = vld [vmem:[%s6 + $0x68] sm:$0xf]
    %v5239 = vld [vmem:[%s6 + $0x6c] sm:$0xf]
    %v5240 = vld [vmem:[%s6 + $0x70] sm:$0xf]
    %v5241 = vld [vmem:[%s6 + $0x74] sm:$0xf]
    %v5242 = vld [vmem:[%s6 + $0x78] sm:$0xf]
    %v5243 = vld [vmem:[%s6 + $0x7c] sm:$0xf]
    %v5244 = vpack.c.bf16 %v5210, %v5210
    %v5245 = vpack.c.bf16 %v5211, %v5211
    %v5246 = vld [vmem:[#allocation9 + $0xc] ss:$0 sm:$0xff]
    %v5279 = vunpack.c.l.b16 %v5212
    %v5280 = vunpack.c.l.b16 %v5213
    %v5281 = vunpack.c.l.b16 %v5214
    %v5282 = vunpack.c.l.b16 %v5215
    %v5283 = vunpack.c.l.b16 %v5216
    %v5284 = vunpack.c.l.b16 %v5217
    %v5285 = vunpack.c.l.b16 %v5218
    %v5286 = vunpack.c.l.b16 %v5219
    %v5287 = vunpack.c.l.b16 %v5220
    %v5288 = vunpack.c.l.b16 %v5221
    %v5289 = vunpack.c.l.b16 %v5222
    %v5290 = vunpack.c.l.b16 %v5223
    %v5291 = vunpack.c.l.b16 %v5224
    %v5292 = vunpack.c.l.b16 %v5225
    %v5293 = vunpack.c.l.b16 %v5226
    %v5294 = vunpack.c.l.b16 %v5227
    %v5295 = vunpack.c.l.b16 %v5228
    %v5296 = vunpack.c.l.b16 %v5229
    %v5297 = vunpack.c.l.b16 %v5230
    %v5298 = vunpack.c.l.b16 %v5231
    %v5299 = vunpack.c.l.b16 %v5232
    %v5300 = vunpack.c.l.b16 %v5233
    %v5301 = vunpack.c.l.b16 %v5234
    %v5302 = vunpack.c.l.b16 %v5235
    %v5303 = vunpack.c.l.b16 %v5236
    %v5304 = vunpack.c.l.b16 %v5237
    %v5305 = vunpack.c.l.b16 %v5238
    %v5306 = vunpack.c.l.b16 %v5239
    %v5307 = vunpack.c.l.b16 %v5240
    %v5308 = vunpack.c.l.b16 %v5241
    %v5309 = vunpack.c.l.b16 %v5242
    %v5310 = vunpack.c.l.b16 %v5243
    %v5311 = vpack.c.b16 %v5280, %v5279
    %v5312 = vpack.c.b16 %v5282, %v5281
    %v5313 = vpack.c.b16 %v5284, %v5283
    %v5314 = vpack.c.b16 %v5286, %v5285
    %v5315 = vpack.c.b16 %v5288, %v5287
    %v5316 = vpack.c.b16 %v5290, %v5289
    %v5317 = vpack.c.b16 %v5292, %v5291
    %v5318 = vpack.c.b16 %v5294, %v5293
    %v5319 = vpack.c.b16 %v5296, %v5295
    %v5320 = vpack.c.b16 %v5298, %v5297
    %v5321 = vpack.c.b16 %v5300, %v5299
    %v5322 = vpack.c.b16 %v5302, %v5301
    %v5323 = vpack.c.b16 %v5304, %v5303
    %v5324 = vpack.c.b16 %v5306, %v5305
    %v5325 = vpack.c.b16 %v5308, %v5307
    %v5326 = vpack.c.b16 %v5310, %v5309
    %5327 = vrot.lane.b32.xlu0 %v5311, 56
    %v5328 = vpop.permute.xlu0 %5327
    %5329 = vrot.lane.b32.xlu0 %v5312, 56
    %v5330 = vpop.permute.xlu0 %5329
    %5331 = vrot.lane.b32.xlu0 %v5313, 56
    %v5332 = vpop.permute.xlu0 %5331
    %5333 = vrot.lane.b32.xlu0 %v5314, 56
    %v5334 = vpop.permute.xlu0 %5333
    %5335 = vrot.lane.b32.xlu0 %v5315, 56
    %v5336 = vpop.permute.xlu0 %5335
    %5337 = vrot.lane.b32.xlu0 %v5316, 56
    %v5338 = vpop.permute.xlu0 %5337
    %5339 = vrot.lane.b32.xlu0 %v5317, 56
    %v5340 = vpop.permute.xlu0 %5339
    %5341 = vrot.lane.b32.xlu0 %v5318, 56
    %v5342 = vpop.permute.xlu0 %5341
    %5343 = vrot.lane.b32.xlu0 %v5319, 56
    %v5344 = vpop.permute.xlu0 %5343
    %5345 = vrot.lane.b32.xlu0 %v5320, 56
    %v5346 = vpop.permute.xlu0 %5345
    %5347 = vrot.lane.b32.xlu0 %v5321, 56
    %v5348 = vpop.permute.xlu0 %5347
    %5349 = vrot.lane.b32.xlu0 %v5322, 56
    %v5350 = vpop.permute.xlu0 %5349
    %5351 = vrot.lane.b32.xlu0 %v5323, 56
    %v5352 = vpop.permute.xlu0 %5351
    %5353 = vrot.lane.b32.xlu0 %v5324, 56
    %v5354 = vpop.permute.xlu0 %5353
    %5355 = vrot.lane.b32.xlu0 %v5325, 56
    %v5356 = vpop.permute.xlu0 %5355
    %5357 = vrot.lane.b32.xlu0 %v5326, 56
    %v5358 = vpop.permute.xlu0 %5357
    %5375 = vmatprep.subr.bf16.mxu0 0
    %5376 = vmatpush1.bf16.msra.mxu0 %v5342
    %5377 = vmatprep.subr.bf16.mxu0 0
    %5378 = vmatpush1.bf16.msra.mxu0 %v5340
    %5379 = vmatprep.subr.bf16.mxu0 0
    %5380 = vmatpush1.bf16.msra.mxu0 %v5338
    %5381 = vmatprep.subr.bf16.mxu0 0
    %5382 = vmatpush1.bf16.msra.mxu0 %v5336
    %5383 = vmatprep.subr.bf16.mxu0 0
    %5384 = vmatpush1.bf16.msra.mxu0 %v5334
    %5385 = vmatprep.subr.bf16.mxu0 0
    %5386 = vmatpush1.bf16.msra.mxu0 %v5332
    %5387 = vmatprep.subr.bf16.mxu0 0
    %5388 = vmatpush1.bf16.msra.mxu0 %v5330
    %5389 = vmatprep.subr.bf16.mxu0 0
    %5390 = vmatpush1.bf16.msra.mxu0 %v5328
    %5391 = vmatprep.subr.bf16.mxu0 0
    %5392 = vmatpush2.bf16.msra.mxu0 %v5358
    %5393 = vmatprep.subr.bf16.mxu0 0
    %5394 = vmatpush2.bf16.msra.mxu0 %v5356
    %5395 = vmatprep.subr.bf16.mxu0 0
    %5396 = vmatpush2.bf16.msra.mxu0 %v5354
    %5397 = vmatprep.subr.bf16.mxu0 0
    %5398 = vmatpush2.bf16.msra.mxu0 %v5352
    %5399 = vmatprep.subr.bf16.mxu0 0
    %5400 = vmatpush2.bf16.msra.mxu0 %v5350
    %5401 = vmatprep.subr.bf16.mxu0 0
    %5402 = vmatpush2.bf16.msra.mxu0 %v5348
    %5403 = vmatprep.subr.bf16.mxu0 0
    %5404 = vmatpush2.bf16.msra.mxu0 %v5346
    %5405 = vmatprep.subr.bf16.mxu0 0
    %5406 = vmatpush2.bf16.msra.mxu0 %v5344
    %5407 = vmatprep.mubr.bf16.mxu0 %v5245
    %5408 = vmatmul.mubr.bf16.gmra.mxu0 %v5244
    %v5409 = vpop.f32.mrf.mxu0
    %v5410 = vadd.f32 %v5246, %v5409
    %v5411 = vpop.f32.mrf.mxu0
    %v5412 = vpop.f32.mrf.mxu0
    %v5413 = vpop.f32.mrf.mxu0
    %5414 = vdwg.mxu0
    %5415 = vrot.lane.b32.xlu0 %v4532, 8
    %v5416 = vpop.permute.xlu0 %5415
    %vm5418 = vcmask 23552
    %v5419 = vsel %vm5418, %v5410, %v4471
    %vm5420 = vcmask 64512
    %v5421 = vsel %vm5420, %v5419, %v5416
    %vm5422 = vcmask 97280
    %v5423 = vsel %vm5422, %v5421, 0.0
    %5424 = vst [vmem:[%s9] sm:$0x3] %v5423
    // Predicated region
    $region54: #{multimodal_cv_classifier.1} parent=1 // pred_check
      _
    $region55: #{multimodal_cv_classifier.1} parent=1 // pred_check_branch
      %5426 = sbr.rel (0) target = $region57
    $region56: #{multimodal_cv_classifier.1} parent=1 // pred_region
      _
    $region57: #{multimodal_cv_classifier.1} parent=1 // pred_fallthru
      _
    // Predicated region
    $region58: #{multimodal_cv_classifier.1} parent=1 // pred_check
      _
    $region59: #{multimodal_cv_classifier.1} parent=1 // pred_check_branch
      %5428 = sbr.rel (0) target = $region61
    $region60: #{multimodal_cv_classifier.1} parent=1 // pred_region
      _
    $region61: #{multimodal_cv_classifier.1} parent=1 // pred_fallthru
      _
    %5429 = vsyncpa [#allocation5], 1
    %5430 = vsyncpa [#allocation7], 1
    %5431 = vsyncpa [#allocation10], 1
  %5432 = vsyncmov [#allocation3]
  %s5433 = vpop.sfrf %5432
  %p5434 = scmp.eq.s32.totalorder %s5433, 0
  %p5435 = pneg %p5434
  %5437 = shalt.err (%p5435)

</llo_original>
